<compile_context>
chip_gen: v5e
topology: v5e:2x2
jax: 0.10.0
libtpu: 0.0.40
codegen_flags: <defaults>
</compile_context>

<pallas_src>
import functools

import jax
import jax.numpy as jnp
from jax.experimental import pallas as pl
from jax.experimental.pallas import tpu as pltpu


def _leaky_relu(x, slope=0.2):
    return jnp.where(x > 0, x, slope * x)


def _round_up(x, m):
    return ((x + m - 1) // m) * m


def ae_kernel(x_ref,
              w1_ref, b1_ref, w2_ref, b2_ref,
              w3_ref, b3_ref, w4_ref, b4_ref,
              rec_ref, lat_ref):
    # Single explicit read per weight / bias per grid step.
    w1 = w1_ref[...]
    b1 = b1_ref[...]
    w2 = w2_ref[...]
    b2 = b2_ref[...]
    w3 = w3_ref[...]
    b3 = b3_ref[...]
    w4 = w4_ref[...]
    b4 = b4_ref[...]

    # bf16 operands into the MXU, f32 accumulation, f32 bias/activation math.
    x = x_ref[...].astype(w1.dtype)

    # --- encoder ---
    h1 = _leaky_relu(
        jnp.dot(x, w1, preferred_element_type=jnp.float32) + b1)
    z = _leaky_relu(
        jnp.dot(h1.astype(w2.dtype), w2, preferred_element_type=jnp.float32) + b2)
    lat_ref[...] = z.astype(lat_ref.dtype)

    # --- decoder ---
    h2 = _leaky_relu(
        jnp.dot(z.astype(w3.dtype), w3, preferred_element_type=jnp.float32) + b3)
    rec = _leaky_relu(
        jnp.dot(h2.astype(w4.dtype), w4, preferred_element_type=jnp.float32) + b4)
    rec_ref[...] = rec.astype(rec_ref.dtype)


@functools.partial(jax.jit, static_argnames=("tile_b", "weights_dtype"))
def ae_forward(x, params, *, tile_b=128, weights_dtype=jnp.bfloat16):
    """x: (B, feature_num) float32. Returns (rec, latent)."""
    (w1, b1), (w2, b2), (w3, b3), (w4, b4) = params
    B, F = x.shape
    H = w1.shape[1]          # 512
    L = w2.shape[1]          # latent_dim

    # Cast weights to bf16 (f32 accumulation happens in the kernel); biases stay f32.
    w1, w2, w3, w4 = (w.astype(weights_dtype) for w in (w1, w2, w3, w4))
    b1, b2, b3, b4 = (b.astype(jnp.float32) for b in (b1, b2, b3, b4))

    # --- batch tile selection ---------------------------------------------
    # Tile is a multiple of 8 (sublane) and never larger than the padded batch.
    tb = min(int(tile_b), _round_up(B, 8))
    tb = _round_up(tb, 8)
    # v7x has 2 TensorCores per chip: prefer a grid of >= 2 steps when the
    # batch is big enough to split.
    if _round_up(B, tb) // tb < 2 and B >= 16:
        tb = max(8, _round_up(pl.cdiv(B, 2), 8))
    Bp = _round_up(B, tb)
    grid = (Bp // tb,)

    # Pad the batch so the grid covers it exactly; padded rows are discarded.
    if Bp != B:
        x_in = jnp.pad(x, ((0, Bp - B), (0, 0)))
    else:
        x_in = x

    # Weights / biases are replicated across the batch grid (constant block
    # index -> Pallas DMAs them once, not per step).
    def rep(shape):
        return pl.BlockSpec(shape, lambda i: (0, 0))

    in_specs = [
        pl.BlockSpec((tb, F), lambda i: (i, 0)),   # x tile
        rep((F, H)), rep((1, H)),                  # W1, b1
        rep((H, L)), rep((1, L)),                  # W2, b2
        rep((L, H)), rep((1, H)),                  # W3, b3
        rep((H, F)), rep((1, F)),                  # W4, b4
    ]
    out_specs = (
        pl.BlockSpec((tb, F), lambda i: (i, 0)),   # rec
        pl.BlockSpec((tb, L), lambda i: (i, 0)),   # latent
    )
    out_shape = (
        jax.ShapeDtypeStruct((Bp, F), x.dtype),
        jax.ShapeDtypeStruct((Bp, L), x.dtype),
    )

    # Advisory cost estimate for XLA's scheduler.
    w_itemsize = jnp.dtype(weights_dtype).itemsize
    weight_elems = F * H + H * L + L * H + H * F
    bias_elems = H + L + H + F
    flops = 2 * Bp * weight_elems
    bytes_accessed = (Bp * F * 4            # x
                      + weight_elems * w_itemsize
                      + bias_elems * 4
                      + Bp * F * 4          # rec
                      + Bp * L * 4)         # latent
    cost = pl.CostEstimate(flops=flops, transcendentals=0,
                           bytes_accessed=int(bytes_accessed))

    # VMEM budget: double-buffered activation tiles + (once-fetched but
    # double-buffer-allocated) weights, plus headroom; kept well under the
    # v7x 64 MiB physical VMEM.
    vmem_bytes = 2 * (tb * F * 4 * 2        # x + rec tiles (f32)
                      + tb * L * 4          # latent tile (f32)
                      + tb * H * 4          # in-kernel hidden activations
                      + weight_elems * w_itemsize
                      + bias_elems * 4)
    vmem_limit = int(min(max(vmem_bytes + (4 << 20), 16 << 20), 48 << 20))

    rec_p, lat_p = pl.pallas_call(
        ae_kernel,
        grid=grid,
        in_specs=in_specs,
        out_specs=out_specs,
        out_shape=out_shape,
        cost_estimate=cost,
        compiler_params=pltpu.CompilerParams(
            dimension_semantics=("parallel",),
            vmem_limit_bytes=vmem_limit),
    )(x_in, w1, b1, w2, b2, w3, b3, w4, b4)

    if Bp != B:
        rec_p = rec_p[:B]
        lat_p = lat_p[:B]
    return rec_p, lat_p


def init_params(key, feature_num, latent_dim, hidden=512):
    """Deterministic PyTorch-Linear-style init (uniform(-1/sqrt(in), 1/sqrt(in))).

    Weights are stored pre-transposed as (in_dim, out_dim)."""
    dims = [(feature_num, hidden), (hidden, latent_dim),
            (latent_dim, hidden), (hidden, feature_num)]
    params = []
    for (din, dout) in dims:
        key, kw, kb = jax.random.split(key, 3)
        bound = 1.0 / (din ** 0.5)
        w = jax.random.uniform(kw, (din, dout), jnp.float32, -bound, bound)
        b = jax.random.uniform(kb, (1, dout), jnp.float32, -bound, bound)
        params.append((w, b))
    return params


def ae_forward_ref(x, params, weights_dtype=jnp.bfloat16):
    """Plain-JAX reference with the same bf16-operand / f32-accumulate recipe."""
    def layer(h, w, b):
        y = jnp.dot(h.astype(weights_dtype), w.astype(weights_dtype),
                    preferred_element_type=jnp.float32) + b
        return _leaky_relu(y)

    (w1, b1), (w2, b2), (w3, b3), (w4, b4) = params
    h1 = layer(x, w1, b1)
    z = layer(h1, w2, b2)
    h2 = layer(z, w3, b3)
    rec = layer(h2, w4, b4)
    return rec.astype(x.dtype), z.astype(x.dtype)


if __name__ == "__main__":
    # Small shapes consistent with the module; B=200 exercises batch padding
    # and a 2-step ("parallel") grid.
    B, FEAT, LATENT = 200, 256, 128

    key = jax.random.PRNGKey(0)
    kx, kp = jax.random.split(key)
    x = jax.random.normal(kx, (B, FEAT), jnp.float32)
    params = init_params(kp, FEAT, LATENT)

    rec, lat = ae_forward(x, params)
    rec = jax.block_until_ready(rec)
    lat = jax.block_until_ready(lat)

    rec_ref, lat_ref = ae_forward_ref(x, params)
    assert rec.shape == (B, FEAT) and lat.shape == (B, LATENT)
    assert jnp.allclose(rec, rec_ref, atol=2e-2, rtol=2e-2), \
        float(jnp.max(jnp.abs(rec - rec_ref)))
    assert jnp.allclose(lat, lat_ref, atol=2e-2, rtol=2e-2), \
        float(jnp.max(jnp.abs(lat - lat_ref)))

    print("KERNEL_OK")
</pallas_src>

<mosaic_0001>
module attributes {stable_mosaic.version = 11 : i64} {
  func.func @ae_kernel(%arg0: i32, %arg1: memref<128x256xf32, #tpu.memory_space<vmem>>, %arg2: memref<256x512xbf16, #tpu.memory_space<vmem>>, %arg3: memref<1x512xf32, #tpu.memory_space<vmem>>, %arg4: memref<512x128xbf16, #tpu.memory_space<vmem>>, %arg5: memref<1x128xf32, #tpu.memory_space<vmem>>, %arg6: memref<128x512xbf16, #tpu.memory_space<vmem>>, %arg7: memref<1x512xf32, #tpu.memory_space<vmem>>, %arg8: memref<512x256xbf16, #tpu.memory_space<vmem>>, %arg9: memref<1x256xf32, #tpu.memory_space<vmem>>, %arg10: memref<128x256xf32, #tpu.memory_space<vmem>>, %arg11: memref<128x128xf32, #tpu.memory_space<vmem>>) attributes {dimension_semantics = [#tpu.dimension_semantics<parallel>], iteration_bounds = array<i64: 2>, scalar_prefetch = 0 : i64, scratch_operands = 0 : i64, tpu.core_type = #tpu.core_type<tc>, window_params = [{transform_indices = @transform_0, window_bounds = array<i64: 128, 256>}, {pipeline_mode = #tpu.pipeline_mode<synchronous>, transform_indices = @transform_1, window_bounds = array<i64: 256, 512>}, {pipeline_mode = #tpu.pipeline_mode<synchronous>, transform_indices = @transform_2, window_bounds = array<i64: 1, 512>}, {pipeline_mode = #tpu.pipeline_mode<synchronous>, transform_indices = @transform_3, window_bounds = array<i64: 512, 128>}, {pipeline_mode = #tpu.pipeline_mode<synchronous>, transform_indices = @transform_4, window_bounds = array<i64: 1, 128>}, {pipeline_mode = #tpu.pipeline_mode<synchronous>, transform_indices = @transform_5, window_bounds = array<i64: 128, 512>}, {pipeline_mode = #tpu.pipeline_mode<synchronous>, transform_indices = @transform_6, window_bounds = array<i64: 1, 512>}, {pipeline_mode = #tpu.pipeline_mode<synchronous>, transform_indices = @transform_7, window_bounds = array<i64: 512, 256>}, {pipeline_mode = #tpu.pipeline_mode<synchronous>, transform_indices = @transform_8, window_bounds = array<i64: 1, 256>}, {transform_indices = @transform_9, window_bounds = array<i64: 128, 256>}, {transform_indices = @transform_10, window_bounds = array<i64: 128, 128>}]} {
    %c0 = arith.constant 0 : index
    %c0_0 = arith.constant 0 : index
    %0 = vector.load %arg2[%c0, %c0_0] : memref<256x512xbf16, #tpu.memory_space<vmem>>, vector<256x512xbf16>
    %c0_1 = arith.constant 0 : index
    %c0_2 = arith.constant 0 : index
    %1 = vector.load %arg3[%c0_1, %c0_2] : memref<1x512xf32, #tpu.memory_space<vmem>>, vector<1x512xf32>
    %c0_3 = arith.constant 0 : index
    %c0_4 = arith.constant 0 : index
    %2 = vector.load %arg4[%c0_3, %c0_4] : memref<512x128xbf16, #tpu.memory_space<vmem>>, vector<512x128xbf16>
    %c0_5 = arith.constant 0 : index
    %c0_6 = arith.constant 0 : index
    %3 = vector.load %arg5[%c0_5, %c0_6] : memref<1x128xf32, #tpu.memory_space<vmem>>, vector<1x128xf32>
    %c0_7 = arith.constant 0 : index
    %c0_8 = arith.constant 0 : index
    %4 = vector.load %arg6[%c0_7, %c0_8] : memref<128x512xbf16, #tpu.memory_space<vmem>>, vector<128x512xbf16>
    %c0_9 = arith.constant 0 : index
    %c0_10 = arith.constant 0 : index
    %5 = vector.load %arg7[%c0_9, %c0_10] : memref<1x512xf32, #tpu.memory_space<vmem>>, vector<1x512xf32>
    %c0_11 = arith.constant 0 : index
    %c0_12 = arith.constant 0 : index
    %6 = vector.load %arg8[%c0_11, %c0_12] : memref<512x256xbf16, #tpu.memory_space<vmem>>, vector<512x256xbf16>
    %c0_13 = arith.constant 0 : index
    %c0_14 = arith.constant 0 : index
    %7 = vector.load %arg9[%c0_13, %c0_14] : memref<1x256xf32, #tpu.memory_space<vmem>>, vector<1x256xf32>
    %c0_15 = arith.constant 0 : index
    %c0_16 = arith.constant 0 : index
    %8 = vector.load %arg1[%c0_15, %c0_16] : memref<128x256xf32, #tpu.memory_space<vmem>>, vector<128x256xf32>
    %9 = arith.truncf %8 : vector<128x256xf32> to vector<128x256xbf16>
    %cst = arith.constant dense<0.000000e+00> : vector<128x512xf32>
    %10 = tpu.matmul %9, %0, %cst {dimension_numbers = #tpu.dot_dimension_numbers<[1], [0], [0], [1], [0, 0, 1, 1], [], []>} : vector<128x256xbf16>, vector<256x512xbf16>, vector<128x512xf32> -> vector<128x512xf32>
    %11 = vector.broadcast %1 : vector<1x512xf32> to vector<128x512xf32>
    %12 = arith.addf %10, %11 : vector<128x512xf32>
    %cst_17 = arith.constant 0.000000e+00 : f32
    %13 = vector.broadcast %cst_17 : f32 to vector<128x512xf32>
    %14 = arith.cmpf ogt, %12, %13 : vector<128x512xf32>
    %cst_18 = arith.constant 2.000000e-01 : f32
    %15 = vector.broadcast %cst_18 : f32 to vector<128x512xf32>
    %16 = arith.mulf %15, %12 : vector<128x512xf32>
    %17 = arith.select %14, %12, %16 : vector<128x512xi1>, vector<128x512xf32>
    %18 = arith.truncf %17 : vector<128x512xf32> to vector<128x512xbf16>
    %cst_19 = arith.constant dense<0.000000e+00> : vector<128x128xf32>
    %19 = tpu.matmul %18, %2, %cst_19 {dimension_numbers = #tpu.dot_dimension_numbers<[1], [0], [0], [1], [0, 0, 1, 1], [], []>} : vector<128x512xbf16>, vector<512x128xbf16>, vector<128x128xf32> -> vector<128x128xf32>
    %20 = vector.broadcast %3 : vector<1x128xf32> to vector<128x128xf32>
    %21 = arith.addf %19, %20 : vector<128x128xf32>
    %cst_20 = arith.constant 0.000000e+00 : f32
    %22 = vector.broadcast %cst_20 : f32 to vector<128x128xf32>
    %23 = arith.cmpf ogt, %21, %22 : vector<128x128xf32>
    %cst_21 = arith.constant 2.000000e-01 : f32
    %24 = vector.broadcast %cst_21 : f32 to vector<128x128xf32>
    %25 = arith.mulf %24, %21 : vector<128x128xf32>
    %26 = arith.select %23, %21, %25 : vector<128x128xi1>, vector<128x128xf32>
    %c0_22 = arith.constant 0 : index
    %c0_23 = arith.constant 0 : index
    %27 = vector.load %arg11[%c0_22, %c0_23] : memref<128x128xf32, #tpu.memory_space<vmem>>, vector<128x128xf32>
    tpu.vector_store %arg11[%c0_22, %c0_23], %26 {strides = array<i32>} : memref<128x128xf32, #tpu.memory_space<vmem>>, vector<128x128xf32>,
    %28 = arith.truncf %26 : vector<128x128xf32> to vector<128x128xbf16>
    %cst_24 = arith.constant dense<0.000000e+00> : vector<128x512xf32>
    %29 = tpu.matmul %28, %4, %cst_24 {dimension_numbers = #tpu.dot_dimension_numbers<[1], [0], [0], [1], [0, 0, 1, 1], [], []>} : vector<128x128xbf16>, vector<128x512xbf16>, vector<128x512xf32> -> vector<128x512xf32>
    %30 = vector.broadcast %5 : vector<1x512xf32> to vector<128x512xf32>
    %31 = arith.addf %29, %30 : vector<128x512xf32>
    %cst_25 = arith.constant 0.000000e+00 : f32
    %32 = vector.broadcast %cst_25 : f32 to vector<128x512xf32>
    %33 = arith.cmpf ogt, %31, %32 : vector<128x512xf32>
    %cst_26 = arith.constant 2.000000e-01 : f32
    %34 = vector.broadcast %cst_26 : f32 to vector<128x512xf32>
    %35 = arith.mulf %34, %31 : vector<128x512xf32>
    %36 = arith.select %33, %31, %35 : vector<128x512xi1>, vector<128x512xf32>
    %37 = arith.truncf %36 : vector<128x512xf32> to vector<128x512xbf16>
    %cst_27 = arith.constant dense<0.000000e+00> : vector<128x256xf32>
    %38 = tpu.matmul %37, %6, %cst_27 {dimension_numbers = #tpu.dot_dimension_numbers<[1], [0], [0], [1], [0, 0, 1, 1], [], []>} : vector<128x512xbf16>, vector<512x256xbf16>, vector<128x256xf32> -> vector<128x256xf32>
    %39 = vector.broadcast %7 : vector<1x256xf32> to vector<128x256xf32>
    %40 = arith.addf %38, %39 : vector<128x256xf32>
    %cst_28 = arith.constant 0.000000e+00 : f32
    %41 = vector.broadcast %cst_28 : f32 to vector<128x256xf32>
    %42 = arith.cmpf ogt, %40, %41 : vector<128x256xf32>
    %cst_29 = arith.constant 2.000000e-01 : f32
    %43 = vector.broadcast %cst_29 : f32 to vector<128x256xf32>
    %44 = arith.mulf %43, %40 : vector<128x256xf32>
    %45 = arith.select %42, %40, %44 : vector<128x256xi1>, vector<128x256xf32>
    %c0_30 = arith.constant 0 : index
    %c0_31 = arith.constant 0 : index
    %46 = vector.load %arg10[%c0_30, %c0_31] : memref<128x256xf32, #tpu.memory_space<vmem>>, vector<128x256xf32>
    tpu.vector_store %arg10[%c0_30, %c0_31], %45 {strides = array<i32>} : memref<128x256xf32, #tpu.memory_space<vmem>>, vector<128x256xf32>,
    return
  }
  func.func @transform_0(%arg0: i32) -> (i32, i32) {
    %c0_i32 = arith.constant 0 : i32
    %c0_i32_0 = arith.constant 0 : i32
    return %arg0, %c0_i32 : i32, i32
  }
  func.func @transform_1(%arg0: i32) -> (i32, i32) {
    %c0_i32 = arith.constant 0 : i32
    %c0_i32_0 = arith.constant 0 : i32
    %c0_i32_1 = arith.constant 0 : i32
    return %c0_i32, %c0_i32_0 : i32, i32
  }
  func.func @transform_2(%arg0: i32) -> (i32, i32) {
    %c0_i32 = arith.constant 0 : i32
    %c0_i32_0 = arith.constant 0 : i32
    %c0_i32_1 = arith.constant 0 : i32
    return %c0_i32, %c0_i32_0 : i32, i32
  }
  func.func @transform_3(%arg0: i32) -> (i32, i32) {
    %c0_i32 = arith.constant 0 : i32
    %c0_i32_0 = arith.constant 0 : i32
    %c0_i32_1 = arith.constant 0 : i32
    return %c0_i32, %c0_i32_0 : i32, i32
  }
  func.func @transform_4(%arg0: i32) -> (i32, i32) {
    %c0_i32 = arith.constant 0 : i32
    %c0_i32_0 = arith.constant 0 : i32
    %c0_i32_1 = arith.constant 0 : i32
    return %c0_i32, %c0_i32_0 : i32, i32
  }
  func.func @transform_5(%arg0: i32) -> (i32, i32) {
    %c0_i32 = arith.constant 0 : i32
    %c0_i32_0 = arith.constant 0 : i32
    %c0_i32_1 = arith.constant 0 : i32
    return %c0_i32, %c0_i32_0 : i32, i32
  }
  func.func @transform_6(%arg0: i32) -> (i32, i32) {
    %c0_i32 = arith.constant 0 : i32
    %c0_i32_0 = arith.constant 0 : i32
    %c0_i32_1 = arith.constant 0 : i32
    return %c0_i32, %c0_i32_0 : i32, i32
  }
  func.func @transform_7(%arg0: i32) -> (i32, i32) {
    %c0_i32 = arith.constant 0 : i32
    %c0_i32_0 = arith.constant 0 : i32
    %c0_i32_1 = arith.constant 0 : i32
    return %c0_i32, %c0_i32_0 : i32, i32
  }
  func.func @transform_8(%arg0: i32) -> (i32, i32) {
    %c0_i32 = arith.constant 0 : i32
    %c0_i32_0 = arith.constant 0 : i32
    %c0_i32_1 = arith.constant 0 : i32
    return %c0_i32, %c0_i32_0 : i32, i32
  }
  func.func @transform_9(%arg0: i32) -> (i32, i32) {
    %c0_i32 = arith.constant 0 : i32
    %c0_i32_0 = arith.constant 0 : i32
    return %arg0, %c0_i32 : i32, i32
  }
  func.func @transform_10(%arg0: i32) -> (i32, i32) {
    %c0_i32 = arith.constant 0 : i32
    %c0_i32_0 = arith.constant 0 : i32
    return %arg0, %c0_i32 : i32, i32
  }
}

</mosaic_0001>

<llo_original>
// kernel: ae_forward.1
$region0: #{ae_forward.1}
  #allocation0 [shape = 'u32[]', space=smem, size = 0x4, offset = 0x4, fixed_abs, tag = 'smem constant byte address 0x4 - core index']
  #allocation1 [shape = 'u32[72,128]{1,0:T(1,128)}', space=vmem, size = 0x9000, scoped, tag = 'internal scratch']
  %s0 = inlined_call_operand.vmem [shape: f32[256,256], index: 0, kind: input, shape index: {}]
  %s1 = inlined_call_operand.vmem [shape: bf16[256,512], index: 1, kind: input, shape index: {}]
  %s2 = inlined_call_operand.vmem [shape: f32[1,512], index: 2, kind: input, shape index: {}]
  %s3 = inlined_call_operand.vmem [shape: bf16[512,128], index: 3, kind: input, shape index: {}]
  %s4 = inlined_call_operand.vmem [shape: f32[1,128], index: 4, kind: input, shape index: {}]
  %s5 = inlined_call_operand.vmem [shape: bf16[128,512], index: 5, kind: input, shape index: {}]
  %s6 = inlined_call_operand.vmem [shape: f32[1,512], index: 6, kind: input, shape index: {}]
  %s7 = inlined_call_operand.vmem [shape: bf16[512,256], index: 7, kind: input, shape index: {}]
  %s8 = inlined_call_operand.vmem [shape: f32[1,256], index: 8, kind: input, shape index: {}]
  %s9 = inlined_call_operand.vmem [shape: f32[256,256], index: 9, kind: output, shape index: {0}]
  %s10 = inlined_call_operand.vmem [shape: f32[256,128], index: 10, kind: output, shape index: {1}]
  %11 = xla_tuple %s9, %s10
  %s12 = sld [smem:[#allocation0]]
  $region77: #{ae_forward.1} parent=0
    _
  %s14 = ssub.s32 1, %s12
  %s15 = scalar_select 0, %s14, %s12
  loop: start=0, step=1, limit=4
  $region2: #{ae_forward.1} parent=0 // loop_pre_header
    _
  $region3: #{ae_forward.1} parent=0 // loop_header
    %s17 = sphi 0, %s21
    %p18 = scmp.ge.s32.totalorder %s17, 4
    %s27 = sphi 0, %s29
    %s30 = sphi 0, %s27
    %s31 = sphi 0, %s30
    %s47 = sphi 0, %s31
    %s51 = sphi 0, %s51
    %s53 = sphi 0, %s51
    %s54 = sphi 0, %s53
    %s68 = sphi 0, %s54
    %s72 = sphi 0, %s72
    %s74 = sphi 0, %s72
    %s75 = sphi 0, %s74
    %s89 = sphi 0, %s75
    %s93 = sphi 0, %s93
    %s95 = sphi 0, %s93
    %s96 = sphi 0, %s95
    %s110 = sphi 0, %s96
    %s114 = sphi 0, %s114
    %s116 = sphi 0, %s114
    %s117 = sphi 0, %s116
    %s131 = sphi 0, %s117
    %s135 = sphi 0, %s135
    %s137 = sphi 0, %s135
    %s138 = sphi 0, %s137
    %s152 = sphi 0, %s138
    %s156 = sphi 0, %s156
    %s158 = sphi 0, %s156
    %s159 = sphi 0, %s158
    %s173 = sphi 0, %s159
    %s177 = sphi 0, %s177
    %s179 = sphi 0, %s177
    %s180 = sphi 0, %s179
    %s194 = sphi 0, %s180
    %s198 = sphi 0, %s198
    %s200 = sphi 0, %s198
    %s201 = sphi 0, %s200
    %s215 = sphi 0, %s201
    %s221 = sphi 0, %s223
    %s224 = sphi 0, %s221
    %s225 = sphi 0, %s224
    %s241 = sphi 0, %s225
    %s247 = sphi 0, %s249
    %s250 = sphi 0, %s247
    %s251 = sphi 0, %s250
    %s267 = sphi 0, %s251
  $region4: #{ae_forward.1} parent=0 // loop_header_branch
    %20 = sbr.rel (%p18) target = $region8
  $region5: #{ae_forward.1} parent=0 // loop_body
    %s22 = ssub.s32 %s17, 1
    %s23 = ssub.s32 %s17, 2
    %s24 = sadd.s32 %s17, 1
    %s25 = ssub.s32 %s17, %s24
    %p26 = scmp.eq.s32.totalorder %s25, 0
    %s28 = sadd.s32 %s27, 1
    %s29 = scalar_select %p26, %s27, %s28
    %p32 = pneg %p26
    %p33 = scmp.eq.s32.totalorder %s17, 1
    %p34 = por %p32, %p33
    %p35 = scmp.ne.s32.totalorder %s27, %s30
    %p36 = scmp.eq.s32.totalorder %s17, 0
    %p37 = por %p35, %p36
    %p38 = scmp.ne.s32.totalorder %s27, %s30
    %p39 = scmp.eq.s32.totalorder %s22, 1
    %p40 = por %p38, %p39
    %p41 = scmp.ne.s32.totalorder %s30, %s31
    %p42 = scmp.eq.s32.totalorder %s22, 0
    %p43 = por %p41, %p42
    %p44 = scmp.ne.s32.totalorder %s30, %s31
    %p45 = scmp.eq.s32.totalorder %s23, 1
    %p46 = por %p44, %p45
    %p48 = scmp.ne.s32.totalorder %s31, %s47
    %p49 = scmp.eq.s32.totalorder %s23, 0
    %p50 = por %p48, %p49
    %s52 = sadd.s32 %s51, 1
    %p55 = scmp.eq.s32.totalorder %s17, 1
    %p56 = scmp.ne.s32.totalorder %s51, %s53
    %p57 = scmp.eq.s32.totalorder %s17, 0
    %p58 = por %p56, %p57
    %p59 = scmp.ne.s32.totalorder %s51, %s53
    %p60 = scmp.eq.s32.totalorder %s22, 1
    %p61 = por %p59, %p60
    %p62 = scmp.ne.s32.totalorder %s53, %s54
    %p63 = scmp.eq.s32.totalorder %s22, 0
    %p64 = por %p62, %p63
    %p65 = scmp.ne.s32.totalorder %s53, %s54
    %p66 = scmp.eq.s32.totalorder %s23, 1
    %p67 = por %p65, %p66
    %p69 = scmp.ne.s32.totalorder %s54, %s68
    %p70 = scmp.eq.s32.totalorder %s23, 0
    %p71 = por %p69, %p70
    %s73 = sadd.s32 %s72, 1
    %p76 = scmp.eq.s32.totalorder %s17, 1
    %p77 = scmp.ne.s32.totalorder %s72, %s74
    %p78 = scmp.eq.s32.totalorder %s17, 0
    %p79 = por %p77, %p78
    %p80 = scmp.ne.s32.totalorder %s72, %s74
    %p81 = scmp.eq.s32.totalorder %s22, 1
    %p82 = por %p80, %p81
    %p83 = scmp.ne.s32.totalorder %s74, %s75
    %p84 = scmp.eq.s32.totalorder %s22, 0
    %p85 = por %p83, %p84
    %p86 = scmp.ne.s32.totalorder %s74, %s75
    %p87 = scmp.eq.s32.totalorder %s23, 1
    %p88 = por %p86, %p87
    %p90 = scmp.ne.s32.totalorder %s75, %s89
    %p91 = scmp.eq.s32.totalorder %s23, 0
    %p92 = por %p90, %p91
    %s94 = sadd.s32 %s93, 1
    %p97 = scmp.eq.s32.totalorder %s17, 1
    %p98 = scmp.ne.s32.totalorder %s93, %s95
    %p99 = scmp.eq.s32.totalorder %s17, 0
    %p100 = por %p98, %p99
    %p101 = scmp.ne.s32.totalorder %s93, %s95
    %p102 = scmp.eq.s32.totalorder %s22, 1
    %p103 = por %p101, %p102
    %p104 = scmp.ne.s32.totalorder %s95, %s96
    %p105 = scmp.eq.s32.totalorder %s22, 0
    %p106 = por %p104, %p105
    %p107 = scmp.ne.s32.totalorder %s95, %s96
    %p108 = scmp.eq.s32.totalorder %s23, 1
    %p109 = por %p107, %p108
    %p111 = scmp.ne.s32.totalorder %s96, %s110
    %p112 = scmp.eq.s32.totalorder %s23, 0
    %p113 = por %p111, %p112
    %s115 = sadd.s32 %s114, 1
    %p118 = scmp.eq.s32.totalorder %s17, 1
    %p119 = scmp.ne.s32.totalorder %s114, %s116
    %p120 = scmp.eq.s32.totalorder %s17, 0
    %p121 = por %p119, %p120
    %p122 = scmp.ne.s32.totalorder %s114, %s116
    %p123 = scmp.eq.s32.totalorder %s22, 1
    %p124 = por %p122, %p123
    %p125 = scmp.ne.s32.totalorder %s116, %s117
    %p126 = scmp.eq.s32.totalorder %s22, 0
    %p127 = por %p125, %p126
    %p128 = scmp.ne.s32.totalorder %s116, %s117
    %p129 = scmp.eq.s32.totalorder %s23, 1
    %p130 = por %p128, %p129
    %p132 = scmp.ne.s32.totalorder %s117, %s131
    %p133 = scmp.eq.s32.totalorder %s23, 0
    %p134 = por %p132, %p133
    %s136 = sadd.s32 %s135, 1
    %p139 = scmp.eq.s32.totalorder %s17, 1
    %p140 = scmp.ne.s32.totalorder %s135, %s137
    %p141 = scmp.eq.s32.totalorder %s17, 0
    %p142 = por %p140, %p141
    %p143 = scmp.ne.s32.totalorder %s135, %s137
    %p144 = scmp.eq.s32.totalorder %s22, 1
    %p145 = por %p143, %p144
    %p146 = scmp.ne.s32.totalorder %s137, %s138
    %p147 = scmp.eq.s32.totalorder %s22, 0
    %p148 = por %p146, %p147
    %p149 = scmp.ne.s32.totalorder %s137, %s138
    %p150 = scmp.eq.s32.totalorder %s23, 1
    %p151 = por %p149, %p150
    %p153 = scmp.ne.s32.totalorder %s138, %s152
    %p154 = scmp.eq.s32.totalorder %s23, 0
    %p155 = por %p153, %p154
    %s157 = sadd.s32 %s156, 1
    %p160 = scmp.eq.s32.totalorder %s17, 1
    %p161 = scmp.ne.s32.totalorder %s156, %s158
    %p162 = scmp.eq.s32.totalorder %s17, 0
    %p163 = por %p161, %p162
    %p164 = scmp.ne.s32.totalorder %s156, %s158
    %p165 = scmp.eq.s32.totalorder %s22, 1
    %p166 = por %p164, %p165
    %p167 = scmp.ne.s32.totalorder %s158, %s159
    %p168 = scmp.eq.s32.totalorder %s22, 0
    %p169 = por %p167, %p168
    %p170 = scmp.ne.s32.totalorder %s158, %s159
    %p171 = scmp.eq.s32.totalorder %s23, 1
    %p172 = por %p170, %p171
    %p174 = scmp.ne.s32.totalorder %s159, %s173
    %p175 = scmp.eq.s32.totalorder %s23, 0
    %p176 = por %p174, %p175
    %s178 = sadd.s32 %s177, 1
    %p181 = scmp.eq.s32.totalorder %s17, 1
    %p182 = scmp.ne.s32.totalorder %s177, %s179
    %p183 = scmp.eq.s32.totalorder %s17, 0
    %p184 = por %p182, %p183
    %p185 = scmp.ne.s32.totalorder %s177, %s179
    %p186 = scmp.eq.s32.totalorder %s22, 1
    %p187 = por %p185, %p186
    %p188 = scmp.ne.s32.totalorder %s179, %s180
    %p189 = scmp.eq.s32.totalorder %s22, 0
    %p190 = por %p188, %p189
    %p191 = scmp.ne.s32.totalorder %s179, %s180
    %p192 = scmp.eq.s32.totalorder %s23, 1
    %p193 = por %p191, %p192
    %p195 = scmp.ne.s32.totalorder %s180, %s194
    %p196 = scmp.eq.s32.totalorder %s23, 0
    %p197 = por %p195, %p196
    %s199 = sadd.s32 %s198, 1
    %p202 = scmp.eq.s32.totalorder %s17, 1
    %p203 = scmp.ne.s32.totalorder %s198, %s200
    %p204 = scmp.eq.s32.totalorder %s17, 0
    %p205 = por %p203, %p204
    %p206 = scmp.ne.s32.totalorder %s198, %s200
    %p207 = scmp.eq.s32.totalorder %s22, 1
    %p208 = por %p206, %p207
    %p209 = scmp.ne.s32.totalorder %s200, %s201
    %p210 = scmp.eq.s32.totalorder %s22, 0
    %p211 = por %p209, %p210
    %p212 = scmp.ne.s32.totalorder %s200, %s201
    %p213 = scmp.eq.s32.totalorder %s23, 1
    %p214 = por %p212, %p213
    %p216 = scmp.ne.s32.totalorder %s201, %s215
    %p217 = scmp.eq.s32.totalorder %s23, 0
    %p218 = por %p216, %p217
    %s219 = ssub.s32 %s17, %s24
    %p220 = scmp.eq.s32.totalorder %s219, 0
    %s222 = sadd.s32 %s221, 1
    %s223 = scalar_select %p220, %s221, %s222
    %p226 = pneg %p220
    %p227 = scmp.eq.s32.totalorder %s17, 1
    %p228 = por %p226, %p227
    %p229 = scmp.ne.s32.totalorder %s221, %s224
    %p230 = scmp.eq.s32.totalorder %s17, 0
    %p231 = por %p229, %p230
    %p232 = scmp.ne.s32.totalorder %s221, %s224
    %p233 = scmp.eq.s32.totalorder %s22, 1
    %p234 = por %p232, %p233
    %p235 = scmp.ne.s32.totalorder %s224, %s225
    %p236 = scmp.eq.s32.totalorder %s22, 0
    %p237 = por %p235, %p236
    %p238 = scmp.ne.s32.totalorder %s224, %s225
    %p239 = scmp.eq.s32.totalorder %s23, 1
    %p240 = por %p238, %p239
    %p242 = scmp.ne.s32.totalorder %s225, %s241
    %p243 = scmp.eq.s32.totalorder %s23, 0
    %p244 = por %p242, %p243
    %s245 = ssub.s32 %s17, %s24
    %p246 = scmp.eq.s32.totalorder %s245, 0
    %s248 = sadd.s32 %s247, 1
    %s249 = scalar_select %p246, %s247, %s248
    %p252 = pneg %p246
    %p253 = scmp.eq.s32.totalorder %s17, 1
    %p254 = por %p252, %p253
    %p255 = scmp.ne.s32.totalorder %s247, %s250
    %p256 = scmp.eq.s32.totalorder %s17, 0
    %p257 = por %p255, %p256
    %p258 = scmp.ne.s32.totalorder %s247, %s250
    %p259 = scmp.eq.s32.totalorder %s22, 1
    %p260 = por %p258, %p259
    %p261 = scmp.ne.s32.totalorder %s250, %s251
    %p262 = scmp.eq.s32.totalorder %s22, 0
    %p263 = por %p261, %p262
    %p264 = scmp.ne.s32.totalorder %s250, %s251
    %p265 = scmp.eq.s32.totalorder %s23, 1
    %p266 = por %p264, %p265
    %p268 = scmp.ne.s32.totalorder %s251, %s267
    %p269 = scmp.eq.s32.totalorder %s23, 0
    %p270 = por %p268, %p269
    %p271 = scmp.le.s32.totalorder 1, %s17
    %p272 = scmp.lt.s32.totalorder %s17, 3
    %p273 = pnand %p271, %p272
    %p274 = pneg %p273
    // Predicated region
    $region9: #{ae_forward.1} parent=5 // pred_check
      _
    $region10: #{ae_forward.1} parent=5 // pred_check_branch
      %276 = sbr.rel (%p273) target = $region12
    $region11: #{ae_forward.1} parent=5 // pred_region
      %s277 = ssub.s32 %s17, 1
      // Predicated region
      $region13: #{ae_forward.1} parent=11 // pred_check
        %p278 = pneg %p64
      $region14: #{ae_forward.1} parent=11 // pred_check_branch
        %280 = sbr.rel (%p278) target = $region16
      $region15: #{ae_forward.1} parent=11 // pred_region
        _
      $region16: #{ae_forward.1} parent=11 // pred_fallthru
        _
      // Predicated region
      $region17: #{ae_forward.1} parent=11 // pred_check
        %p281 = pneg %p85
      $region18: #{ae_forward.1} parent=11 // pred_check_branch
        %283 = sbr.rel (%p281) target = $region20
      $region19: #{ae_forward.1} parent=11 // pred_region
        _
      $region20: #{ae_forward.1} parent=11 // pred_fallthru
        _
      // Predicated region
      $region21: #{ae_forward.1} parent=11 // pred_check
        %p284 = pneg %p106
      $region22: #{ae_forward.1} parent=11 // pred_check_branch
        %286 = sbr.rel (%p284) target = $region24
      $region23: #{ae_forward.1} parent=11 // pred_region
        _
      $region24: #{ae_forward.1} parent=11 // pred_fallthru
        _
      // Predicated region
      $region25: #{ae_forward.1} parent=11 // pred_check
        %p287 = pneg %p127
      $region26: #{ae_forward.1} parent=11 // pred_check_branch
        %289 = sbr.rel (%p287) target = $region28
      $region27: #{ae_forward.1} parent=11 // pred_region
        _
      $region28: #{ae_forward.1} parent=11 // pred_fallthru
        _
      // Predicated region
      $region29: #{ae_forward.1} parent=11 // pred_check
        %p290 = pneg %p148
      $region30: #{ae_forward.1} parent=11 // pred_check_branch
        %292 = sbr.rel (%p290) target = $region32
      $region31: #{ae_forward.1} parent=11 // pred_region
        _
      $region32: #{ae_forward.1} parent=11 // pred_fallthru
        _
      // Predicated region
      $region33: #{ae_forward.1} parent=11 // pred_check
        %p293 = pneg %p169
      $region34: #{ae_forward.1} parent=11 // pred_check_branch
        %295 = sbr.rel (%p293) target = $region36
      $region35: #{ae_forward.1} parent=11 // pred_region
        _
      $region36: #{ae_forward.1} parent=11 // pred_fallthru
        _
      // Predicated region
      $region37: #{ae_forward.1} parent=11 // pred_check
        %p296 = pneg %p190
      $region38: #{ae_forward.1} parent=11 // pred_check_branch
        %298 = sbr.rel (%p296) target = $region40
      $region39: #{ae_forward.1} parent=11 // pred_region
        _
      $region40: #{ae_forward.1} parent=11 // pred_fallthru
        _
      // Predicated region
      $region41: #{ae_forward.1} parent=11 // pred_check
        %p299 = pneg %p211
      $region42: #{ae_forward.1} parent=11 // pred_check_branch
        %301 = sbr.rel (%p299) target = $region44
      $region43: #{ae_forward.1} parent=11 // pred_region
        _
      $region44: #{ae_forward.1} parent=11 // pred_fallthru
        _
    $region12: #{ae_forward.1} parent=5 // pred_fallthru
      _
    %p302 = scmp.lt.s32.totalorder %s17, 2
    // Predicated region
    $region45: #{ae_forward.1} parent=5 // pred_check
      %p303 = pneg %p302
    $region46: #{ae_forward.1} parent=5 // pred_check_branch
      %305 = sbr.rel (%p303) target = $region48
    $region47: #{ae_forward.1} parent=5 // pred_region
      // Predicated region
      $region49: #{ae_forward.1} parent=47 // pred_check
        %p306 = pneg %p37
      $region50: #{ae_forward.1} parent=47 // pred_check_branch
        %308 = sbr.rel (%p306) target = $region52
      $region51: #{ae_forward.1} parent=47 // pred_region
        %s309 = smul.u32 16, %s17
        %p310 = scmp.lt.s32.totalorder %s309, 31
        %s311 = scalar_select %p310, %s309, 31
        %s312 = smul.addr %s311, 2
        %s313 = smul.addr %s312, 8
        %s314 = scalar_lea.vmem %s0, %s313
        %s315 = smul.u32 16, %s17
      $region52: #{ae_forward.1} parent=47 // pred_fallthru
        _
    $region48: #{ae_forward.1} parent=5 // pred_fallthru
      _
    %p316 = scmp.le.s32.totalorder 1, %s17
    %p317 = scmp.lt.s32.totalorder %s17, 3
    %p318 = pnand %p316, %p317
    %p319 = pneg %p318
    // Predicated region
    $region53: #{ae_forward.1} parent=5 // pred_check
      _
    $region54: #{ae_forward.1} parent=5 // pred_check_branch
      %321 = sbr.rel (%p318) target = $region56
    $region55: #{ae_forward.1} parent=5 // pred_region
      %s322 = ssub.s32 %s17, 1
      %s323 = smul.u32 16, %s22
      %p324 = scmp.lt.s32.totalorder %s323, 31
      %s325 = scalar_select %p324, %s323, 31
      %s326 = smul.addr %s325, 2
      %s327 = smul.addr %s326, 8
      %s328 = scalar_lea.vmem %s0, %s327
      %p329 = pneg %p43
      %p330 = pneg %p40
      %p331 = pneg %p64
      %p332 = pneg %p61
      %p333 = pneg %p85
      %p334 = pneg %p82
      %p335 = pneg %p106
      %p336 = pneg %p103
      %p337 = pneg %p127
      %p338 = pneg %p124
      %p339 = pneg %p148
      %p340 = pneg %p145
      %p341 = pneg %p169
      %p342 = pneg %p166
      %p343 = pneg %p190
      %p344 = pneg %p187
      %p345 = pneg %p211
      %p346 = pneg %p208
      %p347 = pneg %p237
      %p348 = pneg %p234
      %s349 = smul.u32 16, %s22
      %p350 = scmp.lt.s32.totalorder %s349, 31
      %s351 = scalar_select %p350, %s349, 31
      %s352 = smul.addr %s351, 2
      %s353 = smul.addr %s352, 8
      %s354 = scalar_lea.vmem %s9, %s353
      %p355 = pneg %p263
      %p356 = pneg %p260
      %s357 = smul.u32 16, %s22
      %p358 = scmp.lt.s32.totalorder %s357, 31
      %s359 = scalar_select %p358, %s357, 31
      %s360 = smul.addr %s359, 8
      %s361 = scalar_lea.vmem %s10, %s360
      %s362 = smul.u32 16, %s22
      %p363 = scmp.lt.s32.totalorder %s362, 31
      %s364 = scalar_select %p363, %s362, 31
      %s365 = smul.addr %s364, 2
      %s366 = smul.addr %s365, 8
      %s367 = scalar_lea.vmem %s0, %s366
      %s368 = smul.u32 16, %s22
      %s369 = smul.u32 16, %s22
      %p370 = scmp.lt.s32.totalorder %s369, 31
      %s371 = scalar_select %p370, %s369, 31
      %s372 = smul.addr %s371, 2
      %s373 = smul.addr %s372, 8
      %s374 = scalar_lea.vmem %s9, %s373
      %s375 = smul.u32 16, %s22
      %s376 = smul.u32 16, %s22
      %p377 = scmp.lt.s32.totalorder %s376, 31
      %s378 = scalar_select %p377, %s376, 31
      %s379 = smul.addr %s378, 8
      %s380 = scalar_lea.vmem %s10, %s379
      %s381 = smul.u32 16, %s22
      %v382 = vld [vmem:[%s1] sm:$0xff]
      %v383 = vld [vmem:[%s1 + $0x8] sm:$0xff]
      %v384 = vld [vmem:[%s1 + $0x10] sm:$0xff]
      %v385 = vld [vmem:[%s1 + $0x18] sm:$0xff]
      %v386 = vld [vmem:[%s1 + $0x20] sm:$0xff]
      %v387 = vld [vmem:[%s1 + $0x28] sm:$0xff]
      %v388 = vld [vmem:[%s1 + $0x30] sm:$0xff]
      %v389 = vld [vmem:[%s1 + $0x38] sm:$0xff]
      %v390 = vld [vmem:[%s1 + $0x40] sm:$0xff]
      %v391 = vld [vmem:[%s1 + $0x48] sm:$0xff]
      %v392 = vld [vmem:[%s1 + $0x50] sm:$0xff]
      %v393 = vld [vmem:[%s1 + $0x58] sm:$0xff]
      %v394 = vld [vmem:[%s1 + $0x60] sm:$0xff]
      %v395 = vld [vmem:[%s1 + $0x68] sm:$0xff]
      %v396 = vld [vmem:[%s1 + $0x70] sm:$0xff]
      %v397 = vld [vmem:[%s1 + $0x78] sm:$0xff]
      %v398 = vld [vmem:[%s1 + $0x80] sm:$0xff]
      %v399 = vld [vmem:[%s1 + $0x88] sm:$0xff]
      %v400 = vld [vmem:[%s1 + $0x90] sm:$0xff]
      %v401 = vld [vmem:[%s1 + $0x98] sm:$0xff]
      %v402 = vld [vmem:[%s1 + $0xa0] sm:$0xff]
      %v403 = vld [vmem:[%s1 + $0xa8] sm:$0xff]
      %v404 = vld [vmem:[%s1 + $0xb0] sm:$0xff]
      %v405 = vld [vmem:[%s1 + $0xb8] sm:$0xff]
      %v406 = vld [vmem:[%s1 + $0xc0] sm:$0xff]
      %v407 = vld [vmem:[%s1 + $0xc8] sm:$0xff]
      %v408 = vld [vmem:[%s1 + $0xd0] sm:$0xff]
      %v409 = vld [vmem:[%s1 + $0xd8] sm:$0xff]
      %v410 = vld [vmem:[%s1 + $0xe0] sm:$0xff]
      %v411 = vld [vmem:[%s1 + $0xe8] sm:$0xff]
      %v412 = vld [vmem:[%s1 + $0xf0] sm:$0xff]
      %v413 = vld [vmem:[%s1 + $0xf8] sm:$0xff]
      %v414 = vld [vmem:[%s1 + $0x100] sm:$0xff]
      %v415 = vld [vmem:[%s1 + $0x108] sm:$0xff]
      %v416 = vld [vmem:[%s1 + $0x110] sm:$0xff]
      %v417 = vld [vmem:[%s1 + $0x118] sm:$0xff]
      %v418 = vld [vmem:[%s1 + $0x120] sm:$0xff]
      %v419 = vld [vmem:[%s1 + $0x128] sm:$0xff]
      %v420 = vld [vmem:[%s1 + $0x130] sm:$0xff]
      %v421 = vld [vmem:[%s1 + $0x138] sm:$0xff]
      %v422 = vld [vmem:[%s1 + $0x140] sm:$0xff]
      %v423 = vld [vmem:[%s1 + $0x148] sm:$0xff]
      %v424 = vld [vmem:[%s1 + $0x150] sm:$0xff]
      %v425 = vld [vmem:[%s1 + $0x158] sm:$0xff]
      %v426 = vld [vmem:[%s1 + $0x160] sm:$0xff]
      %v427 = vld [vmem:[%s1 + $0x168] sm:$0xff]
      %v428 = vld [vmem:[%s1 + $0x170] sm:$0xff]
      %v429 = vld [vmem:[%s1 + $0x178] sm:$0xff]
      %v430 = vld [vmem:[%s1 + $0x180] sm:$0xff]
      %v431 = vld [vmem:[%s1 + $0x188] sm:$0xff]
      %v432 = vld [vmem:[%s1 + $0x190] sm:$0xff]
      %v433 = vld [vmem:[%s1 + $0x198] sm:$0xff]
      %v434 = vld [vmem:[%s1 + $0x1a0] sm:$0xff]
      %v435 = vld [vmem:[%s1 + $0x1a8] sm:$0xff]
      %v436 = vld [vmem:[%s1 + $0x1b0] sm:$0xff]
      %v437 = vld [vmem:[%s1 + $0x1b8] sm:$0xff]
      %v438 = vld [vmem:[%s1 + $0x1c0] sm:$0xff]
      %v439 = vld [vmem:[%s1 + $0x1c8] sm:$0xff]
      %v440 = vld [vmem:[%s1 + $0x1d0] sm:$0xff]
      %v441 = vld [vmem:[%s1 + $0x1d8] sm:$0xff]
      %v442 = vld [vmem:[%s1 + $0x1e0] sm:$0xff]
      %v443 = vld [vmem:[%s1 + $0x1e8] sm:$0xff]
      %v444 = vld [vmem:[%s1 + $0x1f0] sm:$0xff]
      %v445 = vld [vmem:[%s1 + $0x1f8] sm:$0xff]
      %v446 = vld [vmem:[%s2] sm:$0xf]
      %v447 = vld [vmem:[%s3] sm:$0xf]
      %v448 = vld [vmem:[%s3 + $0x4] sm:$0xf]
      %v449 = vld [vmem:[%s3 + $0x8] sm:$0xf]
      %v450 = vld [vmem:[%s3 + $0xc] sm:$0xf]
      %v451 = vld [vmem:[%s3 + $0x10] sm:$0xf]
      %v452 = vld [vmem:[%s3 + $0x14] sm:$0xf]
      %v453 = vld [vmem:[%s3 + $0x18] sm:$0xf]
      %v454 = vld [vmem:[%s3 + $0x1c] sm:$0xf]
      %v455 = vld [vmem:[%s3 + $0x20] sm:$0xf]
      %v456 = vld [vmem:[%s3 + $0x24] sm:$0xf]
      %v457 = vld [vmem:[%s3 + $0x28] sm:$0xf]
      %v458 = vld [vmem:[%s3 + $0x2c] sm:$0xf]
      %v459 = vld [vmem:[%s3 + $0x30] sm:$0xf]
      %v460 = vld [vmem:[%s3 + $0x34] sm:$0xf]
      %v461 = vld [vmem:[%s3 + $0x38] sm:$0xf]
      %v462 = vld [vmem:[%s3 + $0x3c] sm:$0xf]
      %v463 = vld [vmem:[%s3 + $0x40] sm:$0xf]
      %v464 = vld [vmem:[%s3 + $0x44] sm:$0xf]
      %v465 = vld [vmem:[%s3 + $0x48] sm:$0xf]
      %v466 = vld [vmem:[%s3 + $0x4c] sm:$0xf]
      %v467 = vld [vmem:[%s3 + $0x50] sm:$0xf]
      %v468 = vld [vmem:[%s3 + $0x54] sm:$0xf]
      %v469 = vld [vmem:[%s3 + $0x58] sm:$0xf]
      %v470 = vld [vmem:[%s3 + $0x5c] sm:$0xf]
      %v471 = vld [vmem:[%s3 + $0x60] sm:$0xf]
      %v472 = vld [vmem:[%s3 + $0x64] sm:$0xf]
      %v473 = vld [vmem:[%s3 + $0x68] sm:$0xf]
      %v474 = vld [vmem:[%s3 + $0x6c] sm:$0xf]
      %v475 = vld [vmem:[%s3 + $0x70] sm:$0xf]
      %v476 = vld [vmem:[%s3 + $0x74] sm:$0xf]
      %v477 = vld [vmem:[%s3 + $0x78] sm:$0xf]
      %v478 = vld [vmem:[%s3 + $0x7c] sm:$0xf]
      %v479 = vld [vmem:[%s3 + $0x80] sm:$0xf]
      %v480 = vld [vmem:[%s3 + $0x84] sm:$0xf]
      %v481 = vld [vmem:[%s3 + $0x88] sm:$0xf]
      %v482 = vld [vmem:[%s3 + $0x8c] sm:$0xf]
      %v483 = vld [vmem:[%s3 + $0x90] sm:$0xf]
      %v484 = vld [vmem:[%s3 + $0x94] sm:$0xf]
      %v485 = vld [vmem:[%s3 + $0x98] sm:$0xf]
      %v486 = vld [vmem:[%s3 + $0x9c] sm:$0xf]
      %v487 = vld [vmem:[%s3 + $0xa0] sm:$0xf]
      %v488 = vld [vmem:[%s3 + $0xa4] sm:$0xf]
      %v489 = vld [vmem:[%s3 + $0xa8] sm:$0xf]
      %v490 = vld [vmem:[%s3 + $0xac] sm:$0xf]
      %v491 = vld [vmem:[%s3 + $0xb0] sm:$0xf]
      %v492 = vld [vmem:[%s3 + $0xb4] sm:$0xf]
      %v493 = vld [vmem:[%s3 + $0xb8] sm:$0xf]
      %v494 = vld [vmem:[%s3 + $0xbc] sm:$0xf]
      %v495 = vld [vmem:[%s3 + $0xc0] sm:$0xf]
      %v496 = vld [vmem:[%s3 + $0xc4] sm:$0xf]
      %v497 = vld [vmem:[%s3 + $0xc8] sm:$0xf]
      %v498 = vld [vmem:[%s3 + $0xcc] sm:$0xf]
      %v499 = vld [vmem:[%s3 + $0xd0] sm:$0xf]
      %v500 = vld [vmem:[%s3 + $0xd4] sm:$0xf]
      %v501 = vld [vmem:[%s3 + $0xd8] sm:$0xf]
      %v502 = vld [vmem:[%s3 + $0xdc] sm:$0xf]
      %v503 = vld [vmem:[%s3 + $0xe0] sm:$0xf]
      %v504 = vld [vmem:[%s3 + $0xe4] sm:$0xf]
      %v505 = vld [vmem:[%s3 + $0xe8] sm:$0xf]
      %v506 = vld [vmem:[%s3 + $0xec] sm:$0xf]
      %v507 = vld [vmem:[%s3 + $0xf0] sm:$0xf]
      %v508 = vld [vmem:[%s3 + $0xf4] sm:$0xf]
      %v509 = vld [vmem:[%s3 + $0xf8] sm:$0xf]
      %v510 = vld [vmem:[%s3 + $0xfc] sm:$0xf]
      %v511 = vld [vmem:[%s4] sm:$0x1]
      %v512 = vld [vmem:[%s5] sm:$0xff]
      %v513 = vld [vmem:[%s5 + $0x8] sm:$0xff]
      %v514 = vld [vmem:[%s5 + $0x10] sm:$0xff]
      %v515 = vld [vmem:[%s5 + $0x18] sm:$0xff]
      %v516 = vld [vmem:[%s5 + $0x20] sm:$0xff]
      %v517 = vld [vmem:[%s5 + $0x28] sm:$0xff]
      %v518 = vld [vmem:[%s5 + $0x30] sm:$0xff]
      %v519 = vld [vmem:[%s5 + $0x38] sm:$0xff]
      %v520 = vld [vmem:[%s5 + $0x40] sm:$0xff]
      %v521 = vld [vmem:[%s5 + $0x48] sm:$0xff]
      %v522 = vld [vmem:[%s5 + $0x50] sm:$0xff]
      %v523 = vld [vmem:[%s5 + $0x58] sm:$0xff]
      %v524 = vld [vmem:[%s5 + $0x60] sm:$0xff]
      %v525 = vld [vmem:[%s5 + $0x68] sm:$0xff]
      %v526 = vld [vmem:[%s5 + $0x70] sm:$0xff]
      %v527 = vld [vmem:[%s5 + $0x78] sm:$0xff]
      %v528 = vld [vmem:[%s5 + $0x80] sm:$0xff]
      %v529 = vld [vmem:[%s5 + $0x88] sm:$0xff]
      %v530 = vld [vmem:[%s5 + $0x90] sm:$0xff]
      %v531 = vld [vmem:[%s5 + $0x98] sm:$0xff]
      %v532 = vld [vmem:[%s5 + $0xa0] sm:$0xff]
      %v533 = vld [vmem:[%s5 + $0xa8] sm:$0xff]
      %v534 = vld [vmem:[%s5 + $0xb0] sm:$0xff]
      %v535 = vld [vmem:[%s5 + $0xb8] sm:$0xff]
      %v536 = vld [vmem:[%s5 + $0xc0] sm:$0xff]
      %v537 = vld [vmem:[%s5 + $0xc8] sm:$0xff]
      %v538 = vld [vmem:[%s5 + $0xd0] sm:$0xff]
      %v539 = vld [vmem:[%s5 + $0xd8] sm:$0xff]
      %v540 = vld [vmem:[%s5 + $0xe0] sm:$0xff]
      %v541 = vld [vmem:[%s5 + $0xe8] sm:$0xff]
      %v542 = vld [vmem:[%s5 + $0xf0] sm:$0xff]
      %v543 = vld [vmem:[%s5 + $0xf8] sm:$0xff]
      %v544 = vld [vmem:[%s6] sm:$0xf]
      %v545 = vld [vmem:[%s7] sm:$0xff]
      %v546 = vld [vmem:[%s7 + $0x8] sm:$0xff]
      %v547 = vld [vmem:[%s7 + $0x10] sm:$0xff]
      %v548 = vld [vmem:[%s7 + $0x18] sm:$0xff]
      %v549 = vld [vmem:[%s7 + $0x20] sm:$0xff]
      %v550 = vld [vmem:[%s7 + $0x28] sm:$0xff]
      %v551 = vld [vmem:[%s7 + $0x30] sm:$0xff]
      %v552 = vld [vmem:[%s7 + $0x38] sm:$0xff]
      %v553 = vld [vmem:[%s7 + $0x40] sm:$0xff]
      %v554 = vld [vmem:[%s7 + $0x48] sm:$0xff]
      %v555 = vld [vmem:[%s7 + $0x50] sm:$0xff]
      %v556 = vld [vmem:[%s7 + $0x58] sm:$0xff]
      %v557 = vld [vmem:[%s7 + $0x60] sm:$0xff]
      %v558 = vld [vmem:[%s7 + $0x68] sm:$0xff]
      %v559 = vld [vmem:[%s7 + $0x70] sm:$0xff]
      %v560 = vld [vmem:[%s7 + $0x78] sm:$0xff]
      %v561 = vld [vmem:[%s7 + $0x80] sm:$0xff]
      %v562 = vld [vmem:[%s7 + $0x88] sm:$0xff]
      %v563 = vld [vmem:[%s7 + $0x90] sm:$0xff]
      %v564 = vld [vmem:[%s7 + $0x98] sm:$0xff]
      %v565 = vld [vmem:[%s7 + $0xa0] sm:$0xff]
      %v566 = vld [vmem:[%s7 + $0xa8] sm:$0xff]
      %v567 = vld [vmem:[%s7 + $0xb0] sm:$0xff]
      %v568 = vld [vmem:[%s7 + $0xb8] sm:$0xff]
      %v569 = vld [vmem:[%s7 + $0xc0] sm:$0xff]
      %v570 = vld [vmem:[%s7 + $0xc8] sm:$0xff]
      %v571 = vld [vmem:[%s7 + $0xd0] sm:$0xff]
      %v572 = vld [vmem:[%s7 + $0xd8] sm:$0xff]
      %v573 = vld [vmem:[%s7 + $0xe0] sm:$0xff]
      %v574 = vld [vmem:[%s7 + $0xe8] sm:$0xff]
      %v575 = vld [vmem:[%s7 + $0xf0] sm:$0xff]
      %v576 = vld [vmem:[%s7 + $0xf8] sm:$0xff]
      %v577 = vld [vmem:[%s7 + $0x100] sm:$0xff]
      %v578 = vld [vmem:[%s7 + $0x108] sm:$0xff]
      %v579 = vld [vmem:[%s7 + $0x110] sm:$0xff]
      %v580 = vld [vmem:[%s7 + $0x118] sm:$0xff]
      %v581 = vld [vmem:[%s7 + $0x120] sm:$0xff]
      %v582 = vld [vmem:[%s7 + $0x128] sm:$0xff]
      %v583 = vld [vmem:[%s7 + $0x130] sm:$0xff]
      %v584 = vld [vmem:[%s7 + $0x138] sm:$0xff]
      %v585 = vld [vmem:[%s7 + $0x140] sm:$0xff]
      %v586 = vld [vmem:[%s7 + $0x148] sm:$0xff]
      %v587 = vld [vmem:[%s7 + $0x150] sm:$0xff]
      %v588 = vld [vmem:[%s7 + $0x158] sm:$0xff]
      %v589 = vld [vmem:[%s7 + $0x160] sm:$0xff]
      %v590 = vld [vmem:[%s7 + $0x168] sm:$0xff]
      %v591 = vld [vmem:[%s7 + $0x170] sm:$0xff]
      %v592 = vld [vmem:[%s7 + $0x178] sm:$0xff]
      %v593 = vld [vmem:[%s7 + $0x180] sm:$0xff]
      %v594 = vld [vmem:[%s7 + $0x188] sm:$0xff]
      %v595 = vld [vmem:[%s7 + $0x190] sm:$0xff]
      %v596 = vld [vmem:[%s7 + $0x198] sm:$0xff]
      %v597 = vld [vmem:[%s7 + $0x1a0] sm:$0xff]
      %v598 = vld [vmem:[%s7 + $0x1a8] sm:$0xff]
      %v599 = vld [vmem:[%s7 + $0x1b0] sm:$0xff]
      %v600 = vld [vmem:[%s7 + $0x1b8] sm:$0xff]
      %v601 = vld [vmem:[%s7 + $0x1c0] sm:$0xff]
      %v602 = vld [vmem:[%s7 + $0x1c8] sm:$0xff]
      %v603 = vld [vmem:[%s7 + $0x1d0] sm:$0xff]
      %v604 = vld [vmem:[%s7 + $0x1d8] sm:$0xff]
      %v605 = vld [vmem:[%s7 + $0x1e0] sm:$0xff]
      %v606 = vld [vmem:[%s7 + $0x1e8] sm:$0xff]
      %v607 = vld [vmem:[%s7 + $0x1f0] sm:$0xff]
      %v608 = vld [vmem:[%s7 + $0x1f8] sm:$0xff]
      %v609 = vld [vmem:[%s8] sm:$0x3]
      %v610 = vld [vmem:[%s367] sm:$0xff]
      %v611 = vld [vmem:[%s367 + $0x8] sm:$0xff]
      %v612 = vld [vmem:[%s367 + $0x10] sm:$0xff]
      %v613 = vld [vmem:[%s367 + $0x18] sm:$0xff]
      %v614 = vld [vmem:[%s367 + $0x20] sm:$0xff]
      %v615 = vld [vmem:[%s367 + $0x28] sm:$0xff]
      %v616 = vld [vmem:[%s367 + $0x30] sm:$0xff]
      %v617 = vld [vmem:[%s367 + $0x38] sm:$0xff]
      %v618 = vld [vmem:[%s367 + $0x40] sm:$0xff]
      %v619 = vld [vmem:[%s367 + $0x48] sm:$0xff]
      %v620 = vld [vmem:[%s367 + $0x50] sm:$0xff]
      %v621 = vld [vmem:[%s367 + $0x58] sm:$0xff]
      %v622 = vld [vmem:[%s367 + $0x60] sm:$0xff]
      %v623 = vld [vmem:[%s367 + $0x68] sm:$0xff]
      %v624 = vld [vmem:[%s367 + $0x70] sm:$0xff]
      %v625 = vld [vmem:[%s367 + $0x78] sm:$0xff]
      %v626 = vld [vmem:[%s367 + $0x80] sm:$0xff]
      %v627 = vld [vmem:[%s367 + $0x88] sm:$0xff]
      %v628 = vld [vmem:[%s367 + $0x90] sm:$0xff]
      %v629 = vld [vmem:[%s367 + $0x98] sm:$0xff]
      %v630 = vld [vmem:[%s367 + $0xa0] sm:$0xff]
      %v631 = vld [vmem:[%s367 + $0xa8] sm:$0xff]
      %v632 = vld [vmem:[%s367 + $0xb0] sm:$0xff]
      %v633 = vld [vmem:[%s367 + $0xb8] sm:$0xff]
      %v634 = vld [vmem:[%s367 + $0xc0] sm:$0xff]
      %v635 = vld [vmem:[%s367 + $0xc8] sm:$0xff]
      %v636 = vld [vmem:[%s367 + $0xd0] sm:$0xff]
      %v637 = vld [vmem:[%s367 + $0xd8] sm:$0xff]
      %v638 = vld [vmem:[%s367 + $0xe0] sm:$0xff]
      %v639 = vld [vmem:[%s367 + $0xe8] sm:$0xff]
      %v640 = vld [vmem:[%s367 + $0xf0] sm:$0xff]
      %v641 = vld [vmem:[%s367 + $0xf8] sm:$0xff]
      %v642 = vpack.c.bf16 %v612, %v610
      %v643 = vpack.c.bf16 %v613, %v611
      %v644 = vpack.c.bf16 %v616, %v614
      %v645 = vpack.c.bf16 %v617, %v615
      %v646 = vpack.c.bf16 %v620, %v618
      %v647 = vpack.c.bf16 %v621, %v619
      %v648 = vpack.c.bf16 %v624, %v622
      %v649 = vpack.c.bf16 %v625, %v623
      %v650 = vpack.c.bf16 %v628, %v626
      %v651 = vpack.c.bf16 %v629, %v627
      %v652 = vpack.c.bf16 %v632, %v630
      %v653 = vpack.c.bf16 %v633, %v631
      %v654 = vpack.c.bf16 %v636, %v634
      %v655 = vpack.c.bf16 %v637, %v635
      %v656 = vpack.c.bf16 %v640, %v638
      %v657 = vpack.c.bf16 %v641, %v639
      %v659 = vperm.slane %v446, 0
      %v660 = vperm.slane %v446, 1
      %v661 = vperm.slane %v446, 2
      %v662 = vperm.slane %v446, 3
      %v731 = vunpack.c.l.b16 %v382
      %v732 = vunpack.c.h.b16 %v382
      %v733 = vunpack.c.l.b16 %v383
      %v734 = vunpack.c.h.b16 %v383
      %v735 = vunpack.c.l.b16 %v384
      %v736 = vunpack.c.h.b16 %v384
      %v737 = vunpack.c.l.b16 %v385
      %v738 = vunpack.c.h.b16 %v385
      %v739 = vunpack.c.l.b16 %v386
      %v740 = vunpack.c.h.b16 %v386
      %v741 = vunpack.c.l.b16 %v387
      %v742 = vunpack.c.h.b16 %v387
      %v743 = vunpack.c.l.b16 %v388
      %v744 = vunpack.c.h.b16 %v388
      %v745 = vunpack.c.l.b16 %v389
      %v746 = vunpack.c.h.b16 %v389
      %v747 = vunpack.c.l.b16 %v390
      %v748 = vunpack.c.h.b16 %v390
      %v749 = vunpack.c.l.b16 %v391
      %v750 = vunpack.c.h.b16 %v391
      %v751 = vunpack.c.l.b16 %v392
      %v752 = vunpack.c.h.b16 %v392
      %v753 = vunpack.c.l.b16 %v393
      %v754 = vunpack.c.h.b16 %v393
      %v755 = vunpack.c.l.b16 %v394
      %v756 = vunpack.c.h.b16 %v394
      %v757 = vunpack.c.l.b16 %v395
      %v758 = vunpack.c.h.b16 %v395
      %v759 = vunpack.c.l.b16 %v396
      %v760 = vunpack.c.h.b16 %v396
      %v761 = vunpack.c.l.b16 %v397
      %v762 = vunpack.c.h.b16 %v397
      %v763 = vunpack.c.l.b16 %v398
      %v764 = vunpack.c.h.b16 %v398
      %v765 = vunpack.c.l.b16 %v399
      %v766 = vunpack.c.h.b16 %v399
      %v767 = vunpack.c.l.b16 %v400
      %v768 = vunpack.c.h.b16 %v400
      %v769 = vunpack.c.l.b16 %v401
      %v770 = vunpack.c.h.b16 %v401
      %v771 = vunpack.c.l.b16 %v402
      %v772 = vunpack.c.h.b16 %v402
      %v773 = vunpack.c.l.b16 %v403
      %v774 = vunpack.c.h.b16 %v403
      %v775 = vunpack.c.l.b16 %v404
      %v776 = vunpack.c.h.b16 %v404
      %v777 = vunpack.c.l.b16 %v405
      %v778 = vunpack.c.h.b16 %v405
      %v779 = vunpack.c.l.b16 %v406
      %v780 = vunpack.c.h.b16 %v406
      %v781 = vunpack.c.l.b16 %v407
      %v782 = vunpack.c.h.b16 %v407
      %v783 = vunpack.c.l.b16 %v408
      %v784 = vunpack.c.h.b16 %v408
      %v785 = vunpack.c.l.b16 %v409
      %v786 = vunpack.c.h.b16 %v409
      %v787 = vunpack.c.l.b16 %v410
      %v788 = vunpack.c.h.b16 %v410
      %v789 = vunpack.c.l.b16 %v411
      %v790 = vunpack.c.h.b16 %v411
      %v791 = vunpack.c.l.b16 %v412
      %v792 = vunpack.c.h.b16 %v412
      %v793 = vunpack.c.l.b16 %v413
      %v794 = vunpack.c.h.b16 %v413
      %v795 = vunpack.c.l.b16 %v414
      %v796 = vunpack.c.h.b16 %v414
      %v797 = vunpack.c.l.b16 %v415
      %v798 = vunpack.c.h.b16 %v415
      %v799 = vunpack.c.l.b16 %v416
      %v800 = vunpack.c.h.b16 %v416
      %v801 = vunpack.c.l.b16 %v417
      %v802 = vunpack.c.h.b16 %v417
      %v803 = vunpack.c.l.b16 %v418
      %v804 = vunpack.c.h.b16 %v418
      %v805 = vunpack.c.l.b16 %v419
      %v806 = vunpack.c.h.b16 %v419
      %v807 = vunpack.c.l.b16 %v420
      %v808 = vunpack.c.h.b16 %v420
      %v809 = vunpack.c.l.b16 %v421
      %v810 = vunpack.c.h.b16 %v421
      %v811 = vunpack.c.l.b16 %v422
      %v812 = vunpack.c.h.b16 %v422
      %v813 = vunpack.c.l.b16 %v423
      %v814 = vunpack.c.h.b16 %v423
      %v815 = vunpack.c.l.b16 %v424
      %v816 = vunpack.c.h.b16 %v424
      %v817 = vunpack.c.l.b16 %v425
      %v818 = vunpack.c.h.b16 %v425
      %v819 = vunpack.c.l.b16 %v426
      %v820 = vunpack.c.h.b16 %v426
      %v821 = vunpack.c.l.b16 %v427
      %v822 = vunpack.c.h.b16 %v427
      %v823 = vunpack.c.l.b16 %v428
      %v824 = vunpack.c.h.b16 %v428
      %v825 = vunpack.c.l.b16 %v429
      %v826 = vunpack.c.h.b16 %v429
      %v827 = vunpack.c.l.b16 %v430
      %v828 = vunpack.c.h.b16 %v430
      %v829 = vunpack.c.l.b16 %v431
      %v830 = vunpack.c.h.b16 %v431
      %v831 = vunpack.c.l.b16 %v432
      %v832 = vunpack.c.h.b16 %v432
      %v833 = vunpack.c.l.b16 %v433
      %v834 = vunpack.c.h.b16 %v433
      %v835 = vunpack.c.l.b16 %v434
      %v836 = vunpack.c.h.b16 %v434
      %v837 = vunpack.c.l.b16 %v435
      %v838 = vunpack.c.h.b16 %v435
      %v839 = vunpack.c.l.b16 %v436
      %v840 = vunpack.c.h.b16 %v436
      %v841 = vunpack.c.l.b16 %v437
      %v842 = vunpack.c.h.b16 %v437
      %v843 = vunpack.c.l.b16 %v438
      %v844 = vunpack.c.h.b16 %v438
      %v845 = vunpack.c.l.b16 %v439
      %v846 = vunpack.c.h.b16 %v439
      %v847 = vunpack.c.l.b16 %v440
      %v848 = vunpack.c.h.b16 %v440
      %v849 = vunpack.c.l.b16 %v441
      %v850 = vunpack.c.h.b16 %v441
      %v851 = vunpack.c.l.b16 %v442
      %v852 = vunpack.c.h.b16 %v442
      %v853 = vunpack.c.l.b16 %v443
      %v854 = vunpack.c.h.b16 %v443
      %v855 = vunpack.c.l.b16 %v444
      %v856 = vunpack.c.h.b16 %v444
      %v857 = vunpack.c.l.b16 %v445
      %v858 = vunpack.c.h.b16 %v445
      %v859 = vpack.c.b16 %v735, %v731
      %v860 = vpack.c.b16 %v736, %v732
      %v861 = vpack.c.b16 %v737, %v733
      %v862 = vpack.c.b16 %v738, %v734
      %v863 = vpack.c.b16 %v743, %v739
      %v864 = vpack.c.b16 %v744, %v740
      %v865 = vpack.c.b16 %v745, %v741
      %v866 = vpack.c.b16 %v746, %v742
      %v867 = vpack.c.b16 %v751, %v747
      %v868 = vpack.c.b16 %v752, %v748
      %v869 = vpack.c.b16 %v753, %v749
      %v870 = vpack.c.b16 %v754, %v750
      %v871 = vpack.c.b16 %v759, %v755
      %v872 = vpack.c.b16 %v760, %v756
      %v873 = vpack.c.b16 %v761, %v757
      %v874 = vpack.c.b16 %v762, %v758
      %v875 = vpack.c.b16 %v767, %v763
      %v876 = vpack.c.b16 %v768, %v764
      %v877 = vpack.c.b16 %v769, %v765
      %v878 = vpack.c.b16 %v770, %v766
      %v879 = vpack.c.b16 %v775, %v771
      %v880 = vpack.c.b16 %v776, %v772
      %v881 = vpack.c.b16 %v777, %v773
      %v882 = vpack.c.b16 %v778, %v774
      %v883 = vpack.c.b16 %v783, %v779
      %v884 = vpack.c.b16 %v784, %v780
      %v885 = vpack.c.b16 %v785, %v781
      %v886 = vpack.c.b16 %v786, %v782
      %v887 = vpack.c.b16 %v791, %v787
      %v888 = vpack.c.b16 %v792, %v788
      %v889 = vpack.c.b16 %v793, %v789
      %v890 = vpack.c.b16 %v794, %v790
      %v891 = vpack.c.b16 %v799, %v795
      %v892 = vpack.c.b16 %v800, %v796
      %v893 = vpack.c.b16 %v801, %v797
      %v894 = vpack.c.b16 %v802, %v798
      %v895 = vpack.c.b16 %v807, %v803
      %v896 = vpack.c.b16 %v808, %v804
      %v897 = vpack.c.b16 %v809, %v805
      %v898 = vpack.c.b16 %v810, %v806
      %v899 = vpack.c.b16 %v815, %v811
      %v900 = vpack.c.b16 %v816, %v812
      %v901 = vpack.c.b16 %v817, %v813
      %v902 = vpack.c.b16 %v818, %v814
      %v903 = vpack.c.b16 %v823, %v819
      %v904 = vpack.c.b16 %v824, %v820
      %v905 = vpack.c.b16 %v825, %v821
      %v906 = vpack.c.b16 %v826, %v822
      %v907 = vpack.c.b16 %v831, %v827
      %v908 = vpack.c.b16 %v832, %v828
      %v909 = vpack.c.b16 %v833, %v829
      %v910 = vpack.c.b16 %v834, %v830
      %v911 = vpack.c.b16 %v839, %v835
      %v912 = vpack.c.b16 %v840, %v836
      %v913 = vpack.c.b16 %v841, %v837
      %v914 = vpack.c.b16 %v842, %v838
      %v915 = vpack.c.b16 %v847, %v843
      %v916 = vpack.c.b16 %v848, %v844
      %v917 = vpack.c.b16 %v849, %v845
      %v918 = vpack.c.b16 %v850, %v846
      %v919 = vpack.c.b16 %v855, %v851
      %v920 = vpack.c.b16 %v856, %v852
      %v921 = vpack.c.b16 %v857, %v853
      %v922 = vpack.c.b16 %v858, %v854
      %987 = vmatpush.bf16.msra.mxu0 %v887
      %988 = vmatpush.bf16.msra.mxu0 %v883
      %989 = vmatpush.bf16.msra.mxu0 %v879
      %990 = vmatpush.bf16.msra.mxu0 %v875
      %991 = vmatpush.bf16.msra.mxu0 %v871
      %992 = vmatpush.bf16.msra.mxu0 %v867
      %993 = vmatpush.bf16.msra.mxu0 %v863
      %994 = vmatpush.bf16.msra.mxu0 %v859
      %995 = vmatmul.bf16.gmra.mxu0 %v642
      %v996 = vpop.f32.mrf.mxu0
      %v997 = vadd.f32 %v659, %v996
      %v998 = vpop.f32.mrf.mxu0
      %v999 = vadd.f32 %v659, %v998
      %1000 = vmatmul.bf16.gmra.mxu0 %v644
      %v1001 = vpop.f32.mrf.mxu0
      %v1002 = vadd.f32 %v659, %v1001
      %v1003 = vpop.f32.mrf.mxu0
      %v1004 = vadd.f32 %v659, %v1003
      %1005 = vmatmul.bf16.gmra.mxu0 %v646
      %v1006 = vpop.f32.mrf.mxu0
      %v1007 = vadd.f32 %v659, %v1006
      %v1008 = vpop.f32.mrf.mxu0
      %v1009 = vadd.f32 %v659, %v1008
      %1010 = vmatmul.bf16.gmra.mxu0 %v648
      %v1011 = vpop.f32.mrf.mxu0
      %v1012 = vadd.f32 %v659, %v1011
      %v1013 = vpop.f32.mrf.mxu0
      %v1014 = vadd.f32 %v659, %v1013
      %1015 = vmatmul.bf16.gmra.mxu0 %v650
      %v1016 = vpop.f32.mrf.mxu0
      %v1017 = vadd.f32 %v659, %v1016
      %v1018 = vpop.f32.mrf.mxu0
      %v1019 = vadd.f32 %v659, %v1018
      %1020 = vmatmul.bf16.gmra.mxu0 %v652
      %v1021 = vpop.f32.mrf.mxu0
      %v1022 = vadd.f32 %v659, %v1021
      %v1023 = vpop.f32.mrf.mxu0
      %v1024 = vadd.f32 %v659, %v1023
      %1025 = vmatmul.bf16.gmra.mxu0 %v654
      %v1026 = vpop.f32.mrf.mxu0
      %v1027 = vadd.f32 %v659, %v1026
      %v1028 = vpop.f32.mrf.mxu0
      %v1029 = vadd.f32 %v659, %v1028
      %1030 = vmatmul.bf16.gmra.mxu0 %v656
      %v1031 = vpop.f32.mrf.mxu0
      %v1032 = vadd.f32 %v659, %v1031
      %v1033 = vpop.f32.mrf.mxu0
      %v1034 = vadd.f32 %v659, %v1033
      %1035 = vdwg.mxu0
      %1036 = vmatpush.bf16.msra.mxu0 %v919
      %1037 = vmatpush.bf16.msra.mxu0 %v915
      %1038 = vmatpush.bf16.msra.mxu0 %v911
      %1039 = vmatpush.bf16.msra.mxu0 %v907
      %1040 = vmatpush.bf16.msra.mxu0 %v903
      %1041 = vmatpush.bf16.msra.mxu0 %v899
      %1042 = vmatpush.bf16.msra.mxu0 %v895
      %1043 = vmatpush.bf16.msra.mxu0 %v891
      %1044 = vmatmul.bf16.gmra.mxu0 %v643
      %v1045 = vpop.f32.mrf.mxu0
      %v1046 = vadd.f32 %v997, %v1045
      %v1047 = vpop.f32.mrf.mxu0
      %v1048 = vadd.f32 %v999, %v1047
      %1049 = vmatmul.bf16.gmra.mxu0 %v645
      %v1050 = vpop.f32.mrf.mxu0
      %v1051 = vadd.f32 %v1002, %v1050
      %v1052 = vpop.f32.mrf.mxu0
      %v1053 = vadd.f32 %v1004, %v1052
      %1054 = vmatmul.bf16.gmra.mxu0 %v647
      %v1055 = vpop.f32.mrf.mxu0
      %v1056 = vadd.f32 %v1007, %v1055
      %v1057 = vpop.f32.mrf.mxu0
      %v1058 = vadd.f32 %v1009, %v1057
      %1059 = vmatmul.bf16.gmra.mxu0 %v649
      %v1060 = vpop.f32.mrf.mxu0
      %v1061 = vadd.f32 %v1012, %v1060
      %v1062 = vpop.f32.mrf.mxu0
      %v1063 = vadd.f32 %v1014, %v1062
      %1064 = vmatmul.bf16.gmra.mxu0 %v651
      %v1065 = vpop.f32.mrf.mxu0
      %v1066 = vadd.f32 %v1017, %v1065
      %v1067 = vpop.f32.mrf.mxu0
      %v1068 = vadd.f32 %v1019, %v1067
      %1069 = vmatmul.bf16.gmra.mxu0 %v653
      %v1070 = vpop.f32.mrf.mxu0
      %v1071 = vadd.f32 %v1022, %v1070
      %v1072 = vpop.f32.mrf.mxu0
      %v1073 = vadd.f32 %v1024, %v1072
      %1074 = vmatmul.bf16.gmra.mxu0 %v655
      %v1075 = vpop.f32.mrf.mxu0
      %v1076 = vadd.f32 %v1027, %v1075
      %v1077 = vpop.f32.mrf.mxu0
      %v1078 = vadd.f32 %v1029, %v1077
      %1079 = vmatmul.bf16.gmra.mxu0 %v657
      %v1080 = vpop.f32.mrf.mxu0
      %v1081 = vadd.f32 %v1032, %v1080
      %v1082 = vpop.f32.mrf.mxu0
      %v1083 = vadd.f32 %v1034, %v1082
      %1084 = vdwg.mxu0
      %1085 = vmatpush.bf16.msra.mxu0 %v888
      %1086 = vmatpush.bf16.msra.mxu0 %v884
      %1087 = vmatpush.bf16.msra.mxu0 %v880
      %1088 = vmatpush.bf16.msra.mxu0 %v876
      %1089 = vmatpush.bf16.msra.mxu0 %v872
      %1090 = vmatpush.bf16.msra.mxu0 %v868
      %1091 = vmatpush.bf16.msra.mxu0 %v864
      %1092 = vmatpush.bf16.msra.mxu0 %v860
      %1093 = vmatmul.bf16.gmra.mxu0 %v642
      %v1094 = vpop.f32.mrf.mxu0
      %v1095 = vadd.f32 %v660, %v1094
      %v1096 = vpop.f32.mrf.mxu0
      %v1097 = vadd.f32 %v660, %v1096
      %1098 = vmatmul.bf16.gmra.mxu0 %v644
      %v1099 = vpop.f32.mrf.mxu0
      %v1100 = vadd.f32 %v660, %v1099
      %v1101 = vpop.f32.mrf.mxu0
      %v1102 = vadd.f32 %v660, %v1101
      %1103 = vmatmul.bf16.gmra.mxu0 %v646
      %v1104 = vpop.f32.mrf.mxu0
      %v1105 = vadd.f32 %v660, %v1104
      %v1106 = vpop.f32.mrf.mxu0
      %v1107 = vadd.f32 %v660, %v1106
      %1108 = vmatmul.bf16.gmra.mxu0 %v648
      %v1109 = vpop.f32.mrf.mxu0
      %v1110 = vadd.f32 %v660, %v1109
      %v1111 = vpop.f32.mrf.mxu0
      %v1112 = vadd.f32 %v660, %v1111
      %1113 = vmatmul.bf16.gmra.mxu0 %v650
      %v1114 = vpop.f32.mrf.mxu0
      %v1115 = vadd.f32 %v660, %v1114
      %v1116 = vpop.f32.mrf.mxu0
      %v1117 = vadd.f32 %v660, %v1116
      %1118 = vmatmul.bf16.gmra.mxu0 %v652
      %v1119 = vpop.f32.mrf.mxu0
      %v1120 = vadd.f32 %v660, %v1119
      %v1121 = vpop.f32.mrf.mxu0
      %v1122 = vadd.f32 %v660, %v1121
      %1123 = vmatmul.bf16.gmra.mxu0 %v654
      %v1124 = vpop.f32.mrf.mxu0
      %v1125 = vadd.f32 %v660, %v1124
      %v1126 = vpop.f32.mrf.mxu0
      %v1127 = vadd.f32 %v660, %v1126
      %1128 = vmatmul.bf16.gmra.mxu0 %v656
      %v1129 = vpop.f32.mrf.mxu0
      %v1130 = vadd.f32 %v660, %v1129
      %v1131 = vpop.f32.mrf.mxu0
      %v1132 = vadd.f32 %v660, %v1131
      %1133 = vdwg.mxu0
      %1134 = vmatpush.bf16.msra.mxu0 %v920
      %1135 = vmatpush.bf16.msra.mxu0 %v916
      %1136 = vmatpush.bf16.msra.mxu0 %v912
      %1137 = vmatpush.bf16.msra.mxu0 %v908
      %1138 = vmatpush.bf16.msra.mxu0 %v904
      %1139 = vmatpush.bf16.msra.mxu0 %v900
      %1140 = vmatpush.bf16.msra.mxu0 %v896
      %1141 = vmatpush.bf16.msra.mxu0 %v892
      %1142 = vmatmul.bf16.gmra.mxu0 %v643
      %v1143 = vpop.f32.mrf.mxu0
      %v1144 = vadd.f32 %v1095, %v1143
      %v1145 = vpop.f32.mrf.mxu0
      %v1146 = vadd.f32 %v1097, %v1145
      %1147 = vmatmul.bf16.gmra.mxu0 %v645
      %v1148 = vpop.f32.mrf.mxu0
      %v1149 = vadd.f32 %v1100, %v1148
      %v1150 = vpop.f32.mrf.mxu0
      %v1151 = vadd.f32 %v1102, %v1150
      %1152 = vmatmul.bf16.gmra.mxu0 %v647
      %v1153 = vpop.f32.mrf.mxu0
      %v1154 = vadd.f32 %v1105, %v1153
      %v1155 = vpop.f32.mrf.mxu0
      %v1156 = vadd.f32 %v1107, %v1155
      %1157 = vmatmul.bf16.gmra.mxu0 %v649
      %v1158 = vpop.f32.mrf.mxu0
      %v1159 = vadd.f32 %v1110, %v1158
      %v1160 = vpop.f32.mrf.mxu0
      %v1161 = vadd.f32 %v1112, %v1160
      %1162 = vmatmul.bf16.gmra.mxu0 %v651
      %v1163 = vpop.f32.mrf.mxu0
      %v1164 = vadd.f32 %v1115, %v1163
      %v1165 = vpop.f32.mrf.mxu0
      %v1166 = vadd.f32 %v1117, %v1165
      %1167 = vmatmul.bf16.gmra.mxu0 %v653
      %v1168 = vpop.f32.mrf.mxu0
      %v1169 = vadd.f32 %v1120, %v1168
      %v1170 = vpop.f32.mrf.mxu0
      %v1171 = vadd.f32 %v1122, %v1170
      %1172 = vmatmul.bf16.gmra.mxu0 %v655
      %v1173 = vpop.f32.mrf.mxu0
      %v1174 = vadd.f32 %v1125, %v1173
      %v1175 = vpop.f32.mrf.mxu0
      %v1176 = vadd.f32 %v1127, %v1175
      %1177 = vmatmul.bf16.gmra.mxu0 %v657
      %v1178 = vpop.f32.mrf.mxu0
      %v1179 = vadd.f32 %v1130, %v1178
      %v1180 = vpop.f32.mrf.mxu0
      %v1181 = vadd.f32 %v1132, %v1180
      %1182 = vdwg.mxu0
      %1183 = vmatpush.bf16.msra.mxu0 %v889
      %1184 = vmatpush.bf16.msra.mxu0 %v885
      %1185 = vmatpush.bf16.msra.mxu0 %v881
      %1186 = vmatpush.bf16.msra.mxu0 %v877
      %1187 = vmatpush.bf16.msra.mxu0 %v873
      %1188 = vmatpush.bf16.msra.mxu0 %v869
      %1189 = vmatpush.bf16.msra.mxu0 %v865
      %1190 = vmatpush.bf16.msra.mxu0 %v861
      %1191 = vmatmul.bf16.gmra.mxu0 %v642
      %v1192 = vpop.f32.mrf.mxu0
      %v1193 = vadd.f32 %v661, %v1192
      %v1194 = vpop.f32.mrf.mxu0
      %v1195 = vadd.f32 %v661, %v1194
      %1196 = vmatmul.bf16.gmra.mxu0 %v644
      %v1197 = vpop.f32.mrf.mxu0
      %v1198 = vadd.f32 %v661, %v1197
      %v1199 = vpop.f32.mrf.mxu0
      %v1200 = vadd.f32 %v661, %v1199
      %1201 = vmatmul.bf16.gmra.mxu0 %v646
      %v1202 = vpop.f32.mrf.mxu0
      %v1203 = vadd.f32 %v661, %v1202
      %v1204 = vpop.f32.mrf.mxu0
      %v1205 = vadd.f32 %v661, %v1204
      %1206 = vmatmul.bf16.gmra.mxu0 %v648
      %v1207 = vpop.f32.mrf.mxu0
      %v1208 = vadd.f32 %v661, %v1207
      %v1209 = vpop.f32.mrf.mxu0
      %v1210 = vadd.f32 %v661, %v1209
      %1211 = vmatmul.bf16.gmra.mxu0 %v650
      %v1212 = vpop.f32.mrf.mxu0
      %v1213 = vadd.f32 %v661, %v1212
      %v1214 = vpop.f32.mrf.mxu0
      %v1215 = vadd.f32 %v661, %v1214
      %1216 = vmatmul.bf16.gmra.mxu0 %v652
      %v1217 = vpop.f32.mrf.mxu0
      %v1218 = vadd.f32 %v661, %v1217
      %v1219 = vpop.f32.mrf.mxu0
      %v1220 = vadd.f32 %v661, %v1219
      %1221 = vmatmul.bf16.gmra.mxu0 %v654
      %v1222 = vpop.f32.mrf.mxu0
      %v1223 = vadd.f32 %v661, %v1222
      %v1224 = vpop.f32.mrf.mxu0
      %v1225 = vadd.f32 %v661, %v1224
      %1226 = vmatmul.bf16.gmra.mxu0 %v656
      %v1227 = vpop.f32.mrf.mxu0
      %v1228 = vadd.f32 %v661, %v1227
      %v1229 = vpop.f32.mrf.mxu0
      %v1230 = vadd.f32 %v661, %v1229
      %1231 = vdwg.mxu0
      %1232 = vmatpush.bf16.msra.mxu0 %v921
      %1233 = vmatpush.bf16.msra.mxu0 %v917
      %1234 = vmatpush.bf16.msra.mxu0 %v913
      %1235 = vmatpush.bf16.msra.mxu0 %v909
      %1236 = vmatpush.bf16.msra.mxu0 %v905
      %1237 = vmatpush.bf16.msra.mxu0 %v901
      %1238 = vmatpush.bf16.msra.mxu0 %v897
      %1239 = vmatpush.bf16.msra.mxu0 %v893
      %1240 = vmatmul.bf16.gmra.mxu0 %v643
      %v1241 = vpop.f32.mrf.mxu0
      %v1242 = vadd.f32 %v1193, %v1241
      %v1243 = vpop.f32.mrf.mxu0
      %v1244 = vadd.f32 %v1195, %v1243
      %1245 = vmatmul.bf16.gmra.mxu0 %v645
      %v1246 = vpop.f32.mrf.mxu0
      %v1247 = vadd.f32 %v1198, %v1246
      %v1248 = vpop.f32.mrf.mxu0
      %v1249 = vadd.f32 %v1200, %v1248
      %1250 = vmatmul.bf16.gmra.mxu0 %v647
      %v1251 = vpop.f32.mrf.mxu0
      %v1252 = vadd.f32 %v1203, %v1251
      %v1253 = vpop.f32.mrf.mxu0
      %v1254 = vadd.f32 %v1205, %v1253
      %1255 = vmatmul.bf16.gmra.mxu0 %v649
      %v1256 = vpop.f32.mrf.mxu0
      %v1257 = vadd.f32 %v1208, %v1256
      %v1258 = vpop.f32.mrf.mxu0
      %v1259 = vadd.f32 %v1210, %v1258
      %1260 = vmatmul.bf16.gmra.mxu0 %v651
      %v1261 = vpop.f32.mrf.mxu0
      %v1262 = vadd.f32 %v1213, %v1261
      %v1263 = vpop.f32.mrf.mxu0
      %v1264 = vadd.f32 %v1215, %v1263
      %1265 = vmatmul.bf16.gmra.mxu0 %v653
      %v1266 = vpop.f32.mrf.mxu0
      %v1267 = vadd.f32 %v1218, %v1266
      %v1268 = vpop.f32.mrf.mxu0
      %v1269 = vadd.f32 %v1220, %v1268
      %1270 = vmatmul.bf16.gmra.mxu0 %v655
      %v1271 = vpop.f32.mrf.mxu0
      %v1272 = vadd.f32 %v1223, %v1271
      %v1273 = vpop.f32.mrf.mxu0
      %v1274 = vadd.f32 %v1225, %v1273
      %1275 = vmatmul.bf16.gmra.mxu0 %v657
      %v1276 = vpop.f32.mrf.mxu0
      %v1277 = vadd.f32 %v1228, %v1276
      %v1278 = vpop.f32.mrf.mxu0
      %v1279 = vadd.f32 %v1230, %v1278
      %1280 = vdwg.mxu0
      %1281 = vmatpush.bf16.msra.mxu0 %v890
      %1282 = vmatpush.bf16.msra.mxu0 %v886
      %1283 = vmatpush.bf16.msra.mxu0 %v882
      %1284 = vmatpush.bf16.msra.mxu0 %v878
      %1285 = vmatpush.bf16.msra.mxu0 %v874
      %1286 = vmatpush.bf16.msra.mxu0 %v870
      %1287 = vmatpush.bf16.msra.mxu0 %v866
      %1288 = vmatpush.bf16.msra.mxu0 %v862
      %1289 = vmatmul.bf16.gmra.mxu0 %v642
      %v1290 = vpop.f32.mrf.mxu0
      %v1291 = vadd.f32 %v662, %v1290
      %v1292 = vpop.f32.mrf.mxu0
      %v1293 = vadd.f32 %v662, %v1292
      %1294 = vmatmul.bf16.gmra.mxu0 %v644
      %v1295 = vpop.f32.mrf.mxu0
      %v1296 = vadd.f32 %v662, %v1295
      %v1297 = vpop.f32.mrf.mxu0
      %v1298 = vadd.f32 %v662, %v1297
      %1299 = vmatmul.bf16.gmra.mxu0 %v646
      %v1300 = vpop.f32.mrf.mxu0
      %v1301 = vadd.f32 %v662, %v1300
      %v1302 = vpop.f32.mrf.mxu0
      %v1303 = vadd.f32 %v662, %v1302
      %1304 = vmatmul.bf16.gmra.mxu0 %v648
      %v1305 = vpop.f32.mrf.mxu0
      %v1306 = vadd.f32 %v662, %v1305
      %v1307 = vpop.f32.mrf.mxu0
      %v1308 = vadd.f32 %v662, %v1307
      %1309 = vmatmul.bf16.gmra.mxu0 %v650
      %v1310 = vpop.f32.mrf.mxu0
      %v1311 = vadd.f32 %v662, %v1310
      %v1312 = vpop.f32.mrf.mxu0
      %v1313 = vadd.f32 %v662, %v1312
      %1314 = vmatmul.bf16.gmra.mxu0 %v652
      %v1315 = vpop.f32.mrf.mxu0
      %v1316 = vadd.f32 %v662, %v1315
      %v1317 = vpop.f32.mrf.mxu0
      %v1318 = vadd.f32 %v662, %v1317
      %1319 = vmatmul.bf16.gmra.mxu0 %v654
      %v1320 = vpop.f32.mrf.mxu0
      %v1321 = vadd.f32 %v662, %v1320
      %v1322 = vpop.f32.mrf.mxu0
      %v1323 = vadd.f32 %v662, %v1322
      %1324 = vmatmul.bf16.gmra.mxu0 %v656
      %v1325 = vpop.f32.mrf.mxu0
      %v1326 = vadd.f32 %v662, %v1325
      %v1327 = vpop.f32.mrf.mxu0
      %v1328 = vadd.f32 %v662, %v1327
      %1329 = vdwg.mxu0
      %1330 = vmatpush.bf16.msra.mxu0 %v922
      %1331 = vmatpush.bf16.msra.mxu0 %v918
      %1332 = vmatpush.bf16.msra.mxu0 %v914
      %1333 = vmatpush.bf16.msra.mxu0 %v910
      %1334 = vmatpush.bf16.msra.mxu0 %v906
      %1335 = vmatpush.bf16.msra.mxu0 %v902
      %1336 = vmatpush.bf16.msra.mxu0 %v898
      %1337 = vmatpush.bf16.msra.mxu0 %v894
      %1338 = vmatmul.bf16.gmra.mxu0 %v643
      %v1339 = vpop.f32.mrf.mxu0
      %v1340 = vadd.f32 %v1291, %v1339
      %v1341 = vpop.f32.mrf.mxu0
      %v1342 = vadd.f32 %v1293, %v1341
      %1343 = vmatmul.bf16.gmra.mxu0 %v645
      %v1344 = vpop.f32.mrf.mxu0
      %v1345 = vadd.f32 %v1296, %v1344
      %v1346 = vpop.f32.mrf.mxu0
      %v1347 = vadd.f32 %v1298, %v1346
      %1348 = vmatmul.bf16.gmra.mxu0 %v647
      %v1349 = vpop.f32.mrf.mxu0
      %v1350 = vadd.f32 %v1301, %v1349
      %v1351 = vpop.f32.mrf.mxu0
      %v1352 = vadd.f32 %v1303, %v1351
      %1353 = vmatmul.bf16.gmra.mxu0 %v649
      %v1354 = vpop.f32.mrf.mxu0
      %v1355 = vadd.f32 %v1306, %v1354
      %v1356 = vpop.f32.mrf.mxu0
      %v1357 = vadd.f32 %v1308, %v1356
      %1358 = vmatmul.bf16.gmra.mxu0 %v651
      %v1359 = vpop.f32.mrf.mxu0
      %v1360 = vadd.f32 %v1311, %v1359
      %v1361 = vpop.f32.mrf.mxu0
      %v1362 = vadd.f32 %v1313, %v1361
      %1363 = vmatmul.bf16.gmra.mxu0 %v653
      %v1364 = vpop.f32.mrf.mxu0
      %v1365 = vadd.f32 %v1316, %v1364
      %v1366 = vpop.f32.mrf.mxu0
      %v1367 = vadd.f32 %v1318, %v1366
      %1368 = vmatmul.bf16.gmra.mxu0 %v655
      %v1369 = vpop.f32.mrf.mxu0
      %v1370 = vadd.f32 %v1321, %v1369
      %v1371 = vpop.f32.mrf.mxu0
      %v1372 = vadd.f32 %v1323, %v1371
      %1373 = vmatmul.bf16.gmra.mxu0 %v657
      %v1374 = vpop.f32.mrf.mxu0
      %v1375 = vadd.f32 %v1326, %v1374
      %v1376 = vpop.f32.mrf.mxu0
      %v1377 = vadd.f32 %v1328, %v1376
      %1378 = vdwg.mxu0
      %vm1379 = vcmp.gt.f32.partialorder %v1046, 0.0
      %vm1380 = vcmp.gt.f32.partialorder %v1144, 0.0
      %vm1381 = vcmp.gt.f32.partialorder %v1242, 0.0
      %vm1382 = vcmp.gt.f32.partialorder %v1340, 0.0
      %vm1383 = vcmp.gt.f32.partialorder %v1048, 0.0
      %vm1384 = vcmp.gt.f32.partialorder %v1146, 0.0
      %vm1385 = vcmp.gt.f32.partialorder %v1244, 0.0
      %vm1386 = vcmp.gt.f32.partialorder %v1342, 0.0
      %vm1387 = vcmp.gt.f32.partialorder %v1051, 0.0
      %vm1388 = vcmp.gt.f32.partialorder %v1149, 0.0
      %vm1389 = vcmp.gt.f32.partialorder %v1247, 0.0
      %vm1390 = vcmp.gt.f32.partialorder %v1345, 0.0
      %vm1391 = vcmp.gt.f32.partialorder %v1053, 0.0
      %vm1392 = vcmp.gt.f32.partialorder %v1151, 0.0
      %vm1393 = vcmp.gt.f32.partialorder %v1249, 0.0
      %vm1394 = vcmp.gt.f32.partialorder %v1347, 0.0
      %vm1395 = vcmp.gt.f32.partialorder %v1056, 0.0
      %vm1396 = vcmp.gt.f32.partialorder %v1154, 0.0
      %vm1397 = vcmp.gt.f32.partialorder %v1252, 0.0
      %vm1398 = vcmp.gt.f32.partialorder %v1350, 0.0
      %vm1399 = vcmp.gt.f32.partialorder %v1058, 0.0
      %vm1400 = vcmp.gt.f32.partialorder %v1156, 0.0
      %vm1401 = vcmp.gt.f32.partialorder %v1254, 0.0
      %vm1402 = vcmp.gt.f32.partialorder %v1352, 0.0
      %vm1403 = vcmp.gt.f32.partialorder %v1061, 0.0
      %vm1404 = vcmp.gt.f32.partialorder %v1159, 0.0
      %vm1405 = vcmp.gt.f32.partialorder %v1257, 0.0
      %vm1406 = vcmp.gt.f32.partialorder %v1355, 0.0
      %vm1407 = vcmp.gt.f32.partialorder %v1063, 0.0
      %vm1408 = vcmp.gt.f32.partialorder %v1161, 0.0
      %vm1409 = vcmp.gt.f32.partialorder %v1259, 0.0
      %vm1410 = vcmp.gt.f32.partialorder %v1357, 0.0
      %vm1411 = vcmp.gt.f32.partialorder %v1066, 0.0
      %vm1412 = vcmp.gt.f32.partialorder %v1164, 0.0
      %vm1413 = vcmp.gt.f32.partialorder %v1262, 0.0
      %vm1414 = vcmp.gt.f32.partialorder %v1360, 0.0
      %vm1415 = vcmp.gt.f32.partialorder %v1068, 0.0
      %vm1416 = vcmp.gt.f32.partialorder %v1166, 0.0
      %vm1417 = vcmp.gt.f32.partialorder %v1264, 0.0
      %vm1418 = vcmp.gt.f32.partialorder %v1362, 0.0
      %vm1419 = vcmp.gt.f32.partialorder %v1071, 0.0
      %vm1420 = vcmp.gt.f32.partialorder %v1169, 0.0
      %vm1421 = vcmp.gt.f32.partialorder %v1267, 0.0
      %vm1422 = vcmp.gt.f32.partialorder %v1365, 0.0
      %vm1423 = vcmp.gt.f32.partialorder %v1073, 0.0
      %vm1424 = vcmp.gt.f32.partialorder %v1171, 0.0
      %vm1425 = vcmp.gt.f32.partialorder %v1269, 0.0
      %vm1426 = vcmp.gt.f32.partialorder %v1367, 0.0
      %vm1427 = vcmp.gt.f32.partialorder %v1076, 0.0
      %vm1428 = vcmp.gt.f32.partialorder %v1174, 0.0
      %vm1429 = vcmp.gt.f32.partialorder %v1272, 0.0
      %vm1430 = vcmp.gt.f32.partialorder %v1370, 0.0
      %vm1431 = vcmp.gt.f32.partialorder %v1078, 0.0
      %vm1432 = vcmp.gt.f32.partialorder %v1176, 0.0
      %vm1433 = vcmp.gt.f32.partialorder %v1274, 0.0
      %vm1434 = vcmp.gt.f32.partialorder %v1372, 0.0
      %vm1435 = vcmp.gt.f32.partialorder %v1081, 0.0
      %vm1436 = vcmp.gt.f32.partialorder %v1179, 0.0
      %vm1437 = vcmp.gt.f32.partialorder %v1277, 0.0
      %vm1438 = vcmp.gt.f32.partialorder %v1375, 0.0
      %vm1439 = vcmp.gt.f32.partialorder %v1083, 0.0
      %vm1440 = vcmp.gt.f32.partialorder %v1181, 0.0
      %vm1441 = vcmp.gt.f32.partialorder %v1279, 0.0
      %vm1442 = vcmp.gt.f32.partialorder %v1377, 0.0
      %v1443 = vmul.f32 %v1046, 0.2
      %v1444 = vmul.f32 %v1144, 0.2
      %v1445 = vmul.f32 %v1242, 0.2
      %v1446 = vmul.f32 %v1340, 0.2
      %v1447 = vmul.f32 %v1048, 0.2
      %v1448 = vmul.f32 %v1146, 0.2
      %v1449 = vmul.f32 %v1244, 0.2
      %v1450 = vmul.f32 %v1342, 0.2
      %v1451 = vmul.f32 %v1051, 0.2
      %v1452 = vmul.f32 %v1149, 0.2
      %v1453 = vmul.f32 %v1247, 0.2
      %v1454 = vmul.f32 %v1345, 0.2
      %v1455 = vmul.f32 %v1053, 0.2
      %v1456 = vmul.f32 %v1151, 0.2
      %v1457 = vmul.f32 %v1249, 0.2
      %v1458 = vmul.f32 %v1347, 0.2
      %v1459 = vmul.f32 %v1056, 0.2
      %v1460 = vmul.f32 %v1154, 0.2
      %v1461 = vmul.f32 %v1252, 0.2
      %v1462 = vmul.f32 %v1350, 0.2
      %v1463 = vmul.f32 %v1058, 0.2
      %v1464 = vmul.f32 %v1156, 0.2
      %v1465 = vmul.f32 %v1254, 0.2
      %v1466 = vmul.f32 %v1352, 0.2
      %v1467 = vmul.f32 %v1061, 0.2
      %v1468 = vmul.f32 %v1159, 0.2
      %v1469 = vmul.f32 %v1257, 0.2
      %v1470 = vmul.f32 %v1355, 0.2
      %v1471 = vmul.f32 %v1063, 0.2
      %v1472 = vmul.f32 %v1161, 0.2
      %v1473 = vmul.f32 %v1259, 0.2
      %v1474 = vmul.f32 %v1357, 0.2
      %v1475 = vmul.f32 %v1066, 0.2
      %v1476 = vmul.f32 %v1164, 0.2
      %v1477 = vmul.f32 %v1262, 0.2
      %v1478 = vmul.f32 %v1360, 0.2
      %v1479 = vmul.f32 %v1068, 0.2
      %v1480 = vmul.f32 %v1166, 0.2
      %v1481 = vmul.f32 %v1264, 0.2
      %v1482 = vmul.f32 %v1362, 0.2
      %v1483 = vmul.f32 %v1071, 0.2
      %v1484 = vmul.f32 %v1169, 0.2
      %v1485 = vmul.f32 %v1267, 0.2
      %v1486 = vmul.f32 %v1365, 0.2
      %v1487 = vmul.f32 %v1073, 0.2
      %v1488 = vmul.f32 %v1171, 0.2
      %v1489 = vmul.f32 %v1269, 0.2
      %v1490 = vmul.f32 %v1367, 0.2
      %v1491 = vmul.f32 %v1076, 0.2
      %v1492 = vmul.f32 %v1174, 0.2
      %v1493 = vmul.f32 %v1272, 0.2
      %v1494 = vmul.f32 %v1370, 0.2
      %v1495 = vmul.f32 %v1078, 0.2
      %v1496 = vmul.f32 %v1176, 0.2
      %v1497 = vmul.f32 %v1274, 0.2
      %v1498 = vmul.f32 %v1372, 0.2
      %v1499 = vmul.f32 %v1081, 0.2
      %v1500 = vmul.f32 %v1179, 0.2
      %v1501 = vmul.f32 %v1277, 0.2
      %v1502 = vmul.f32 %v1375, 0.2
      %v1503 = vmul.f32 %v1083, 0.2
      %v1504 = vmul.f32 %v1181, 0.2
      %v1505 = vmul.f32 %v1279, 0.2
      %v1506 = vmul.f32 %v1377, 0.2
      %v1507 = vsel %vm1379, %v1046, %v1443
      %v1508 = vsel %vm1380, %v1144, %v1444
      %v1509 = vsel %vm1381, %v1242, %v1445
      %v1510 = vsel %vm1382, %v1340, %v1446
      %v1511 = vsel %vm1383, %v1048, %v1447
      %v1512 = vsel %vm1384, %v1146, %v1448
      %v1513 = vsel %vm1385, %v1244, %v1449
      %v1514 = vsel %vm1386, %v1342, %v1450
      %v1515 = vsel %vm1387, %v1051, %v1451
      %v1516 = vsel %vm1388, %v1149, %v1452
      %v1517 = vsel %vm1389, %v1247, %v1453
      %v1518 = vsel %vm1390, %v1345, %v1454
      %v1519 = vsel %vm1391, %v1053, %v1455
      %v1520 = vsel %vm1392, %v1151, %v1456
      %v1521 = vsel %vm1393, %v1249, %v1457
      %v1522 = vsel %vm1394, %v1347, %v1458
      %v1523 = vsel %vm1395, %v1056, %v1459
      %v1524 = vsel %vm1396, %v1154, %v1460
      %v1525 = vsel %vm1397, %v1252, %v1461
      %v1526 = vsel %vm1398, %v1350, %v1462
      %v1527 = vsel %vm1399, %v1058, %v1463
      %v1528 = vsel %vm1400, %v1156, %v1464
      %v1529 = vsel %vm1401, %v1254, %v1465
      %v1530 = vsel %vm1402, %v1352, %v1466
      %v1531 = vsel %vm1403, %v1061, %v1467
      %v1532 = vsel %vm1404, %v1159, %v1468
      %v1533 = vsel %vm1405, %v1257, %v1469
      %v1534 = vsel %vm1406, %v1355, %v1470
      %v1535 = vsel %vm1407, %v1063, %v1471
      %v1536 = vsel %vm1408, %v1161, %v1472
      %v1537 = vsel %vm1409, %v1259, %v1473
      %v1538 = vsel %vm1410, %v1357, %v1474
      %v1539 = vsel %vm1411, %v1066, %v1475
      %v1540 = vsel %vm1412, %v1164, %v1476
      %v1541 = vsel %vm1413, %v1262, %v1477
      %v1542 = vsel %vm1414, %v1360, %v1478
      %v1543 = vsel %vm1415, %v1068, %v1479
      %v1544 = vsel %vm1416, %v1166, %v1480
      %v1545 = vsel %vm1417, %v1264, %v1481
      %v1546 = vsel %vm1418, %v1362, %v1482
      %v1547 = vsel %vm1419, %v1071, %v1483
      %v1548 = vsel %vm1420, %v1169, %v1484
      %v1549 = vsel %vm1421, %v1267, %v1485
      %v1550 = vsel %vm1422, %v1365, %v1486
      %v1551 = vsel %vm1423, %v1073, %v1487
      %v1552 = vsel %vm1424, %v1171, %v1488
      %v1553 = vsel %vm1425, %v1269, %v1489
      %v1554 = vsel %vm1426, %v1367, %v1490
      %v1555 = vsel %vm1427, %v1076, %v1491
      %v1556 = vsel %vm1428, %v1174, %v1492
      %v1557 = vsel %vm1429, %v1272, %v1493
      %v1558 = vsel %vm1430, %v1370, %v1494
      %v1559 = vsel %vm1431, %v1078, %v1495
      %v1560 = vsel %vm1432, %v1176, %v1496
      %v1561 = vsel %vm1433, %v1274, %v1497
      %v1562 = vsel %vm1434, %v1372, %v1498
      %v1563 = vsel %vm1435, %v1081, %v1499
      %v1564 = vsel %vm1436, %v1179, %v1500
      %v1565 = vsel %vm1437, %v1277, %v1501
      %v1566 = vsel %vm1438, %v1375, %v1502
      %v1567 = vsel %vm1439, %v1083, %v1503
      %v1568 = vsel %vm1440, %v1181, %v1504
      %v1569 = vsel %vm1441, %v1279, %v1505
      %v1570 = vsel %vm1442, %v1377, %v1506
      %v1571 = vpack.c.bf16 %v1511, %v1507
      %v1572 = vpack.c.bf16 %v1512, %v1508
      %v1573 = vpack.c.bf16 %v1513, %v1509
      %v1574 = vpack.c.bf16 %v1514, %v1510
      %v1575 = vpack.c.bf16 %v1519, %v1515
      %v1576 = vpack.c.bf16 %v1520, %v1516
      %v1577 = vpack.c.bf16 %v1521, %v1517
      %v1578 = vpack.c.bf16 %v1522, %v1518
      %v1579 = vpack.c.bf16 %v1527, %v1523
      %v1580 = vpack.c.bf16 %v1528, %v1524
      %v1581 = vpack.c.bf16 %v1529, %v1525
      %v1582 = vpack.c.bf16 %v1530, %v1526
      %v1583 = vpack.c.bf16 %v1535, %v1531
      %v1584 = vpack.c.bf16 %v1536, %v1532
      %v1585 = vpack.c.bf16 %v1537, %v1533
      %v1586 = vpack.c.bf16 %v1538, %v1534
      %v1587 = vpack.c.bf16 %v1543, %v1539
      %v1588 = vpack.c.bf16 %v1544, %v1540
      %v1589 = vpack.c.bf16 %v1545, %v1541
      %v1590 = vpack.c.bf16 %v1546, %v1542
      %v1591 = vpack.c.bf16 %v1551, %v1547
      %v1592 = vpack.c.bf16 %v1552, %v1548
      %v1593 = vpack.c.bf16 %v1553, %v1549
      %v1594 = vpack.c.bf16 %v1554, %v1550
      %v1595 = vpack.c.bf16 %v1559, %v1555
      %v1596 = vpack.c.bf16 %v1560, %v1556
      %v1597 = vpack.c.bf16 %v1561, %v1557
      %v1598 = vpack.c.bf16 %v1562, %v1558
      %v1599 = vpack.c.bf16 %v1567, %v1563
      %v1600 = vpack.c.bf16 %v1568, %v1564
      %v1601 = vpack.c.bf16 %v1569, %v1565
      %v1602 = vpack.c.bf16 %v1570, %v1566
      %v1604 = vperm.slane %v511, 0
      %v1670 = vunpack.c.l.b16 %v447
      %v1671 = vunpack.c.l.b16 %v448
      %v1672 = vunpack.c.l.b16 %v449
      %v1673 = vunpack.c.l.b16 %v450
      %v1674 = vunpack.c.l.b16 %v451
      %v1675 = vunpack.c.l.b16 %v452
      %v1676 = vunpack.c.l.b16 %v453
      %v1677 = vunpack.c.l.b16 %v454
      %v1678 = vunpack.c.l.b16 %v455
      %v1679 = vunpack.c.l.b16 %v456
      %v1680 = vunpack.c.l.b16 %v457
      %v1681 = vunpack.c.l.b16 %v458
      %v1682 = vunpack.c.l.b16 %v459
      %v1683 = vunpack.c.l.b16 %v460
      %v1684 = vunpack.c.l.b16 %v461
      %v1685 = vunpack.c.l.b16 %v462
      %v1686 = vunpack.c.l.b16 %v463
      %v1687 = vunpack.c.l.b16 %v464
      %v1688 = vunpack.c.l.b16 %v465
      %v1689 = vunpack.c.l.b16 %v466
      %v1690 = vunpack.c.l.b16 %v467
      %v1691 = vunpack.c.l.b16 %v468
      %v1692 = vunpack.c.l.b16 %v469
      %v1693 = vunpack.c.l.b16 %v470
      %v1694 = vunpack.c.l.b16 %v471
      %v1695 = vunpack.c.l.b16 %v472
      %v1696 = vunpack.c.l.b16 %v473
      %v1697 = vunpack.c.l.b16 %v474
      %v1698 = vunpack.c.l.b16 %v475
      %v1699 = vunpack.c.l.b16 %v476
      %v1700 = vunpack.c.l.b16 %v477
      %v1701 = vunpack.c.l.b16 %v478
      %v1702 = vunpack.c.l.b16 %v479
      %v1703 = vunpack.c.l.b16 %v480
      %v1704 = vunpack.c.l.b16 %v481
      %v1705 = vunpack.c.l.b16 %v482
      %v1706 = vunpack.c.l.b16 %v483
      %v1707 = vunpack.c.l.b16 %v484
      %v1708 = vunpack.c.l.b16 %v485
      %v1709 = vunpack.c.l.b16 %v486
      %v1710 = vunpack.c.l.b16 %v487
      %v1711 = vunpack.c.l.b16 %v488
      %v1712 = vunpack.c.l.b16 %v489
      %v1713 = vunpack.c.l.b16 %v490
      %v1714 = vunpack.c.l.b16 %v491
      %v1715 = vunpack.c.l.b16 %v492
      %v1716 = vunpack.c.l.b16 %v493
      %v1717 = vunpack.c.l.b16 %v494
      %v1718 = vunpack.c.l.b16 %v495
      %v1719 = vunpack.c.l.b16 %v496
      %v1720 = vunpack.c.l.b16 %v497
      %v1721 = vunpack.c.l.b16 %v498
      %v1722 = vunpack.c.l.b16 %v499
      %v1723 = vunpack.c.l.b16 %v500
      %v1724 = vunpack.c.l.b16 %v501
      %v1725 = vunpack.c.l.b16 %v502
      %v1726 = vunpack.c.l.b16 %v503
      %v1727 = vunpack.c.l.b16 %v504
      %v1728 = vunpack.c.l.b16 %v505
      %v1729 = vunpack.c.l.b16 %v506
      %v1730 = vunpack.c.l.b16 %v507
      %v1731 = vunpack.c.l.b16 %v508
      %v1732 = vunpack.c.l.b16 %v509
      %v1733 = vunpack.c.l.b16 %v510
      %v1734 = vpack.c.b16 %v1671, %v1670
      %v1735 = vpack.c.b16 %v1673, %v1672
      %v1736 = vpack.c.b16 %v1675, %v1674
      %v1737 = vpack.c.b16 %v1677, %v1676
      %v1738 = vpack.c.b16 %v1679, %v1678
      %v1739 = vpack.c.b16 %v1681, %v1680
      %v1740 = vpack.c.b16 %v1683, %v1682
      %v1741 = vpack.c.b16 %v1685, %v1684
      %v1742 = vpack.c.b16 %v1687, %v1686
      %v1743 = vpack.c.b16 %v1689, %v1688
      %v1744 = vpack.c.b16 %v1691, %v1690
      %v1745 = vpack.c.b16 %v1693, %v1692
      %v1746 = vpack.c.b16 %v1695, %v1694
      %v1747 = vpack.c.b16 %v1697, %v1696
      %v1748 = vpack.c.b16 %v1699, %v1698
      %v1749 = vpack.c.b16 %v1701, %v1700
      %v1750 = vpack.c.b16 %v1703, %v1702
      %v1751 = vpack.c.b16 %v1705, %v1704
      %v1752 = vpack.c.b16 %v1707, %v1706
      %v1753 = vpack.c.b16 %v1709, %v1708
      %v1754 = vpack.c.b16 %v1711, %v1710
      %v1755 = vpack.c.b16 %v1713, %v1712
      %v1756 = vpack.c.b16 %v1715, %v1714
      %v1757 = vpack.c.b16 %v1717, %v1716
      %v1758 = vpack.c.b16 %v1719, %v1718
      %v1759 = vpack.c.b16 %v1721, %v1720
      %v1760 = vpack.c.b16 %v1723, %v1722
      %v1761 = vpack.c.b16 %v1725, %v1724
      %v1762 = vpack.c.b16 %v1727, %v1726
      %v1763 = vpack.c.b16 %v1729, %v1728
      %v1764 = vpack.c.b16 %v1731, %v1730
      %v1765 = vpack.c.b16 %v1733, %v1732
      %1798 = vmatpush.bf16.msra.mxu0 %v1741
      %1799 = vmatpush.bf16.msra.mxu0 %v1740
      %1800 = vmatpush.bf16.msra.mxu0 %v1739
      %1801 = vmatpush.bf16.msra.mxu0 %v1738
      %1802 = vmatpush.bf16.msra.mxu0 %v1737
      %1803 = vmatpush.bf16.msra.mxu0 %v1736
      %1804 = vmatpush.bf16.msra.mxu0 %v1735
      %1805 = vmatpush.bf16.msra.mxu0 %v1734
      %1806 = vmatmul.bf16.gmra.mxu0 %v1571
      %v1807 = vpop.f32.mrf.mxu0
      %v1808 = vadd.f32 %v1604, %v1807
      %v1809 = vpop.f32.mrf.mxu0
      %v1810 = vadd.f32 %v1604, %v1809
      %1811 = vmatmul.bf16.gmra.mxu0 %v1575
      %v1812 = vpop.f32.mrf.mxu0
      %v1813 = vadd.f32 %v1604, %v1812
      %v1814 = vpop.f32.mrf.mxu0
      %v1815 = vadd.f32 %v1604, %v1814
      %1816 = vmatmul.bf16.gmra.mxu0 %v1579
      %v1817 = vpop.f32.mrf.mxu0
      %v1818 = vadd.f32 %v1604, %v1817
      %v1819 = vpop.f32.mrf.mxu0
      %v1820 = vadd.f32 %v1604, %v1819
      %1821 = vmatmul.bf16.gmra.mxu0 %v1583
      %v1822 = vpop.f32.mrf.mxu0
      %v1823 = vadd.f32 %v1604, %v1822
      %v1824 = vpop.f32.mrf.mxu0
      %v1825 = vadd.f32 %v1604, %v1824
      %1826 = vmatmul.bf16.gmra.mxu0 %v1587
      %v1827 = vpop.f32.mrf.mxu0
      %v1828 = vadd.f32 %v1604, %v1827
      %v1829 = vpop.f32.mrf.mxu0
      %v1830 = vadd.f32 %v1604, %v1829
      %1831 = vmatmul.bf16.gmra.mxu0 %v1591
      %v1832 = vpop.f32.mrf.mxu0
      %v1833 = vadd.f32 %v1604, %v1832
      %v1834 = vpop.f32.mrf.mxu0
      %v1835 = vadd.f32 %v1604, %v1834
      %1836 = vmatmul.bf16.gmra.mxu0 %v1595
      %v1837 = vpop.f32.mrf.mxu0
      %v1838 = vadd.f32 %v1604, %v1837
      %v1839 = vpop.f32.mrf.mxu0
      %v1840 = vadd.f32 %v1604, %v1839
      %1841 = vmatmul.bf16.gmra.mxu0 %v1599
      %v1842 = vpop.f32.mrf.mxu0
      %v1843 = vadd.f32 %v1604, %v1842
      %v1844 = vpop.f32.mrf.mxu0
      %v1845 = vadd.f32 %v1604, %v1844
      %1846 = vdwg.mxu0
      %1847 = vmatpush.bf16.msra.mxu0 %v1749
      %1848 = vmatpush.bf16.msra.mxu0 %v1748
      %1849 = vmatpush.bf16.msra.mxu0 %v1747
      %1850 = vmatpush.bf16.msra.mxu0 %v1746
      %1851 = vmatpush.bf16.msra.mxu0 %v1745
      %1852 = vmatpush.bf16.msra.mxu0 %v1744
      %1853 = vmatpush.bf16.msra.mxu0 %v1743
      %1854 = vmatpush.bf16.msra.mxu0 %v1742
      %1855 = vmatmul.bf16.gmra.mxu0 %v1572
      %v1856 = vpop.f32.mrf.mxu0
      %v1857 = vadd.f32 %v1808, %v1856
      %v1858 = vpop.f32.mrf.mxu0
      %v1859 = vadd.f32 %v1810, %v1858
      %1860 = vmatmul.bf16.gmra.mxu0 %v1576
      %v1861 = vpop.f32.mrf.mxu0
      %v1862 = vadd.f32 %v1813, %v1861
      %v1863 = vpop.f32.mrf.mxu0
      %v1864 = vadd.f32 %v1815, %v1863
      %1865 = vmatmul.bf16.gmra.mxu0 %v1580
      %v1866 = vpop.f32.mrf.mxu0
      %v1867 = vadd.f32 %v1818, %v1866
      %v1868 = vpop.f32.mrf.mxu0
      %v1869 = vadd.f32 %v1820, %v1868
      %1870 = vmatmul.bf16.gmra.mxu0 %v1584
      %v1871 = vpop.f32.mrf.mxu0
      %v1872 = vadd.f32 %v1823, %v1871
      %v1873 = vpop.f32.mrf.mxu0
      %v1874 = vadd.f32 %v1825, %v1873
      %1875 = vmatmul.bf16.gmra.mxu0 %v1588
      %v1876 = vpop.f32.mrf.mxu0
      %v1877 = vadd.f32 %v1828, %v1876
      %v1878 = vpop.f32.mrf.mxu0
      %v1879 = vadd.f32 %v1830, %v1878
      %1880 = vmatmul.bf16.gmra.mxu0 %v1592
      %v1881 = vpop.f32.mrf.mxu0
      %v1882 = vadd.f32 %v1833, %v1881
      %v1883 = vpop.f32.mrf.mxu0
      %v1884 = vadd.f32 %v1835, %v1883
      %1885 = vmatmul.bf16.gmra.mxu0 %v1596
      %v1886 = vpop.f32.mrf.mxu0
      %v1887 = vadd.f32 %v1838, %v1886
      %v1888 = vpop.f32.mrf.mxu0
      %v1889 = vadd.f32 %v1840, %v1888
      %1890 = vmatmul.bf16.gmra.mxu0 %v1600
      %v1891 = vpop.f32.mrf.mxu0
      %v1892 = vadd.f32 %v1843, %v1891
      %v1893 = vpop.f32.mrf.mxu0
      %v1894 = vadd.f32 %v1845, %v1893
      %1895 = vdwg.mxu0
      %1896 = vmatpush.bf16.msra.mxu0 %v1757
      %1897 = vmatpush.bf16.msra.mxu0 %v1756
      %1898 = vmatpush.bf16.msra.mxu0 %v1755
      %1899 = vmatpush.bf16.msra.mxu0 %v1754
      %1900 = vmatpush.bf16.msra.mxu0 %v1753
      %1901 = vmatpush.bf16.msra.mxu0 %v1752
      %1902 = vmatpush.bf16.msra.mxu0 %v1751
      %1903 = vmatpush.bf16.msra.mxu0 %v1750
      %1904 = vmatmul.bf16.gmra.mxu0 %v1573
      %v1905 = vpop.f32.mrf.mxu0
      %v1906 = vadd.f32 %v1857, %v1905
      %v1907 = vpop.f32.mrf.mxu0
      %v1908 = vadd.f32 %v1859, %v1907
      %1909 = vmatmul.bf16.gmra.mxu0 %v1577
      %v1910 = vpop.f32.mrf.mxu0
      %v1911 = vadd.f32 %v1862, %v1910
      %v1912 = vpop.f32.mrf.mxu0
      %v1913 = vadd.f32 %v1864, %v1912
      %1914 = vmatmul.bf16.gmra.mxu0 %v1581
      %v1915 = vpop.f32.mrf.mxu0
      %v1916 = vadd.f32 %v1867, %v1915
      %v1917 = vpop.f32.mrf.mxu0
      %v1918 = vadd.f32 %v1869, %v1917
      %1919 = vmatmul.bf16.gmra.mxu0 %v1585
      %v1920 = vpop.f32.mrf.mxu0
      %v1921 = vadd.f32 %v1872, %v1920
      %v1922 = vpop.f32.mrf.mxu0
      %v1923 = vadd.f32 %v1874, %v1922
      %1924 = vmatmul.bf16.gmra.mxu0 %v1589
      %v1925 = vpop.f32.mrf.mxu0
      %v1926 = vadd.f32 %v1877, %v1925
      %v1927 = vpop.f32.mrf.mxu0
      %v1928 = vadd.f32 %v1879, %v1927
      %1929 = vmatmul.bf16.gmra.mxu0 %v1593
      %v1930 = vpop.f32.mrf.mxu0
      %v1931 = vadd.f32 %v1882, %v1930
      %v1932 = vpop.f32.mrf.mxu0
      %v1933 = vadd.f32 %v1884, %v1932
      %1934 = vmatmul.bf16.gmra.mxu0 %v1597
      %v1935 = vpop.f32.mrf.mxu0
      %v1936 = vadd.f32 %v1887, %v1935
      %v1937 = vpop.f32.mrf.mxu0
      %v1938 = vadd.f32 %v1889, %v1937
      %1939 = vmatmul.bf16.gmra.mxu0 %v1601
      %v1940 = vpop.f32.mrf.mxu0
      %v1941 = vadd.f32 %v1892, %v1940
      %v1942 = vpop.f32.mrf.mxu0
      %v1943 = vadd.f32 %v1894, %v1942
      %1944 = vdwg.mxu0
      %1945 = vmatpush.bf16.msra.mxu0 %v1765
      %1946 = vmatpush.bf16.msra.mxu0 %v1764
      %1947 = vmatpush.bf16.msra.mxu0 %v1763
      %1948 = vmatpush.bf16.msra.mxu0 %v1762
      %1949 = vmatpush.bf16.msra.mxu0 %v1761
      %1950 = vmatpush.bf16.msra.mxu0 %v1760
      %1951 = vmatpush.bf16.msra.mxu0 %v1759
      %1952 = vmatpush.bf16.msra.mxu0 %v1758
      %1953 = vmatmul.bf16.gmra.mxu0 %v1574
      %v1954 = vpop.f32.mrf.mxu0
      %v1955 = vadd.f32 %v1906, %v1954
      %v1956 = vpop.f32.mrf.mxu0
      %v1957 = vadd.f32 %v1908, %v1956
      %1958 = vmatmul.bf16.gmra.mxu0 %v1578
      %v1959 = vpop.f32.mrf.mxu0
      %v1960 = vadd.f32 %v1911, %v1959
      %v1961 = vpop.f32.mrf.mxu0
      %v1962 = vadd.f32 %v1913, %v1961
      %1963 = vmatmul.bf16.gmra.mxu0 %v1582
      %v1964 = vpop.f32.mrf.mxu0
      %v1965 = vadd.f32 %v1916, %v1964
      %v1966 = vpop.f32.mrf.mxu0
      %v1967 = vadd.f32 %v1918, %v1966
      %1968 = vmatmul.bf16.gmra.mxu0 %v1586
      %v1969 = vpop.f32.mrf.mxu0
      %v1970 = vadd.f32 %v1921, %v1969
      %v1971 = vpop.f32.mrf.mxu0
      %v1972 = vadd.f32 %v1923, %v1971
      %1973 = vmatmul.bf16.gmra.mxu0 %v1590
      %v1974 = vpop.f32.mrf.mxu0
      %v1975 = vadd.f32 %v1926, %v1974
      %v1976 = vpop.f32.mrf.mxu0
      %v1977 = vadd.f32 %v1928, %v1976
      %1978 = vmatmul.bf16.gmra.mxu0 %v1594
      %v1979 = vpop.f32.mrf.mxu0
      %v1980 = vadd.f32 %v1931, %v1979
      %v1981 = vpop.f32.mrf.mxu0
      %v1982 = vadd.f32 %v1933, %v1981
      %1983 = vmatmul.bf16.gmra.mxu0 %v1598
      %v1984 = vpop.f32.mrf.mxu0
      %v1985 = vadd.f32 %v1936, %v1984
      %v1986 = vpop.f32.mrf.mxu0
      %v1987 = vadd.f32 %v1938, %v1986
      %1988 = vmatmul.bf16.gmra.mxu0 %v1602
      %v1989 = vpop.f32.mrf.mxu0
      %v1990 = vadd.f32 %v1941, %v1989
      %v1991 = vpop.f32.mrf.mxu0
      %v1992 = vadd.f32 %v1943, %v1991
      %1993 = vdwg.mxu0
      %vm1994 = vcmp.gt.f32.partialorder %v1955, 0.0
      %vm1995 = vcmp.gt.f32.partialorder %v1957, 0.0
      %vm1996 = vcmp.gt.f32.partialorder %v1960, 0.0
      %vm1997 = vcmp.gt.f32.partialorder %v1962, 0.0
      %vm1998 = vcmp.gt.f32.partialorder %v1965, 0.0
      %vm1999 = vcmp.gt.f32.partialorder %v1967, 0.0
      %vm2000 = vcmp.gt.f32.partialorder %v1970, 0.0
      %vm2001 = vcmp.gt.f32.partialorder %v1972, 0.0
      %vm2002 = vcmp.gt.f32.partialorder %v1975, 0.0
      %vm2003 = vcmp.gt.f32.partialorder %v1977, 0.0
      %vm2004 = vcmp.gt.f32.partialorder %v1980, 0.0
      %vm2005 = vcmp.gt.f32.partialorder %v1982, 0.0
      %vm2006 = vcmp.gt.f32.partialorder %v1985, 0.0
      %vm2007 = vcmp.gt.f32.partialorder %v1987, 0.0
      %vm2008 = vcmp.gt.f32.partialorder %v1990, 0.0
      %vm2009 = vcmp.gt.f32.partialorder %v1992, 0.0
      %v2010 = vmul.f32 %v1955, 0.2
      %v2011 = vmul.f32 %v1957, 0.2
      %v2012 = vmul.f32 %v1960, 0.2
      %v2013 = vmul.f32 %v1962, 0.2
      %v2014 = vmul.f32 %v1965, 0.2
      %v2015 = vmul.f32 %v1967, 0.2
      %v2016 = vmul.f32 %v1970, 0.2
      %v2017 = vmul.f32 %v1972, 0.2
      %v2018 = vmul.f32 %v1975, 0.2
      %v2019 = vmul.f32 %v1977, 0.2
      %v2020 = vmul.f32 %v1980, 0.2
      %v2021 = vmul.f32 %v1982, 0.2
      %v2022 = vmul.f32 %v1985, 0.2
      %v2023 = vmul.f32 %v1987, 0.2
      %v2024 = vmul.f32 %v1990, 0.2
      %v2025 = vmul.f32 %v1992, 0.2
      %v2026 = vsel %vm1994, %v1955, %v2010
      %v2027 = vsel %vm1995, %v1957, %v2011
      %v2028 = vsel %vm1996, %v1960, %v2012
      %v2029 = vsel %vm1997, %v1962, %v2013
      %v2030 = vsel %vm1998, %v1965, %v2014
      %v2031 = vsel %vm1999, %v1967, %v2015
      %v2032 = vsel %vm2000, %v1970, %v2016
      %v2033 = vsel %vm2001, %v1972, %v2017
      %v2034 = vsel %vm2002, %v1975, %v2018
      %v2035 = vsel %vm2003, %v1977, %v2019
      %v2036 = vsel %vm2004, %v1980, %v2020
      %v2037 = vsel %vm2005, %v1982, %v2021
      %v2038 = vsel %vm2006, %v1985, %v2022
      %v2039 = vsel %vm2007, %v1987, %v2023
      %v2040 = vsel %vm2008, %v1990, %v2024
      %v2041 = vsel %vm2009, %v1992, %v2025
      %2042 = vst [vmem:[%s380] sm:$0xff] %v2026
      %2043 = vst [vmem:[%s380 + $0x8] sm:$0xff] %v2027
      %2044 = vst [vmem:[%s380 + $0x10] sm:$0xff] %v2028
      %2045 = vst [vmem:[%s380 + $0x18] sm:$0xff] %v2029
      %2046 = vst [vmem:[%s380 + $0x20] sm:$0xff] %v2030
      %2047 = vst [vmem:[%s380 + $0x28] sm:$0xff] %v2031
      %2048 = vst [vmem:[%s380 + $0x30] sm:$0xff] %v2032
      %2049 = vst [vmem:[%s380 + $0x38] sm:$0xff] %v2033
      %2050 = vst [vmem:[%s380 + $0x40] sm:$0xff] %v2034
      %2051 = vst [vmem:[%s380 + $0x48] sm:$0xff] %v2035
      %2052 = vst [vmem:[%s380 + $0x50] sm:$0xff] %v2036
      %2053 = vst [vmem:[%s380 + $0x58] sm:$0xff] %v2037
      %2054 = vst [vmem:[%s380 + $0x60] sm:$0xff] %v2038
      %2055 = vst [vmem:[%s380 + $0x68] sm:$0xff] %v2039
      %2056 = vst [vmem:[%s380 + $0x70] sm:$0xff] %v2040
      %2057 = vst [vmem:[%s380 + $0x78] sm:$0xff] %v2041
      %v2058 = vpack.c.bf16 %v2027, %v2026
      %v2059 = vpack.c.bf16 %v2029, %v2028
      %v2060 = vpack.c.bf16 %v2031, %v2030
      %v2061 = vpack.c.bf16 %v2033, %v2032
      %v2062 = vpack.c.bf16 %v2035, %v2034
      %v2063 = vpack.c.bf16 %v2037, %v2036
      %v2064 = vpack.c.bf16 %v2039, %v2038
      %v2065 = vpack.c.bf16 %v2041, %v2040
      %v2067 = vperm.slane %v544, 0
      %v2068 = vperm.slane %v544, 1
      %v2069 = vperm.slane %v544, 2
      %v2070 = vperm.slane %v544, 3
      %v2107 = vunpack.c.l.b16 %v512
      %v2108 = vunpack.c.h.b16 %v512
      %v2109 = vunpack.c.l.b16 %v513
      %v2110 = vunpack.c.h.b16 %v513
      %v2111 = vunpack.c.l.b16 %v514
      %v2112 = vunpack.c.h.b16 %v514
      %v2113 = vunpack.c.l.b16 %v515
      %v2114 = vunpack.c.h.b16 %v515
      %v2115 = vunpack.c.l.b16 %v516
      %v2116 = vunpack.c.h.b16 %v516
      %v2117 = vunpack.c.l.b16 %v517
      %v2118 = vunpack.c.h.b16 %v517
      %v2119 = vunpack.c.l.b16 %v518
      %v2120 = vunpack.c.h.b16 %v518
      %v2121 = vunpack.c.l.b16 %v519
      %v2122 = vunpack.c.h.b16 %v519
      %v2123 = vunpack.c.l.b16 %v520
      %v2124 = vunpack.c.h.b16 %v520
      %v2125 = vunpack.c.l.b16 %v521
      %v2126 = vunpack.c.h.b16 %v521
      %v2127 = vunpack.c.l.b16 %v522
      %v2128 = vunpack.c.h.b16 %v522
      %v2129 = vunpack.c.l.b16 %v523
      %v2130 = vunpack.c.h.b16 %v523
      %v2131 = vunpack.c.l.b16 %v524
      %v2132 = vunpack.c.h.b16 %v524
      %v2133 = vunpack.c.l.b16 %v525
      %v2134 = vunpack.c.h.b16 %v525
      %v2135 = vunpack.c.l.b16 %v526
      %v2136 = vunpack.c.h.b16 %v526
      %v2137 = vunpack.c.l.b16 %v527
      %v2138 = vunpack.c.h.b16 %v527
      %v2139 = vunpack.c.l.b16 %v528
      %v2140 = vunpack.c.h.b16 %v528
      %v2141 = vunpack.c.l.b16 %v529
      %v2142 = vunpack.c.h.b16 %v529
      %v2143 = vunpack.c.l.b16 %v530
      %v2144 = vunpack.c.h.b16 %v530
      %v2145 = vunpack.c.l.b16 %v531
      %v2146 = vunpack.c.h.b16 %v531
      %v2147 = vunpack.c.l.b16 %v532
      %v2148 = vunpack.c.h.b16 %v532
      %v2149 = vunpack.c.l.b16 %v533
      %v2150 = vunpack.c.h.b16 %v533
      %v2151 = vunpack.c.l.b16 %v534
      %v2152 = vunpack.c.h.b16 %v534
      %v2153 = vunpack.c.l.b16 %v535
      %v2154 = vunpack.c.h.b16 %v535
      %v2155 = vunpack.c.l.b16 %v536
      %v2156 = vunpack.c.h.b16 %v536
      %v2157 = vunpack.c.l.b16 %v537
      %v2158 = vunpack.c.h.b16 %v537
      %v2159 = vunpack.c.l.b16 %v538
      %v2160 = vunpack.c.h.b16 %v538
      %v2161 = vunpack.c.l.b16 %v539
      %v2162 = vunpack.c.h.b16 %v539
      %v2163 = vunpack.c.l.b16 %v540
      %v2164 = vunpack.c.h.b16 %v540
      %v2165 = vunpack.c.l.b16 %v541
      %v2166 = vunpack.c.h.b16 %v541
      %v2167 = vunpack.c.l.b16 %v542
      %v2168 = vunpack.c.h.b16 %v542
      %v2169 = vunpack.c.l.b16 %v543
      %v2170 = vunpack.c.h.b16 %v543
      %v2171 = vpack.c.b16 %v2111, %v2107
      %v2172 = vpack.c.b16 %v2112, %v2108
      %v2173 = vpack.c.b16 %v2113, %v2109
      %v2174 = vpack.c.b16 %v2114, %v2110
      %v2175 = vpack.c.b16 %v2119, %v2115
      %v2176 = vpack.c.b16 %v2120, %v2116
      %v2177 = vpack.c.b16 %v2121, %v2117
      %v2178 = vpack.c.b16 %v2122, %v2118
      %v2179 = vpack.c.b16 %v2127, %v2123
      %v2180 = vpack.c.b16 %v2128, %v2124
      %v2181 = vpack.c.b16 %v2129, %v2125
      %v2182 = vpack.c.b16 %v2130, %v2126
      %v2183 = vpack.c.b16 %v2135, %v2131
      %v2184 = vpack.c.b16 %v2136, %v2132
      %v2185 = vpack.c.b16 %v2137, %v2133
      %v2186 = vpack.c.b16 %v2138, %v2134
      %v2187 = vpack.c.b16 %v2143, %v2139
      %v2188 = vpack.c.b16 %v2144, %v2140
      %v2189 = vpack.c.b16 %v2145, %v2141
      %v2190 = vpack.c.b16 %v2146, %v2142
      %v2191 = vpack.c.b16 %v2151, %v2147
      %v2192 = vpack.c.b16 %v2152, %v2148
      %v2193 = vpack.c.b16 %v2153, %v2149
      %v2194 = vpack.c.b16 %v2154, %v2150
      %v2195 = vpack.c.b16 %v2159, %v2155
      %v2196 = vpack.c.b16 %v2160, %v2156
      %v2197 = vpack.c.b16 %v2161, %v2157
      %v2198 = vpack.c.b16 %v2162, %v2158
      %v2199 = vpack.c.b16 %v2167, %v2163
      %v2200 = vpack.c.b16 %v2168, %v2164
      %v2201 = vpack.c.b16 %v2169, %v2165
      %v2202 = vpack.c.b16 %v2170, %v2166
      %2235 = vmatpush.bf16.msra.mxu0 %v2199
      %2236 = vmatpush.bf16.msra.mxu0 %v2195
      %2237 = vmatpush.bf16.msra.mxu0 %v2191
      %2238 = vmatpush.bf16.msra.mxu0 %v2187
      %2239 = vmatpush.bf16.msra.mxu0 %v2183
      %2240 = vmatpush.bf16.msra.mxu0 %v2179
      %2241 = vmatpush.bf16.msra.mxu0 %v2175
      %2242 = vmatpush.bf16.msra.mxu0 %v2171
      %2243 = vmatmul.bf16.gmra.mxu0 %v2058
      %v2244 = vpop.f32.mrf.mxu0
      %v2245 = vadd.f32 %v2067, %v2244
      %v2246 = vpop.f32.mrf.mxu0
      %v2247 = vadd.f32 %v2067, %v2246
      %2248 = vmatmul.bf16.gmra.mxu0 %v2059
      %v2249 = vpop.f32.mrf.mxu0
      %v2250 = vadd.f32 %v2067, %v2249
      %v2251 = vpop.f32.mrf.mxu0
      %v2252 = vadd.f32 %v2067, %v2251
      %2253 = vmatmul.bf16.gmra.mxu0 %v2060
      %v2254 = vpop.f32.mrf.mxu0
      %v2255 = vadd.f32 %v2067, %v2254
      %v2256 = vpop.f32.mrf.mxu0
      %v2257 = vadd.f32 %v2067, %v2256
      %2258 = vmatmul.bf16.gmra.mxu0 %v2061
      %v2259 = vpop.f32.mrf.mxu0
      %v2260 = vadd.f32 %v2067, %v2259
      %v2261 = vpop.f32.mrf.mxu0
      %v2262 = vadd.f32 %v2067, %v2261
      %2263 = vmatmul.bf16.gmra.mxu0 %v2062
      %v2264 = vpop.f32.mrf.mxu0
      %v2265 = vadd.f32 %v2067, %v2264
      %v2266 = vpop.f32.mrf.mxu0
      %v2267 = vadd.f32 %v2067, %v2266
      %2268 = vmatmul.bf16.gmra.mxu0 %v2063
      %v2269 = vpop.f32.mrf.mxu0
      %v2270 = vadd.f32 %v2067, %v2269
      %v2271 = vpop.f32.mrf.mxu0
      %v2272 = vadd.f32 %v2067, %v2271
      %2273 = vmatmul.bf16.gmra.mxu0 %v2064
      %v2274 = vpop.f32.mrf.mxu0
      %v2275 = vadd.f32 %v2067, %v2274
      %v2276 = vpop.f32.mrf.mxu0
      %v2277 = vadd.f32 %v2067, %v2276
      %2278 = vmatmul.bf16.gmra.mxu0 %v2065
      %v2279 = vpop.f32.mrf.mxu0
      %v2280 = vadd.f32 %v2067, %v2279
      %v2281 = vpop.f32.mrf.mxu0
      %v2282 = vadd.f32 %v2067, %v2281
      %2283 = vdwg.mxu0
      %2284 = vmatpush.bf16.msra.mxu0 %v2200
      %2285 = vmatpush.bf16.msra.mxu0 %v2196
      %2286 = vmatpush.bf16.msra.mxu0 %v2192
      %2287 = vmatpush.bf16.msra.mxu0 %v2188
      %2288 = vmatpush.bf16.msra.mxu0 %v2184
      %2289 = vmatpush.bf16.msra.mxu0 %v2180
      %2290 = vmatpush.bf16.msra.mxu0 %v2176
      %2291 = vmatpush.bf16.msra.mxu0 %v2172
      %2292 = vmatmul.bf16.gmra.mxu0 %v2058
      %v2293 = vpop.f32.mrf.mxu0
      %v2294 = vadd.f32 %v2068, %v2293
      %v2295 = vpop.f32.mrf.mxu0
      %v2296 = vadd.f32 %v2068, %v2295
      %2297 = vmatmul.bf16.gmra.mxu0 %v2059
      %v2298 = vpop.f32.mrf.mxu0
      %v2299 = vadd.f32 %v2068, %v2298
      %v2300 = vpop.f32.mrf.mxu0
      %v2301 = vadd.f32 %v2068, %v2300
      %2302 = vmatmul.bf16.gmra.mxu0 %v2060
      %v2303 = vpop.f32.mrf.mxu0
      %v2304 = vadd.f32 %v2068, %v2303
      %v2305 = vpop.f32.mrf.mxu0
      %v2306 = vadd.f32 %v2068, %v2305
      %2307 = vmatmul.bf16.gmra.mxu0 %v2061
      %v2308 = vpop.f32.mrf.mxu0
      %v2309 = vadd.f32 %v2068, %v2308
      %v2310 = vpop.f32.mrf.mxu0
      %v2311 = vadd.f32 %v2068, %v2310
      %2312 = vmatmul.bf16.gmra.mxu0 %v2062
      %v2313 = vpop.f32.mrf.mxu0
      %v2314 = vadd.f32 %v2068, %v2313
      %v2315 = vpop.f32.mrf.mxu0
      %v2316 = vadd.f32 %v2068, %v2315
      %2317 = vmatmul.bf16.gmra.mxu0 %v2063
      %v2318 = vpop.f32.mrf.mxu0
      %v2319 = vadd.f32 %v2068, %v2318
      %v2320 = vpop.f32.mrf.mxu0
      %v2321 = vadd.f32 %v2068, %v2320
      %2322 = vmatmul.bf16.gmra.mxu0 %v2064
      %v2323 = vpop.f32.mrf.mxu0
      %v2324 = vadd.f32 %v2068, %v2323
      %v2325 = vpop.f32.mrf.mxu0
      %v2326 = vadd.f32 %v2068, %v2325
      %2327 = vmatmul.bf16.gmra.mxu0 %v2065
      %v2328 = vpop.f32.mrf.mxu0
      %v2329 = vadd.f32 %v2068, %v2328
      %v2330 = vpop.f32.mrf.mxu0
      %v2331 = vadd.f32 %v2068, %v2330
      %2332 = vdwg.mxu0
      %2333 = vmatpush.bf16.msra.mxu0 %v2201
      %2334 = vmatpush.bf16.msra.mxu0 %v2197
      %2335 = vmatpush.bf16.msra.mxu0 %v2193
      %2336 = vmatpush.bf16.msra.mxu0 %v2189
      %2337 = vmatpush.bf16.msra.mxu0 %v2185
      %2338 = vmatpush.bf16.msra.mxu0 %v2181
      %2339 = vmatpush.bf16.msra.mxu0 %v2177
      %2340 = vmatpush.bf16.msra.mxu0 %v2173
      %2341 = vmatmul.bf16.gmra.mxu0 %v2058
      %v2342 = vpop.f32.mrf.mxu0
      %v2343 = vadd.f32 %v2069, %v2342
      %v2344 = vpop.f32.mrf.mxu0
      %v2345 = vadd.f32 %v2069, %v2344
      %2346 = vmatmul.bf16.gmra.mxu0 %v2059
      %v2347 = vpop.f32.mrf.mxu0
      %v2348 = vadd.f32 %v2069, %v2347
      %v2349 = vpop.f32.mrf.mxu0
      %v2350 = vadd.f32 %v2069, %v2349
      %2351 = vmatmul.bf16.gmra.mxu0 %v2060
      %v2352 = vpop.f32.mrf.mxu0
      %v2353 = vadd.f32 %v2069, %v2352
      %v2354 = vpop.f32.mrf.mxu0
      %v2355 = vadd.f32 %v2069, %v2354
      %2356 = vmatmul.bf16.gmra.mxu0 %v2061
      %v2357 = vpop.f32.mrf.mxu0
      %v2358 = vadd.f32 %v2069, %v2357
      %v2359 = vpop.f32.mrf.mxu0
      %v2360 = vadd.f32 %v2069, %v2359
      %2361 = vmatmul.bf16.gmra.mxu0 %v2062
      %v2362 = vpop.f32.mrf.mxu0
      %v2363 = vadd.f32 %v2069, %v2362
      %v2364 = vpop.f32.mrf.mxu0
      %v2365 = vadd.f32 %v2069, %v2364
      %2366 = vmatmul.bf16.gmra.mxu0 %v2063
      %v2367 = vpop.f32.mrf.mxu0
      %v2368 = vadd.f32 %v2069, %v2367
      %v2369 = vpop.f32.mrf.mxu0
      %v2370 = vadd.f32 %v2069, %v2369
      %2371 = vmatmul.bf16.gmra.mxu0 %v2064
      %v2372 = vpop.f32.mrf.mxu0
      %v2373 = vadd.f32 %v2069, %v2372
      %v2374 = vpop.f32.mrf.mxu0
      %v2375 = vadd.f32 %v2069, %v2374
      %2376 = vmatmul.bf16.gmra.mxu0 %v2065
      %v2377 = vpop.f32.mrf.mxu0
      %v2378 = vadd.f32 %v2069, %v2377
      %v2379 = vpop.f32.mrf.mxu0
      %v2380 = vadd.f32 %v2069, %v2379
      %2381 = vdwg.mxu0
      %2382 = vmatpush.bf16.msra.mxu0 %v2202
      %2383 = vmatpush.bf16.msra.mxu0 %v2198
      %2384 = vmatpush.bf16.msra.mxu0 %v2194
      %2385 = vmatpush.bf16.msra.mxu0 %v2190
      %2386 = vmatpush.bf16.msra.mxu0 %v2186
      %2387 = vmatpush.bf16.msra.mxu0 %v2182
      %2388 = vmatpush.bf16.msra.mxu0 %v2178
      %2389 = vmatpush.bf16.msra.mxu0 %v2174
      %2390 = vmatmul.bf16.gmra.mxu0 %v2058
      %v2391 = vpop.f32.mrf.mxu0
      %v2392 = vadd.f32 %v2070, %v2391
      %v2393 = vpop.f32.mrf.mxu0
      %v2394 = vadd.f32 %v2070, %v2393
      %2395 = vmatmul.bf16.gmra.mxu0 %v2059
      %v2396 = vpop.f32.mrf.mxu0
      %v2397 = vadd.f32 %v2070, %v2396
      %v2398 = vpop.f32.mrf.mxu0
      %v2399 = vadd.f32 %v2070, %v2398
      %2400 = vmatmul.bf16.gmra.mxu0 %v2060
      %v2401 = vpop.f32.mrf.mxu0
      %v2402 = vadd.f32 %v2070, %v2401
      %v2403 = vpop.f32.mrf.mxu0
      %v2404 = vadd.f32 %v2070, %v2403
      %2405 = vmatmul.bf16.gmra.mxu0 %v2061
      %v2406 = vpop.f32.mrf.mxu0
      %v2407 = vadd.f32 %v2070, %v2406
      %v2408 = vpop.f32.mrf.mxu0
      %v2409 = vadd.f32 %v2070, %v2408
      %2410 = vmatmul.bf16.gmra.mxu0 %v2062
      %v2411 = vpop.f32.mrf.mxu0
      %v2412 = vadd.f32 %v2070, %v2411
      %v2413 = vpop.f32.mrf.mxu0
      %v2414 = vadd.f32 %v2070, %v2413
      %2415 = vmatmul.bf16.gmra.mxu0 %v2063
      %v2416 = vpop.f32.mrf.mxu0
      %v2417 = vadd.f32 %v2070, %v2416
      %v2418 = vpop.f32.mrf.mxu0
      %v2419 = vadd.f32 %v2070, %v2418
      %2420 = vmatmul.bf16.gmra.mxu0 %v2064
      %v2421 = vpop.f32.mrf.mxu0
      %v2422 = vadd.f32 %v2070, %v2421
      %v2423 = vpop.f32.mrf.mxu0
      %v2424 = vadd.f32 %v2070, %v2423
      %2425 = vmatmul.bf16.gmra.mxu0 %v2065
      %v2426 = vpop.f32.mrf.mxu0
      %v2427 = vadd.f32 %v2070, %v2426
      %v2428 = vpop.f32.mrf.mxu0
      %v2429 = vadd.f32 %v2070, %v2428
      %2430 = vdwg.mxu0
      %vm2431 = vcmp.gt.f32.partialorder %v2245, 0.0
      %vm2432 = vcmp.gt.f32.partialorder %v2294, 0.0
      %vm2433 = vcmp.gt.f32.partialorder %v2343, 0.0
      %vm2434 = vcmp.gt.f32.partialorder %v2392, 0.0
      %vm2435 = vcmp.gt.f32.partialorder %v2247, 0.0
      %vm2436 = vcmp.gt.f32.partialorder %v2296, 0.0
      %vm2437 = vcmp.gt.f32.partialorder %v2345, 0.0
      %vm2438 = vcmp.gt.f32.partialorder %v2394, 0.0
      %vm2439 = vcmp.gt.f32.partialorder %v2250, 0.0
      %vm2440 = vcmp.gt.f32.partialorder %v2299, 0.0
      %vm2441 = vcmp.gt.f32.partialorder %v2348, 0.0
      %vm2442 = vcmp.gt.f32.partialorder %v2397, 0.0
      %vm2443 = vcmp.gt.f32.partialorder %v2252, 0.0
      %vm2444 = vcmp.gt.f32.partialorder %v2301, 0.0
      %vm2445 = vcmp.gt.f32.partialorder %v2350, 0.0
      %vm2446 = vcmp.gt.f32.partialorder %v2399, 0.0
      %vm2447 = vcmp.gt.f32.partialorder %v2255, 0.0
      %vm2448 = vcmp.gt.f32.partialorder %v2304, 0.0
      %vm2449 = vcmp.gt.f32.partialorder %v2353, 0.0
      %vm2450 = vcmp.gt.f32.partialorder %v2402, 0.0
      %vm2451 = vcmp.gt.f32.partialorder %v2257, 0.0
      %vm2452 = vcmp.gt.f32.partialorder %v2306, 0.0
      %vm2453 = vcmp.gt.f32.partialorder %v2355, 0.0
      %vm2454 = vcmp.gt.f32.partialorder %v2404, 0.0
      %vm2455 = vcmp.gt.f32.partialorder %v2260, 0.0
      %vm2456 = vcmp.gt.f32.partialorder %v2309, 0.0
      %vm2457 = vcmp.gt.f32.partialorder %v2358, 0.0
      %vm2458 = vcmp.gt.f32.partialorder %v2407, 0.0
      %vm2459 = vcmp.gt.f32.partialorder %v2262, 0.0
      %vm2460 = vcmp.gt.f32.partialorder %v2311, 0.0
      %vm2461 = vcmp.gt.f32.partialorder %v2360, 0.0
      %vm2462 = vcmp.gt.f32.partialorder %v2409, 0.0
      %vm2463 = vcmp.gt.f32.partialorder %v2265, 0.0
      %vm2464 = vcmp.gt.f32.partialorder %v2314, 0.0
      %vm2465 = vcmp.gt.f32.partialorder %v2363, 0.0
      %vm2466 = vcmp.gt.f32.partialorder %v2412, 0.0
      %vm2467 = vcmp.gt.f32.partialorder %v2267, 0.0
      %vm2468 = vcmp.gt.f32.partialorder %v2316, 0.0
      %vm2469 = vcmp.gt.f32.partialorder %v2365, 0.0
      %vm2470 = vcmp.gt.f32.partialorder %v2414, 0.0
      %vm2471 = vcmp.gt.f32.partialorder %v2270, 0.0
      %vm2472 = vcmp.gt.f32.partialorder %v2319, 0.0
      %vm2473 = vcmp.gt.f32.partialorder %v2368, 0.0
      %vm2474 = vcmp.gt.f32.partialorder %v2417, 0.0
      %vm2475 = vcmp.gt.f32.partialorder %v2272, 0.0
      %vm2476 = vcmp.gt.f32.partialorder %v2321, 0.0
      %vm2477 = vcmp.gt.f32.partialorder %v2370, 0.0
      %vm2478 = vcmp.gt.f32.partialorder %v2419, 0.0
      %vm2479 = vcmp.gt.f32.partialorder %v2275, 0.0
      %vm2480 = vcmp.gt.f32.partialorder %v2324, 0.0
      %vm2481 = vcmp.gt.f32.partialorder %v2373, 0.0
      %vm2482 = vcmp.gt.f32.partialorder %v2422, 0.0
      %vm2483 = vcmp.gt.f32.partialorder %v2277, 0.0
      %vm2484 = vcmp.gt.f32.partialorder %v2326, 0.0
      %vm2485 = vcmp.gt.f32.partialorder %v2375, 0.0
      %vm2486 = vcmp.gt.f32.partialorder %v2424, 0.0
      %vm2487 = vcmp.gt.f32.partialorder %v2280, 0.0
      %vm2488 = vcmp.gt.f32.partialorder %v2329, 0.0
      %vm2489 = vcmp.gt.f32.partialorder %v2378, 0.0
      %vm2490 = vcmp.gt.f32.partialorder %v2427, 0.0
      %vm2491 = vcmp.gt.f32.partialorder %v2282, 0.0
      %vm2492 = vcmp.gt.f32.partialorder %v2331, 0.0
      %vm2493 = vcmp.gt.f32.partialorder %v2380, 0.0
      %vm2494 = vcmp.gt.f32.partialorder %v2429, 0.0
      %v2495 = vmul.f32 %v2245, 0.2
      %v2496 = vmul.f32 %v2294, 0.2
      %v2497 = vmul.f32 %v2343, 0.2
      %v2498 = vmul.f32 %v2392, 0.2
      %v2499 = vmul.f32 %v2247, 0.2
      %v2500 = vmul.f32 %v2296, 0.2
      %v2501 = vmul.f32 %v2345, 0.2
      %v2502 = vmul.f32 %v2394, 0.2
      %v2503 = vmul.f32 %v2250, 0.2
      %v2504 = vmul.f32 %v2299, 0.2
      %v2505 = vmul.f32 %v2348, 0.2
      %v2506 = vmul.f32 %v2397, 0.2
      %v2507 = vmul.f32 %v2252, 0.2
      %v2508 = vmul.f32 %v2301, 0.2
      %v2509 = vmul.f32 %v2350, 0.2
      %v2510 = vmul.f32 %v2399, 0.2
      %v2511 = vmul.f32 %v2255, 0.2
      %v2512 = vmul.f32 %v2304, 0.2
      %v2513 = vmul.f32 %v2353, 0.2
      %v2514 = vmul.f32 %v2402, 0.2
      %v2515 = vmul.f32 %v2257, 0.2
      %v2516 = vmul.f32 %v2306, 0.2
      %v2517 = vmul.f32 %v2355, 0.2
      %v2518 = vmul.f32 %v2404, 0.2
      %v2519 = vmul.f32 %v2260, 0.2
      %v2520 = vmul.f32 %v2309, 0.2
      %v2521 = vmul.f32 %v2358, 0.2
      %v2522 = vmul.f32 %v2407, 0.2
      %v2523 = vmul.f32 %v2262, 0.2
      %v2524 = vmul.f32 %v2311, 0.2
      %v2525 = vmul.f32 %v2360, 0.2
      %v2526 = vmul.f32 %v2409, 0.2
      %v2527 = vmul.f32 %v2265, 0.2
      %v2528 = vmul.f32 %v2314, 0.2
      %v2529 = vmul.f32 %v2363, 0.2
      %v2530 = vmul.f32 %v2412, 0.2
      %v2531 = vmul.f32 %v2267, 0.2
      %v2532 = vmul.f32 %v2316, 0.2
      %v2533 = vmul.f32 %v2365, 0.2
      %v2534 = vmul.f32 %v2414, 0.2
      %v2535 = vmul.f32 %v2270, 0.2
      %v2536 = vmul.f32 %v2319, 0.2
      %v2537 = vmul.f32 %v2368, 0.2
      %v2538 = vmul.f32 %v2417, 0.2
      %v2539 = vmul.f32 %v2272, 0.2
      %v2540 = vmul.f32 %v2321, 0.2
      %v2541 = vmul.f32 %v2370, 0.2
      %v2542 = vmul.f32 %v2419, 0.2
      %v2543 = vmul.f32 %v2275, 0.2
      %v2544 = vmul.f32 %v2324, 0.2
      %v2545 = vmul.f32 %v2373, 0.2
      %v2546 = vmul.f32 %v2422, 0.2
      %v2547 = vmul.f32 %v2277, 0.2
      %v2548 = vmul.f32 %v2326, 0.2
      %v2549 = vmul.f32 %v2375, 0.2
      %v2550 = vmul.f32 %v2424, 0.2
      %v2551 = vmul.f32 %v2280, 0.2
      %v2552 = vmul.f32 %v2329, 0.2
      %v2553 = vmul.f32 %v2378, 0.2
      %v2554 = vmul.f32 %v2427, 0.2
      %v2555 = vmul.f32 %v2282, 0.2
      %v2556 = vmul.f32 %v2331, 0.2
      %v2557 = vmul.f32 %v2380, 0.2
      %v2558 = vmul.f32 %v2429, 0.2
      %v2559 = vsel %vm2431, %v2245, %v2495
      %v2560 = vsel %vm2432, %v2294, %v2496
      %v2561 = vsel %vm2433, %v2343, %v2497
      %v2562 = vsel %vm2434, %v2392, %v2498
      %v2563 = vsel %vm2435, %v2247, %v2499
      %v2564 = vsel %vm2436, %v2296, %v2500
      %v2565 = vsel %vm2437, %v2345, %v2501
      %v2566 = vsel %vm2438, %v2394, %v2502
      %v2567 = vsel %vm2439, %v2250, %v2503
      %v2568 = vsel %vm2440, %v2299, %v2504
      %v2569 = vsel %vm2441, %v2348, %v2505
      %v2570 = vsel %vm2442, %v2397, %v2506
      %v2571 = vsel %vm2443, %v2252, %v2507
      %v2572 = vsel %vm2444, %v2301, %v2508
      %v2573 = vsel %vm2445, %v2350, %v2509
      %v2574 = vsel %vm2446, %v2399, %v2510
      %v2575 = vsel %vm2447, %v2255, %v2511
      %v2576 = vsel %vm2448, %v2304, %v2512
      %v2577 = vsel %vm2449, %v2353, %v2513
      %v2578 = vsel %vm2450, %v2402, %v2514
      %v2579 = vsel %vm2451, %v2257, %v2515
      %v2580 = vsel %vm2452, %v2306, %v2516
      %v2581 = vsel %vm2453, %v2355, %v2517
      %v2582 = vsel %vm2454, %v2404, %v2518
      %v2583 = vsel %vm2455, %v2260, %v2519
      %v2584 = vsel %vm2456, %v2309, %v2520
      %v2585 = vsel %vm2457, %v2358, %v2521
      %v2586 = vsel %vm2458, %v2407, %v2522
      %v2587 = vsel %vm2459, %v2262, %v2523
      %v2588 = vsel %vm2460, %v2311, %v2524
      %v2589 = vsel %vm2461, %v2360, %v2525
      %v2590 = vsel %vm2462, %v2409, %v2526
      %v2591 = vsel %vm2463, %v2265, %v2527
      %v2592 = vsel %vm2464, %v2314, %v2528
      %v2593 = vsel %vm2465, %v2363, %v2529
      %v2594 = vsel %vm2466, %v2412, %v2530
      %v2595 = vsel %vm2467, %v2267, %v2531
      %v2596 = vsel %vm2468, %v2316, %v2532
      %v2597 = vsel %vm2469, %v2365, %v2533
      %v2598 = vsel %vm2470, %v2414, %v2534
      %v2599 = vsel %vm2471, %v2270, %v2535
      %v2600 = vsel %vm2472, %v2319, %v2536
      %v2601 = vsel %vm2473, %v2368, %v2537
      %v2602 = vsel %vm2474, %v2417, %v2538
      %v2603 = vsel %vm2475, %v2272, %v2539
      %v2604 = vsel %vm2476, %v2321, %v2540
      %v2605 = vsel %vm2477, %v2370, %v2541
      %v2606 = vsel %vm2478, %v2419, %v2542
      %v2607 = vsel %vm2479, %v2275, %v2543
      %v2608 = vsel %vm2480, %v2324, %v2544
      %v2609 = vsel %vm2481, %v2373, %v2545
      %v2610 = vsel %vm2482, %v2422, %v2546
      %v2611 = vsel %vm2483, %v2277, %v2547
      %v2612 = vsel %vm2484, %v2326, %v2548
      %v2613 = vsel %vm2485, %v2375, %v2549
      %v2614 = vsel %vm2486, %v2424, %v2550
      %v2615 = vsel %vm2487, %v2280, %v2551
      %v2616 = vsel %vm2488, %v2329, %v2552
      %v2617 = vsel %vm2489, %v2378, %v2553
      %v2618 = vsel %vm2490, %v2427, %v2554
      %v2619 = vsel %vm2491, %v2282, %v2555
      %v2620 = vsel %vm2492, %v2331, %v2556
      %v2621 = vsel %vm2493, %v2380, %v2557
      %v2622 = vsel %vm2494, %v2429, %v2558
      %v2623 = vpack.c.bf16 %v2563, %v2559
      %v2624 = vpack.c.bf16 %v2564, %v2560
      %v2625 = vpack.c.bf16 %v2565, %v2561
      %v2626 = vpack.c.bf16 %v2566, %v2562
      %v2627 = vpack.c.bf16 %v2571, %v2567
      %v2628 = vpack.c.bf16 %v2572, %v2568
      %v2629 = vpack.c.bf16 %v2573, %v2569
      %v2630 = vpack.c.bf16 %v2574, %v2570
      %v2631 = vpack.c.bf16 %v2579, %v2575
      %v2632 = vpack.c.bf16 %v2580, %v2576
      %v2633 = vpack.c.bf16 %v2581, %v2577
      %v2634 = vpack.c.bf16 %v2582, %v2578
      %v2635 = vpack.c.bf16 %v2587, %v2583
      %v2636 = vpack.c.bf16 %v2588, %v2584
      %v2637 = vpack.c.bf16 %v2589, %v2585
      %v2638 = vpack.c.bf16 %v2590, %v2586
      %v2639 = vpack.c.bf16 %v2595, %v2591
      %v2640 = vpack.c.bf16 %v2596, %v2592
      %v2641 = vpack.c.bf16 %v2597, %v2593
      %v2642 = vpack.c.bf16 %v2598, %v2594
      %v2643 = vpack.c.bf16 %v2603, %v2599
      %v2644 = vpack.c.bf16 %v2604, %v2600
      %v2645 = vpack.c.bf16 %v2605, %v2601
      %v2646 = vpack.c.bf16 %v2606, %v2602
      %v2647 = vpack.c.bf16 %v2611, %v2607
      %v2648 = vpack.c.bf16 %v2612, %v2608
      %v2649 = vpack.c.bf16 %v2613, %v2609
      %v2650 = vpack.c.bf16 %v2614, %v2610
      %v2651 = vpack.c.bf16 %v2619, %v2615
      %v2652 = vpack.c.bf16 %v2620, %v2616
      %v2653 = vpack.c.bf16 %v2621, %v2617
      %v2654 = vpack.c.bf16 %v2622, %v2618
      %v2656 = vperm.slane %v609, 0
      %v2657 = vperm.slane %v609, 1
      %v2724 = vunpack.c.l.b16 %v545
      %v2725 = vunpack.c.h.b16 %v545
      %v2726 = vunpack.c.l.b16 %v546
      %v2727 = vunpack.c.h.b16 %v546
      %v2728 = vunpack.c.l.b16 %v547
      %v2729 = vunpack.c.h.b16 %v547
      %v2730 = vunpack.c.l.b16 %v548
      %v2731 = vunpack.c.h.b16 %v548
      %v2732 = vunpack.c.l.b16 %v549
      %v2733 = vunpack.c.h.b16 %v549
      %v2734 = vunpack.c.l.b16 %v550
      %v2735 = vunpack.c.h.b16 %v550
      %v2736 = vunpack.c.l.b16 %v551
      %v2737 = vunpack.c.h.b16 %v551
      %v2738 = vunpack.c.l.b16 %v552
      %v2739 = vunpack.c.h.b16 %v552
      %v2740 = vunpack.c.l.b16 %v553
      %v2741 = vunpack.c.h.b16 %v553
      %v2742 = vunpack.c.l.b16 %v554
      %v2743 = vunpack.c.h.b16 %v554
      %v2744 = vunpack.c.l.b16 %v555
      %v2745 = vunpack.c.h.b16 %v555
      %v2746 = vunpack.c.l.b16 %v556
      %v2747 = vunpack.c.h.b16 %v556
      %v2748 = vunpack.c.l.b16 %v557
      %v2749 = vunpack.c.h.b16 %v557
      %v2750 = vunpack.c.l.b16 %v558
      %v2751 = vunpack.c.h.b16 %v558
      %v2752 = vunpack.c.l.b16 %v559
      %v2753 = vunpack.c.h.b16 %v559
      %v2754 = vunpack.c.l.b16 %v560
      %v2755 = vunpack.c.h.b16 %v560
      %v2756 = vunpack.c.l.b16 %v561
      %v2757 = vunpack.c.h.b16 %v561
      %v2758 = vunpack.c.l.b16 %v562
      %v2759 = vunpack.c.h.b16 %v562
      %v2760 = vunpack.c.l.b16 %v563
      %v2761 = vunpack.c.h.b16 %v563
      %v2762 = vunpack.c.l.b16 %v564
      %v2763 = vunpack.c.h.b16 %v564
      %v2764 = vunpack.c.l.b16 %v565
      %v2765 = vunpack.c.h.b16 %v565
      %v2766 = vunpack.c.l.b16 %v566
      %v2767 = vunpack.c.h.b16 %v566
      %v2768 = vunpack.c.l.b16 %v567
      %v2769 = vunpack.c.h.b16 %v567
      %v2770 = vunpack.c.l.b16 %v568
      %v2771 = vunpack.c.h.b16 %v568
      %v2772 = vunpack.c.l.b16 %v569
      %v2773 = vunpack.c.h.b16 %v569
      %v2774 = vunpack.c.l.b16 %v570
      %v2775 = vunpack.c.h.b16 %v570
      %v2776 = vunpack.c.l.b16 %v571
      %v2777 = vunpack.c.h.b16 %v571
      %v2778 = vunpack.c.l.b16 %v572
      %v2779 = vunpack.c.h.b16 %v572
      %v2780 = vunpack.c.l.b16 %v573
      %v2781 = vunpack.c.h.b16 %v573
      %v2782 = vunpack.c.l.b16 %v574
      %v2783 = vunpack.c.h.b16 %v574
      %v2784 = vunpack.c.l.b16 %v575
      %v2785 = vunpack.c.h.b16 %v575
      %v2786 = vunpack.c.l.b16 %v576
      %v2787 = vunpack.c.h.b16 %v576
      %v2788 = vunpack.c.l.b16 %v577
      %v2789 = vunpack.c.h.b16 %v577
      %v2790 = vunpack.c.l.b16 %v578
      %v2791 = vunpack.c.h.b16 %v578
      %v2792 = vunpack.c.l.b16 %v579
      %v2793 = vunpack.c.h.b16 %v579
      %v2794 = vunpack.c.l.b16 %v580
      %v2795 = vunpack.c.h.b16 %v580
      %v2796 = vunpack.c.l.b16 %v581
      %v2797 = vunpack.c.h.b16 %v581
      %v2798 = vunpack.c.l.b16 %v582
      %v2799 = vunpack.c.h.b16 %v582
      %v2800 = vunpack.c.l.b16 %v583
      %v2801 = vunpack.c.h.b16 %v583
      %v2802 = vunpack.c.l.b16 %v584
      %v2803 = vunpack.c.h.b16 %v584
      %v2804 = vunpack.c.l.b16 %v585
      %v2805 = vunpack.c.h.b16 %v585
      %v2806 = vunpack.c.l.b16 %v586
      %v2807 = vunpack.c.h.b16 %v586
      %v2808 = vunpack.c.l.b16 %v587
      %v2809 = vunpack.c.h.b16 %v587
      %v2810 = vunpack.c.l.b16 %v588
      %v2811 = vunpack.c.h.b16 %v588
      %v2812 = vunpack.c.l.b16 %v589
      %v2813 = vunpack.c.h.b16 %v589
      %v2814 = vunpack.c.l.b16 %v590
      %v2815 = vunpack.c.h.b16 %v590
      %v2816 = vunpack.c.l.b16 %v591
      %v2817 = vunpack.c.h.b16 %v591
      %v2818 = vunpack.c.l.b16 %v592
      %v2819 = vunpack.c.h.b16 %v592
      %v2820 = vunpack.c.l.b16 %v593
      %v2821 = vunpack.c.h.b16 %v593
      %v2822 = vunpack.c.l.b16 %v594
      %v2823 = vunpack.c.h.b16 %v594
      %v2824 = vunpack.c.l.b16 %v595
      %v2825 = vunpack.c.h.b16 %v595
      %v2826 = vunpack.c.l.b16 %v596
      %v2827 = vunpack.c.h.b16 %v596
      %v2828 = vunpack.c.l.b16 %v597
      %v2829 = vunpack.c.h.b16 %v597
      %v2830 = vunpack.c.l.b16 %v598
      %v2831 = vunpack.c.h.b16 %v598
      %v2832 = vunpack.c.l.b16 %v599
      %v2833 = vunpack.c.h.b16 %v599
      %v2834 = vunpack.c.l.b16 %v600
      %v2835 = vunpack.c.h.b16 %v600
      %v2836 = vunpack.c.l.b16 %v601
      %v2837 = vunpack.c.h.b16 %v601
      %v2838 = vunpack.c.l.b16 %v602
      %v2839 = vunpack.c.h.b16 %v602
      %v2840 = vunpack.c.l.b16 %v603
      %v2841 = vunpack.c.h.b16 %v603
      %v2842 = vunpack.c.l.b16 %v604
      %v2843 = vunpack.c.h.b16 %v604
      %v2844 = vunpack.c.l.b16 %v605
      %v2845 = vunpack.c.h.b16 %v605
      %v2846 = vunpack.c.l.b16 %v606
      %v2847 = vunpack.c.h.b16 %v606
      %v2848 = vunpack.c.l.b16 %v607
      %v2849 = vunpack.c.h.b16 %v607
      %v2850 = vunpack.c.l.b16 %v608
      %v2851 = vunpack.c.h.b16 %v608
      %v2852 = vpack.c.b16 %v2726, %v2724
      %v2853 = vpack.c.b16 %v2727, %v2725
      %v2854 = vpack.c.b16 %v2730, %v2728
      %v2855 = vpack.c.b16 %v2731, %v2729
      %v2856 = vpack.c.b16 %v2734, %v2732
      %v2857 = vpack.c.b16 %v2735, %v2733
      %v2858 = vpack.c.b16 %v2738, %v2736
      %v2859 = vpack.c.b16 %v2739, %v2737
      %v2860 = vpack.c.b16 %v2742, %v2740
      %v2861 = vpack.c.b16 %v2743, %v2741
      %v2862 = vpack.c.b16 %v2746, %v2744
      %v2863 = vpack.c.b16 %v2747, %v2745
      %v2864 = vpack.c.b16 %v2750, %v2748
      %v2865 = vpack.c.b16 %v2751, %v2749
      %v2866 = vpack.c.b16 %v2754, %v2752
      %v2867 = vpack.c.b16 %v2755, %v2753
      %v2868 = vpack.c.b16 %v2758, %v2756
      %v2869 = vpack.c.b16 %v2759, %v2757
      %v2870 = vpack.c.b16 %v2762, %v2760
      %v2871 = vpack.c.b16 %v2763, %v2761
      %v2872 = vpack.c.b16 %v2766, %v2764
      %v2873 = vpack.c.b16 %v2767, %v2765
      %v2874 = vpack.c.b16 %v2770, %v2768
      %v2875 = vpack.c.b16 %v2771, %v2769
      %v2876 = vpack.c.b16 %v2774, %v2772
      %v2877 = vpack.c.b16 %v2775, %v2773
      %v2878 = vpack.c.b16 %v2778, %v2776
      %v2879 = vpack.c.b16 %v2779, %v2777
      %v2880 = vpack.c.b16 %v2782, %v2780
      %v2881 = vpack.c.b16 %v2783, %v2781
      %v2882 = vpack.c.b16 %v2786, %v2784
      %v2883 = vpack.c.b16 %v2787, %v2785
      %v2884 = vpack.c.b16 %v2790, %v2788
      %v2885 = vpack.c.b16 %v2791, %v2789
      %v2886 = vpack.c.b16 %v2794, %v2792
      %v2887 = vpack.c.b16 %v2795, %v2793
      %v2888 = vpack.c.b16 %v2798, %v2796
      %v2889 = vpack.c.b16 %v2799, %v2797
      %v2890 = vpack.c.b16 %v2802, %v2800
      %v2891 = vpack.c.b16 %v2803, %v2801
      %v2892 = vpack.c.b16 %v2806, %v2804
      %v2893 = vpack.c.b16 %v2807, %v2805
      %v2894 = vpack.c.b16 %v2810, %v2808
      %v2895 = vpack.c.b16 %v2811, %v2809
      %v2896 = vpack.c.b16 %v2814, %v2812
      %v2897 = vpack.c.b16 %v2815, %v2813
      %v2898 = vpack.c.b16 %v2818, %v2816
      %v2899 = vpack.c.b16 %v2819, %v2817
      %v2900 = vpack.c.b16 %v2822, %v2820
      %v2901 = vpack.c.b16 %v2823, %v2821
      %v2902 = vpack.c.b16 %v2826, %v2824
      %v2903 = vpack.c.b16 %v2827, %v2825
      %v2904 = vpack.c.b16 %v2830, %v2828
      %v2905 = vpack.c.b16 %v2831, %v2829
      %v2906 = vpack.c.b16 %v2834, %v2832
      %v2907 = vpack.c.b16 %v2835, %v2833
      %v2908 = vpack.c.b16 %v2838, %v2836
      %v2909 = vpack.c.b16 %v2839, %v2837
      %v2910 = vpack.c.b16 %v2842, %v2840
      %v2911 = vpack.c.b16 %v2843, %v2841
      %v2912 = vpack.c.b16 %v2846, %v2844
      %v2913 = vpack.c.b16 %v2847, %v2845
      %v2914 = vpack.c.b16 %v2850, %v2848
      %v2915 = vpack.c.b16 %v2851, %v2849
      %2980 = vmatpush.bf16.msra.mxu0 %v2866
      %2981 = vmatpush.bf16.msra.mxu0 %v2864
      %2982 = vmatpush.bf16.msra.mxu0 %v2862
      %2983 = vmatpush.bf16.msra.mxu0 %v2860
      %2984 = vmatpush.bf16.msra.mxu0 %v2858
      %2985 = vmatpush.bf16.msra.mxu0 %v2856
      %2986 = vmatpush.bf16.msra.mxu0 %v2854
      %2987 = vmatpush.bf16.msra.mxu0 %v2852
      %2988 = vmatmul.bf16.gmra.mxu0 %v2623
      %v2989 = vpop.f32.mrf.mxu0
      %v2990 = vadd.f32 %v2656, %v2989
      %v2991 = vpop.f32.mrf.mxu0
      %v2992 = vadd.f32 %v2656, %v2991
      %2993 = vmatmul.bf16.gmra.mxu0 %v2627
      %v2994 = vpop.f32.mrf.mxu0
      %v2995 = vadd.f32 %v2656, %v2994
      %v2996 = vpop.f32.mrf.mxu0
      %v2997 = vadd.f32 %v2656, %v2996
      %2998 = vmatmul.bf16.gmra.mxu0 %v2631
      %v2999 = vpop.f32.mrf.mxu0
      %v3000 = vadd.f32 %v2656, %v2999
      %v3001 = vpop.f32.mrf.mxu0
      %v3002 = vadd.f32 %v2656, %v3001
      %3003 = vmatmul.bf16.gmra.mxu0 %v2635
      %v3004 = vpop.f32.mrf.mxu0
      %v3005 = vadd.f32 %v2656, %v3004
      %v3006 = vpop.f32.mrf.mxu0
      %v3007 = vadd.f32 %v2656, %v3006
      %3008 = vmatmul.bf16.gmra.mxu0 %v2639
      %v3009 = vpop.f32.mrf.mxu0
      %v3010 = vadd.f32 %v2656, %v3009
      %v3011 = vpop.f32.mrf.mxu0
      %v3012 = vadd.f32 %v2656, %v3011
      %3013 = vmatmul.bf16.gmra.mxu0 %v2643
      %v3014 = vpop.f32.mrf.mxu0
      %v3015 = vadd.f32 %v2656, %v3014
      %v3016 = vpop.f32.mrf.mxu0
      %v3017 = vadd.f32 %v2656, %v3016
      %3018 = vmatmul.bf16.gmra.mxu0 %v2647
      %v3019 = vpop.f32.mrf.mxu0
      %v3020 = vadd.f32 %v2656, %v3019
      %v3021 = vpop.f32.mrf.mxu0
      %v3022 = vadd.f32 %v2656, %v3021
      %3023 = vmatmul.bf16.gmra.mxu0 %v2651
      %v3024 = vpop.f32.mrf.mxu0
      %v3025 = vadd.f32 %v2656, %v3024
      %v3026 = vpop.f32.mrf.mxu0
      %v3027 = vadd.f32 %v2656, %v3026
      %3028 = vdwg.mxu0
      %3029 = vmatpush.bf16.msra.mxu0 %v2882
      %3030 = vmatpush.bf16.msra.mxu0 %v2880
      %3031 = vmatpush.bf16.msra.mxu0 %v2878
      %3032 = vmatpush.bf16.msra.mxu0 %v2876
      %3033 = vmatpush.bf16.msra.mxu0 %v2874
      %3034 = vmatpush.bf16.msra.mxu0 %v2872
      %3035 = vmatpush.bf16.msra.mxu0 %v2870
      %3036 = vmatpush.bf16.msra.mxu0 %v2868
      %3037 = vmatmul.bf16.gmra.mxu0 %v2624
      %v3038 = vpop.f32.mrf.mxu0
      %v3039 = vadd.f32 %v2990, %v3038
      %v3040 = vpop.f32.mrf.mxu0
      %v3041 = vadd.f32 %v2992, %v3040
      %3042 = vmatmul.bf16.gmra.mxu0 %v2628
      %v3043 = vpop.f32.mrf.mxu0
      %v3044 = vadd.f32 %v2995, %v3043
      %v3045 = vpop.f32.mrf.mxu0
      %v3046 = vadd.f32 %v2997, %v3045
      %3047 = vmatmul.bf16.gmra.mxu0 %v2632
      %v3048 = vpop.f32.mrf.mxu0
      %v3049 = vadd.f32 %v3000, %v3048
      %v3050 = vpop.f32.mrf.mxu0
      %v3051 = vadd.f32 %v3002, %v3050
      %3052 = vmatmul.bf16.gmra.mxu0 %v2636
      %v3053 = vpop.f32.mrf.mxu0
      %v3054 = vadd.f32 %v3005, %v3053
      %v3055 = vpop.f32.mrf.mxu0
      %v3056 = vadd.f32 %v3007, %v3055
      %3057 = vmatmul.bf16.gmra.mxu0 %v2640
      %v3058 = vpop.f32.mrf.mxu0
      %v3059 = vadd.f32 %v3010, %v3058
      %v3060 = vpop.f32.mrf.mxu0
      %v3061 = vadd.f32 %v3012, %v3060
      %3062 = vmatmul.bf16.gmra.mxu0 %v2644
      %v3063 = vpop.f32.mrf.mxu0
      %v3064 = vadd.f32 %v3015, %v3063
      %v3065 = vpop.f32.mrf.mxu0
      %v3066 = vadd.f32 %v3017, %v3065
      %3067 = vmatmul.bf16.gmra.mxu0 %v2648
      %v3068 = vpop.f32.mrf.mxu0
      %v3069 = vadd.f32 %v3020, %v3068
      %v3070 = vpop.f32.mrf.mxu0
      %v3071 = vadd.f32 %v3022, %v3070
      %3072 = vmatmul.bf16.gmra.mxu0 %v2652
      %v3073 = vpop.f32.mrf.mxu0
      %v3074 = vadd.f32 %v3025, %v3073
      %v3075 = vpop.f32.mrf.mxu0
      %v3076 = vadd.f32 %v3027, %v3075
      %3077 = vdwg.mxu0
      %3078 = vmatpush.bf16.msra.mxu0 %v2898
      %3079 = vmatpush.bf16.msra.mxu0 %v2896
      %3080 = vmatpush.bf16.msra.mxu0 %v2894
      %3081 = vmatpush.bf16.msra.mxu0 %v2892
      %3082 = vmatpush.bf16.msra.mxu0 %v2890
      %3083 = vmatpush.bf16.msra.mxu0 %v2888
      %3084 = vmatpush.bf16.msra.mxu0 %v2886
      %3085 = vmatpush.bf16.msra.mxu0 %v2884
      %3086 = vmatmul.bf16.gmra.mxu0 %v2625
      %v3087 = vpop.f32.mrf.mxu0
      %v3088 = vadd.f32 %v3039, %v3087
      %v3089 = vpop.f32.mrf.mxu0
      %v3090 = vadd.f32 %v3041, %v3089
      %3091 = vmatmul.bf16.gmra.mxu0 %v2629
      %v3092 = vpop.f32.mrf.mxu0
      %v3093 = vadd.f32 %v3044, %v3092
      %v3094 = vpop.f32.mrf.mxu0
      %v3095 = vadd.f32 %v3046, %v3094
      %3096 = vmatmul.bf16.gmra.mxu0 %v2633
      %v3097 = vpop.f32.mrf.mxu0
      %v3098 = vadd.f32 %v3049, %v3097
      %v3099 = vpop.f32.mrf.mxu0
      %v3100 = vadd.f32 %v3051, %v3099
      %3101 = vmatmul.bf16.gmra.mxu0 %v2637
      %v3102 = vpop.f32.mrf.mxu0
      %v3103 = vadd.f32 %v3054, %v3102
      %v3104 = vpop.f32.mrf.mxu0
      %v3105 = vadd.f32 %v3056, %v3104
      %3106 = vmatmul.bf16.gmra.mxu0 %v2641
      %v3107 = vpop.f32.mrf.mxu0
      %v3108 = vadd.f32 %v3059, %v3107
      %v3109 = vpop.f32.mrf.mxu0
      %v3110 = vadd.f32 %v3061, %v3109
      %3111 = vmatmul.bf16.gmra.mxu0 %v2645
      %v3112 = vpop.f32.mrf.mxu0
      %v3113 = vadd.f32 %v3064, %v3112
      %v3114 = vpop.f32.mrf.mxu0
      %v3115 = vadd.f32 %v3066, %v3114
      %3116 = vmatmul.bf16.gmra.mxu0 %v2649
      %v3117 = vpop.f32.mrf.mxu0
      %v3118 = vadd.f32 %v3069, %v3117
      %v3119 = vpop.f32.mrf.mxu0
      %v3120 = vadd.f32 %v3071, %v3119
      %3121 = vmatmul.bf16.gmra.mxu0 %v2653
      %v3122 = vpop.f32.mrf.mxu0
      %v3123 = vadd.f32 %v3074, %v3122
      %v3124 = vpop.f32.mrf.mxu0
      %v3125 = vadd.f32 %v3076, %v3124
      %3126 = vdwg.mxu0
      %3127 = vmatpush.bf16.msra.mxu0 %v2914
      %3128 = vmatpush.bf16.msra.mxu0 %v2912
      %3129 = vmatpush.bf16.msra.mxu0 %v2910
      %3130 = vmatpush.bf16.msra.mxu0 %v2908
      %3131 = vmatpush.bf16.msra.mxu0 %v2906
      %3132 = vmatpush.bf16.msra.mxu0 %v2904
      %3133 = vmatpush.bf16.msra.mxu0 %v2902
      %3134 = vmatpush.bf16.msra.mxu0 %v2900
      %3135 = vmatmul.bf16.gmra.mxu0 %v2626
      %v3136 = vpop.f32.mrf.mxu0
      %v3137 = vadd.f32 %v3088, %v3136
      %v3138 = vpop.f32.mrf.mxu0
      %v3139 = vadd.f32 %v3090, %v3138
      %3140 = vmatmul.bf16.gmra.mxu0 %v2630
      %v3141 = vpop.f32.mrf.mxu0
      %v3142 = vadd.f32 %v3093, %v3141
      %v3143 = vpop.f32.mrf.mxu0
      %v3144 = vadd.f32 %v3095, %v3143
      %3145 = vmatmul.bf16.gmra.mxu0 %v2634
      %v3146 = vpop.f32.mrf.mxu0
      %v3147 = vadd.f32 %v3098, %v3146
      %v3148 = vpop.f32.mrf.mxu0
      %v3149 = vadd.f32 %v3100, %v3148
      %3150 = vmatmul.bf16.gmra.mxu0 %v2638
      %v3151 = vpop.f32.mrf.mxu0
      %v3152 = vadd.f32 %v3103, %v3151
      %v3153 = vpop.f32.mrf.mxu0
      %v3154 = vadd.f32 %v3105, %v3153
      %3155 = vmatmul.bf16.gmra.mxu0 %v2642
      %v3156 = vpop.f32.mrf.mxu0
      %v3157 = vadd.f32 %v3108, %v3156
      %v3158 = vpop.f32.mrf.mxu0
      %v3159 = vadd.f32 %v3110, %v3158
      %3160 = vmatmul.bf16.gmra.mxu0 %v2646
      %v3161 = vpop.f32.mrf.mxu0
      %v3162 = vadd.f32 %v3113, %v3161
      %v3163 = vpop.f32.mrf.mxu0
      %v3164 = vadd.f32 %v3115, %v3163
      %3165 = vmatmul.bf16.gmra.mxu0 %v2650
      %v3166 = vpop.f32.mrf.mxu0
      %v3167 = vadd.f32 %v3118, %v3166
      %v3168 = vpop.f32.mrf.mxu0
      %v3169 = vadd.f32 %v3120, %v3168
      %3170 = vmatmul.bf16.gmra.mxu0 %v2654
      %v3171 = vpop.f32.mrf.mxu0
      %v3172 = vadd.f32 %v3123, %v3171
      %v3173 = vpop.f32.mrf.mxu0
      %v3174 = vadd.f32 %v3125, %v3173
      %3175 = vdwg.mxu0
      %3176 = vmatpush.bf16.msra.mxu0 %v2867
      %3177 = vmatpush.bf16.msra.mxu0 %v2865
      %3178 = vmatpush.bf16.msra.mxu0 %v2863
      %3179 = vmatpush.bf16.msra.mxu0 %v2861
      %3180 = vmatpush.bf16.msra.mxu0 %v2859
      %3181 = vmatpush.bf16.msra.mxu0 %v2857
      %3182 = vmatpush.bf16.msra.mxu0 %v2855
      %3183 = vmatpush.bf16.msra.mxu0 %v2853
      %3184 = vmatmul.bf16.gmra.mxu0 %v2623
      %v3185 = vpop.f32.mrf.mxu0
      %v3186 = vadd.f32 %v2657, %v3185
      %v3187 = vpop.f32.mrf.mxu0
      %v3188 = vadd.f32 %v2657, %v3187
      %3189 = vmatmul.bf16.gmra.mxu0 %v2627
      %v3190 = vpop.f32.mrf.mxu0
      %v3191 = vadd.f32 %v2657, %v3190
      %v3192 = vpop.f32.mrf.mxu0
      %v3193 = vadd.f32 %v2657, %v3192
      %3194 = vmatmul.bf16.gmra.mxu0 %v2631
      %v3195 = vpop.f32.mrf.mxu0
      %v3196 = vadd.f32 %v2657, %v3195
      %v3197 = vpop.f32.mrf.mxu0
      %v3198 = vadd.f32 %v2657, %v3197
      %3199 = vmatmul.bf16.gmra.mxu0 %v2635
      %v3200 = vpop.f32.mrf.mxu0
      %v3201 = vadd.f32 %v2657, %v3200
      %v3202 = vpop.f32.mrf.mxu0
      %v3203 = vadd.f32 %v2657, %v3202
      %3204 = vmatmul.bf16.gmra.mxu0 %v2639
      %v3205 = vpop.f32.mrf.mxu0
      %v3206 = vadd.f32 %v2657, %v3205
      %v3207 = vpop.f32.mrf.mxu0
      %v3208 = vadd.f32 %v2657, %v3207
      %3209 = vmatmul.bf16.gmra.mxu0 %v2643
      %v3210 = vpop.f32.mrf.mxu0
      %v3211 = vadd.f32 %v2657, %v3210
      %v3212 = vpop.f32.mrf.mxu0
      %v3213 = vadd.f32 %v2657, %v3212
      %3214 = vmatmul.bf16.gmra.mxu0 %v2647
      %v3215 = vpop.f32.mrf.mxu0
      %v3216 = vadd.f32 %v2657, %v3215
      %v3217 = vpop.f32.mrf.mxu0
      %v3218 = vadd.f32 %v2657, %v3217
      %3219 = vmatmul.bf16.gmra.mxu0 %v2651
      %v3220 = vpop.f32.mrf.mxu0
      %v3221 = vadd.f32 %v2657, %v3220
      %v3222 = vpop.f32.mrf.mxu0
      %v3223 = vadd.f32 %v2657, %v3222
      %3224 = vdwg.mxu0
      %3225 = vmatpush.bf16.msra.mxu0 %v2883
      %3226 = vmatpush.bf16.msra.mxu0 %v2881
      %3227 = vmatpush.bf16.msra.mxu0 %v2879
      %3228 = vmatpush.bf16.msra.mxu0 %v2877
      %3229 = vmatpush.bf16.msra.mxu0 %v2875
      %3230 = vmatpush.bf16.msra.mxu0 %v2873
      %3231 = vmatpush.bf16.msra.mxu0 %v2871
      %3232 = vmatpush.bf16.msra.mxu0 %v2869
      %3233 = vmatmul.bf16.gmra.mxu0 %v2624
      %v3234 = vpop.f32.mrf.mxu0
      %v3235 = vadd.f32 %v3186, %v3234
      %v3236 = vpop.f32.mrf.mxu0
      %v3237 = vadd.f32 %v3188, %v3236
      %3238 = vmatmul.bf16.gmra.mxu0 %v2628
      %v3239 = vpop.f32.mrf.mxu0
      %v3240 = vadd.f32 %v3191, %v3239
      %v3241 = vpop.f32.mrf.mxu0
      %v3242 = vadd.f32 %v3193, %v3241
      %3243 = vmatmul.bf16.gmra.mxu0 %v2632
      %v3244 = vpop.f32.mrf.mxu0
      %v3245 = vadd.f32 %v3196, %v3244
      %v3246 = vpop.f32.mrf.mxu0
      %v3247 = vadd.f32 %v3198, %v3246
      %3248 = vmatmul.bf16.gmra.mxu0 %v2636
      %v3249 = vpop.f32.mrf.mxu0
      %v3250 = vadd.f32 %v3201, %v3249
      %v3251 = vpop.f32.mrf.mxu0
      %v3252 = vadd.f32 %v3203, %v3251
      %3253 = vmatmul.bf16.gmra.mxu0 %v2640
      %v3254 = vpop.f32.mrf.mxu0
      %v3255 = vadd.f32 %v3206, %v3254
      %v3256 = vpop.f32.mrf.mxu0
      %v3257 = vadd.f32 %v3208, %v3256
      %3258 = vmatmul.bf16.gmra.mxu0 %v2644
      %v3259 = vpop.f32.mrf.mxu0
      %v3260 = vadd.f32 %v3211, %v3259
      %v3261 = vpop.f32.mrf.mxu0
      %v3262 = vadd.f32 %v3213, %v3261
      %3263 = vmatmul.bf16.gmra.mxu0 %v2648
      %v3264 = vpop.f32.mrf.mxu0
      %v3265 = vadd.f32 %v3216, %v3264
      %v3266 = vpop.f32.mrf.mxu0
      %v3267 = vadd.f32 %v3218, %v3266
      %3268 = vmatmul.bf16.gmra.mxu0 %v2652
      %v3269 = vpop.f32.mrf.mxu0
      %v3270 = vadd.f32 %v3221, %v3269
      %v3271 = vpop.f32.mrf.mxu0
      %v3272 = vadd.f32 %v3223, %v3271
      %3273 = vdwg.mxu0
      %3274 = vmatpush.bf16.msra.mxu0 %v2899
      %3275 = vmatpush.bf16.msra.mxu0 %v2897
      %3276 = vmatpush.bf16.msra.mxu0 %v2895
      %3277 = vmatpush.bf16.msra.mxu0 %v2893
      %3278 = vmatpush.bf16.msra.mxu0 %v2891
      %3279 = vmatpush.bf16.msra.mxu0 %v2889
      %3280 = vmatpush.bf16.msra.mxu0 %v2887
      %3281 = vmatpush.bf16.msra.mxu0 %v2885
      %3282 = vmatmul.bf16.gmra.mxu0 %v2625
      %v3283 = vpop.f32.mrf.mxu0
      %v3284 = vadd.f32 %v3235, %v3283
      %v3285 = vpop.f32.mrf.mxu0
      %v3286 = vadd.f32 %v3237, %v3285
      %3287 = vmatmul.bf16.gmra.mxu0 %v2629
      %v3288 = vpop.f32.mrf.mxu0
      %v3289 = vadd.f32 %v3240, %v3288
      %v3290 = vpop.f32.mrf.mxu0
      %v3291 = vadd.f32 %v3242, %v3290
      %3292 = vmatmul.bf16.gmra.mxu0 %v2633
      %v3293 = vpop.f32.mrf.mxu0
      %v3294 = vadd.f32 %v3245, %v3293
      %v3295 = vpop.f32.mrf.mxu0
      %v3296 = vadd.f32 %v3247, %v3295
      %3297 = vmatmul.bf16.gmra.mxu0 %v2637
      %v3298 = vpop.f32.mrf.mxu0
      %v3299 = vadd.f32 %v3250, %v3298
      %v3300 = vpop.f32.mrf.mxu0
      %v3301 = vadd.f32 %v3252, %v3300
      %3302 = vmatmul.bf16.gmra.mxu0 %v2641
      %v3303 = vpop.f32.mrf.mxu0
      %v3304 = vadd.f32 %v3255, %v3303
      %v3305 = vpop.f32.mrf.mxu0
      %v3306 = vadd.f32 %v3257, %v3305
      %3307 = vmatmul.bf16.gmra.mxu0 %v2645
      %v3308 = vpop.f32.mrf.mxu0
      %v3309 = vadd.f32 %v3260, %v3308
      %v3310 = vpop.f32.mrf.mxu0
      %v3311 = vadd.f32 %v3262, %v3310
      %3312 = vmatmul.bf16.gmra.mxu0 %v2649
      %v3313 = vpop.f32.mrf.mxu0
      %v3314 = vadd.f32 %v3265, %v3313
      %v3315 = vpop.f32.mrf.mxu0
      %v3316 = vadd.f32 %v3267, %v3315
      %3317 = vmatmul.bf16.gmra.mxu0 %v2653
      %v3318 = vpop.f32.mrf.mxu0
      %v3319 = vadd.f32 %v3270, %v3318
      %v3320 = vpop.f32.mrf.mxu0
      %v3321 = vadd.f32 %v3272, %v3320
      %3322 = vdwg.mxu0
      %3323 = vmatpush.bf16.msra.mxu0 %v2915
      %3324 = vmatpush.bf16.msra.mxu0 %v2913
      %3325 = vmatpush.bf16.msra.mxu0 %v2911
      %3326 = vmatpush.bf16.msra.mxu0 %v2909
      %3327 = vmatpush.bf16.msra.mxu0 %v2907
      %3328 = vmatpush.bf16.msra.mxu0 %v2905
      %3329 = vmatpush.bf16.msra.mxu0 %v2903
      %3330 = vmatpush.bf16.msra.mxu0 %v2901
      %3331 = vmatmul.bf16.gmra.mxu0 %v2626
      %v3332 = vpop.f32.mrf.mxu0
      %v3333 = vadd.f32 %v3284, %v3332
      %v3334 = vpop.f32.mrf.mxu0
      %v3335 = vadd.f32 %v3286, %v3334
      %3336 = vmatmul.bf16.gmra.mxu0 %v2630
      %v3337 = vpop.f32.mrf.mxu0
      %v3338 = vadd.f32 %v3289, %v3337
      %v3339 = vpop.f32.mrf.mxu0
      %v3340 = vadd.f32 %v3291, %v3339
      %3341 = vmatmul.bf16.gmra.mxu0 %v2634
      %v3342 = vpop.f32.mrf.mxu0
      %v3343 = vadd.f32 %v3294, %v3342
      %v3344 = vpop.f32.mrf.mxu0
      %v3345 = vadd.f32 %v3296, %v3344
      %3346 = vmatmul.bf16.gmra.mxu0 %v2638
      %v3347 = vpop.f32.mrf.mxu0
      %v3348 = vadd.f32 %v3299, %v3347
      %v3349 = vpop.f32.mrf.mxu0
      %v3350 = vadd.f32 %v3301, %v3349
      %3351 = vmatmul.bf16.gmra.mxu0 %v2642
      %v3352 = vpop.f32.mrf.mxu0
      %v3353 = vadd.f32 %v3304, %v3352
      %v3354 = vpop.f32.mrf.mxu0
      %v3355 = vadd.f32 %v3306, %v3354
      %3356 = vmatmul.bf16.gmra.mxu0 %v2646
      %v3357 = vpop.f32.mrf.mxu0
      %v3358 = vadd.f32 %v3309, %v3357
      %v3359 = vpop.f32.mrf.mxu0
      %v3360 = vadd.f32 %v3311, %v3359
      %3361 = vmatmul.bf16.gmra.mxu0 %v2650
      %v3362 = vpop.f32.mrf.mxu0
      %v3363 = vadd.f32 %v3314, %v3362
      %v3364 = vpop.f32.mrf.mxu0
      %v3365 = vadd.f32 %v3316, %v3364
      %3366 = vmatmul.bf16.gmra.mxu0 %v2654
      %v3367 = vpop.f32.mrf.mxu0
      %v3368 = vadd.f32 %v3319, %v3367
      %v3369 = vpop.f32.mrf.mxu0
      %v3370 = vadd.f32 %v3321, %v3369
      %3371 = vdwg.mxu0
      %vm3372 = vcmp.gt.f32.partialorder %v3137, 0.0
      %vm3373 = vcmp.gt.f32.partialorder %v3333, 0.0
      %vm3374 = vcmp.gt.f32.partialorder %v3139, 0.0
      %vm3375 = vcmp.gt.f32.partialorder %v3335, 0.0
      %vm3376 = vcmp.gt.f32.partialorder %v3142, 0.0
      %vm3377 = vcmp.gt.f32.partialorder %v3338, 0.0
      %vm3378 = vcmp.gt.f32.partialorder %v3144, 0.0
      %vm3379 = vcmp.gt.f32.partialorder %v3340, 0.0
      %vm3380 = vcmp.gt.f32.partialorder %v3147, 0.0
      %vm3381 = vcmp.gt.f32.partialorder %v3343, 0.0
      %vm3382 = vcmp.gt.f32.partialorder %v3149, 0.0
      %vm3383 = vcmp.gt.f32.partialorder %v3345, 0.0
      %vm3384 = vcmp.gt.f32.partialorder %v3152, 0.0
      %vm3385 = vcmp.gt.f32.partialorder %v3348, 0.0
      %vm3386 = vcmp.gt.f32.partialorder %v3154, 0.0
      %vm3387 = vcmp.gt.f32.partialorder %v3350, 0.0
      %vm3388 = vcmp.gt.f32.partialorder %v3157, 0.0
      %vm3389 = vcmp.gt.f32.partialorder %v3353, 0.0
      %vm3390 = vcmp.gt.f32.partialorder %v3159, 0.0
      %vm3391 = vcmp.gt.f32.partialorder %v3355, 0.0
      %vm3392 = vcmp.gt.f32.partialorder %v3162, 0.0
      %vm3393 = vcmp.gt.f32.partialorder %v3358, 0.0
      %vm3394 = vcmp.gt.f32.partialorder %v3164, 0.0
      %vm3395 = vcmp.gt.f32.partialorder %v3360, 0.0
      %vm3396 = vcmp.gt.f32.partialorder %v3167, 0.0
      %vm3397 = vcmp.gt.f32.partialorder %v3363, 0.0
      %vm3398 = vcmp.gt.f32.partialorder %v3169, 0.0
      %vm3399 = vcmp.gt.f32.partialorder %v3365, 0.0
      %vm3400 = vcmp.gt.f32.partialorder %v3172, 0.0
      %vm3401 = vcmp.gt.f32.partialorder %v3368, 0.0
      %vm3402 = vcmp.gt.f32.partialorder %v3174, 0.0
      %vm3403 = vcmp.gt.f32.partialorder %v3370, 0.0
      %v3404 = vmul.f32 %v3137, 0.2
      %v3405 = vmul.f32 %v3333, 0.2
      %v3406 = vmul.f32 %v3139, 0.2
      %v3407 = vmul.f32 %v3335, 0.2
      %v3408 = vmul.f32 %v3142, 0.2
      %v3409 = vmul.f32 %v3338, 0.2
      %v3410 = vmul.f32 %v3144, 0.2
      %v3411 = vmul.f32 %v3340, 0.2
      %v3412 = vmul.f32 %v3147, 0.2
      %v3413 = vmul.f32 %v3343, 0.2
      %v3414 = vmul.f32 %v3149, 0.2
      %v3415 = vmul.f32 %v3345, 0.2
      %v3416 = vmul.f32 %v3152, 0.2
      %v3417 = vmul.f32 %v3348, 0.2
      %v3418 = vmul.f32 %v3154, 0.2
      %v3419 = vmul.f32 %v3350, 0.2
      %v3420 = vmul.f32 %v3157, 0.2
      %v3421 = vmul.f32 %v3353, 0.2
      %v3422 = vmul.f32 %v3159, 0.2
      %v3423 = vmul.f32 %v3355, 0.2
      %v3424 = vmul.f32 %v3162, 0.2
      %v3425 = vmul.f32 %v3358, 0.2
      %v3426 = vmul.f32 %v3164, 0.2
      %v3427 = vmul.f32 %v3360, 0.2
      %v3428 = vmul.f32 %v3167, 0.2
      %v3429 = vmul.f32 %v3363, 0.2
      %v3430 = vmul.f32 %v3169, 0.2
      %v3431 = vmul.f32 %v3365, 0.2
      %v3432 = vmul.f32 %v3172, 0.2
      %v3433 = vmul.f32 %v3368, 0.2
      %v3434 = vmul.f32 %v3174, 0.2
      %v3435 = vmul.f32 %v3370, 0.2
      %v3436 = vsel %vm3372, %v3137, %v3404
      %v3437 = vsel %vm3373, %v3333, %v3405
      %v3438 = vsel %vm3374, %v3139, %v3406
      %v3439 = vsel %vm3375, %v3335, %v3407
      %v3440 = vsel %vm3376, %v3142, %v3408
      %v3441 = vsel %vm3377, %v3338, %v3409
      %v3442 = vsel %vm3378, %v3144, %v3410
      %v3443 = vsel %vm3379, %v3340, %v3411
      %v3444 = vsel %vm3380, %v3147, %v3412
      %v3445 = vsel %vm3381, %v3343, %v3413
      %v3446 = vsel %vm3382, %v3149, %v3414
      %v3447 = vsel %vm3383, %v3345, %v3415
      %v3448 = vsel %vm3384, %v3152, %v3416
      %v3449 = vsel %vm3385, %v3348, %v3417
      %v3450 = vsel %vm3386, %v3154, %v3418
      %v3451 = vsel %vm3387, %v3350, %v3419
      %v3452 = vsel %vm3388, %v3157, %v3420
      %v3453 = vsel %vm3389, %v3353, %v3421
      %v3454 = vsel %vm3390, %v3159, %v3422
      %v3455 = vsel %vm3391, %v3355, %v3423
      %v3456 = vsel %vm3392, %v3162, %v3424
      %v3457 = vsel %vm3393, %v3358, %v3425
      %v3458 = vsel %vm3394, %v3164, %v3426
      %v3459 = vsel %vm3395, %v3360, %v3427
      %v3460 = vsel %vm3396, %v3167, %v3428
      %v3461 = vsel %vm3397, %v3363, %v3429
      %v3462 = vsel %vm3398, %v3169, %v3430
      %v3463 = vsel %vm3399, %v3365, %v3431
      %v3464 = vsel %vm3400, %v3172, %v3432
      %v3465 = vsel %vm3401, %v3368, %v3433
      %v3466 = vsel %vm3402, %v3174, %v3434
      %v3467 = vsel %vm3403, %v3370, %v3435
      %3468 = vst [vmem:[%s374] sm:$0xff] %v3436
      %3469 = vst [vmem:[%s374 + $0x8] sm:$0xff] %v3437
      %3470 = vst [vmem:[%s374 + $0x10] sm:$0xff] %v3438
      %3471 = vst [vmem:[%s374 + $0x18] sm:$0xff] %v3439
      %3472 = vst [vmem:[%s374 + $0x20] sm:$0xff] %v3440
      %3473 = vst [vmem:[%s374 + $0x28] sm:$0xff] %v3441
      %3474 = vst [vmem:[%s374 + $0x30] sm:$0xff] %v3442
      %3475 = vst [vmem:[%s374 + $0x38] sm:$0xff] %v3443
      %3476 = vst [vmem:[%s374 + $0x40] sm:$0xff] %v3444
      %3477 = vst [vmem:[%s374 + $0x48] sm:$0xff] %v3445
      %3478 = vst [vmem:[%s374 + $0x50] sm:$0xff] %v3446
      %3479 = vst [vmem:[%s374 + $0x58] sm:$0xff] %v3447
      %3480 = vst [vmem:[%s374 + $0x60] sm:$0xff] %v3448
      %3481 = vst [vmem:[%s374 + $0x68] sm:$0xff] %v3449
      %3482 = vst [vmem:[%s374 + $0x70] sm:$0xff] %v3450
      %3483 = vst [vmem:[%s374 + $0x78] sm:$0xff] %v3451
      %3484 = vst [vmem:[%s374 + $0x80] sm:$0xff] %v3452
      %3485 = vst [vmem:[%s374 + $0x88] sm:$0xff] %v3453
      %3486 = vst [vmem:[%s374 + $0x90] sm:$0xff] %v3454
      %3487 = vst [vmem:[%s374 + $0x98] sm:$0xff] %v3455
      %3488 = vst [vmem:[%s374 + $0xa0] sm:$0xff] %v3456
      %3489 = vst [vmem:[%s374 + $0xa8] sm:$0xff] %v3457
      %3490 = vst [vmem:[%s374 + $0xb0] sm:$0xff] %v3458
      %3491 = vst [vmem:[%s374 + $0xb8] sm:$0xff] %v3459
      %3492 = vst [vmem:[%s374 + $0xc0] sm:$0xff] %v3460
      %3493 = vst [vmem:[%s374 + $0xc8] sm:$0xff] %v3461
      %3494 = vst [vmem:[%s374 + $0xd0] sm:$0xff] %v3462
      %3495 = vst [vmem:[%s374 + $0xd8] sm:$0xff] %v3463
      %3496 = vst [vmem:[%s374 + $0xe0] sm:$0xff] %v3464
      %3497 = vst [vmem:[%s374 + $0xe8] sm:$0xff] %v3465
      %3498 = vst [vmem:[%s374 + $0xf0] sm:$0xff] %v3466
      %3499 = vst [vmem:[%s374 + $0xf8] sm:$0xff] %v3467
      %s3500 = smul.u32 16, %s22
      %p3501 = scmp.lt.s32.totalorder %s3500, 31
      %s3502 = scalar_select %p3501, %s3500, 31
      %s3503 = smul.addr %s3502, 2
      %s3504 = smul.addr %s3503, 8
      %s3505 = scalar_lea.vmem %s9, %s3504
      %s3506 = smul.u32 16, %s22
      %p3507 = scmp.lt.s32.totalorder %s3506, 31
      %s3508 = scalar_select %p3507, %s3506, 31
      %s3509 = smul.addr %s3508, 8
      %s3510 = scalar_lea.vmem %s10, %s3509
      // Predicated region
      $region57: #{ae_forward.1} parent=55 // pred_check
        %p3511 = pneg %p234
      $region58: #{ae_forward.1} parent=55 // pred_check_branch
        %3513 = sbr.rel (%p3511) target = $region60
      $region59: #{ae_forward.1} parent=55 // pred_region
        %s3514 = smul.u32 16, %s22
      $region60: #{ae_forward.1} parent=55 // pred_fallthru
        _
      // Predicated region
      $region61: #{ae_forward.1} parent=55 // pred_check
        %p3515 = pneg %p260
      $region62: #{ae_forward.1} parent=55 // pred_check_branch
        %3517 = sbr.rel (%p3515) target = $region64
      $region63: #{ae_forward.1} parent=55 // pred_region
        %s3518 = smul.u32 16, %s22
      $region64: #{ae_forward.1} parent=55 // pred_fallthru
        _
    $region56: #{ae_forward.1} parent=5 // pred_fallthru
      _
    %p3519 = scmp.le.s32.totalorder 2, %s17
    // Predicated region
    $region65: #{ae_forward.1} parent=5 // pred_check
      %p3520 = pneg %p3519
    $region66: #{ae_forward.1} parent=5 // pred_check_branch
      %3522 = sbr.rel (%p3520) target = $region68
    $region67: #{ae_forward.1} parent=5 // pred_region
      %s3523 = ssub.s32 %s17, 2
      // Predicated region
      $region69: #{ae_forward.1} parent=67 // pred_check
        %p3524 = pneg %p240
      $region70: #{ae_forward.1} parent=67 // pred_check_branch
        %3526 = sbr.rel (%p3524) target = $region72
      $region71: #{ae_forward.1} parent=67 // pred_region
        %s3527 = smul.u32 16, %s23
        %p3528 = scmp.lt.s32.totalorder %s3527, 31
        %s3529 = scalar_select %p3528, %s3527, 31
        %s3530 = smul.addr %s3529, 2
        %s3531 = smul.addr %s3530, 8
        %s3532 = scalar_lea.vmem %s9, %s3531
      $region72: #{ae_forward.1} parent=67 // pred_fallthru
        _
      // Predicated region
      $region73: #{ae_forward.1} parent=67 // pred_check
        %p3533 = pneg %p266
      $region74: #{ae_forward.1} parent=67 // pred_check_branch
        %3535 = sbr.rel (%p3533) target = $region76
      $region75: #{ae_forward.1} parent=67 // pred_region
        %s3536 = smul.u32 16, %s23
        %p3537 = scmp.lt.s32.totalorder %s3536, 31
        %s3538 = scalar_select %p3537, %s3536, 31
        %s3539 = smul.addr %s3538, 8
        %s3540 = scalar_lea.vmem %s10, %s3539
      $region76: #{ae_forward.1} parent=67 // pred_fallthru
        _
    $region68: #{ae_forward.1} parent=5 // pred_fallthru
      _
  $region6: #{ae_forward.1} parent=0 // loop_footer
    %s21 = sadd.s32 1, %s17
  $region7: #{ae_forward.1} parent=0 // loop_footer_branch
    %16 = sbr.rel target = $region3
  $region8: #{ae_forward.1} parent=0 // loop_exit
    _

</llo_original>
